<compile_context>
chip_gen: v6e
topology: v6e:2x2x1
jax: 0.10.0
libtpu: 0.0.40
codegen_flags: <defaults>
</compile_context>

<pallas_src>
import jax
import jax.numpy as jnp
from jax import lax
from jax.experimental import pallas as pl
from jax.experimental.pallas import tpu as pltpu


# ----------------------------- Pallas kernel -------------------------------

def _bottleneck_fused_kernel(xb_ref, xt_ref, xbt_ref,
                             w1_ref, b1_ref, w2_ref, b2_ref, w3_ref, b3_ref,
                             o_ref, xp_ref, h2_ref):
    # xb_ref : (1, TH, W, Cin)       body rows of x (also the residual)
    # xt_ref : (1, 1,  W, Cin)       row above the block (clamped at border)
    # xbt_ref: (1, 1,  W, Cin)       row below the block (clamped at border)
    # w1_ref : (Cin, Cmid)     bf16  1x1 conv, BN1 scale folded in
    # b1_ref : (1, Cmid)       f32
    # w2_ref : (3, 3*Cmid, Cmid) bf16  [kx, ky*Cmid + cin, cout], BN2 folded
    # b2_ref : (1, Cmid)       f32
    # w3_ref : (Cmid, Cout)    bf16  1x1 conv, BN3 scale folded in
    # b3_ref : (1, Cout)       f32
    # o_ref  : (1, TH, W, Cout)
    # xp_ref : VMEM scratch (TH+2, W+2, Cmid) bf16 -- zero-padded h1 slab
    # h2_ref : VMEM scratch (TH, W, Cmid)     f32  -- 3x3-conv accumulator
    TH, W, Cout = o_ref.shape[1], o_ref.shape[2], o_ref.shape[3]
    Cin = xb_ref.shape[3]
    Cmid = w1_ref.shape[1]

    hb = pl.program_id(1)
    last_hb = pl.num_programs(1) - 1

    # ---- stage 1: 1x1 conv + bias + ReLU on the (TH+2)-row halo slab ----
    x_slab = jnp.concatenate([xt_ref[0], xb_ref[0], xbt_ref[0]], axis=0)
    x_slab = x_slab.reshape((TH + 2) * W, Cin).astype(jnp.bfloat16)
    h1 = jnp.dot(x_slab, w1_ref[...], preferred_element_type=jnp.float32)
    h1 = jnp.maximum(h1 + b1_ref[...], 0.0)                 # ((TH+2)*W, Cmid)

    # Single f32->bf16 cast; one full-width store of the padded slab
    # (zero pad COLUMNS are concatenated in, so no separate ring zeroing and
    #  no whole-scratch zero fill).
    h1b = h1.astype(jnp.bfloat16).reshape(TH + 2, W, Cmid)
    zcol = jnp.zeros((TH + 2, 1, Cmid), jnp.bfloat16)
    xp_ref[...] = jnp.concatenate([zcol, h1b, zcol], axis=1)

    # Boundary halo rows must be zero padding (the clamped x rows above are
    # only valid in the interior of the image).
    @pl.when(hb == 0)
    def _():
        xp_ref[0:1, :, :] = jnp.zeros((1, W + 2, Cmid), jnp.bfloat16)

    @pl.when(hb == last_hb)
    def _():
        xp_ref[TH + 1:TH + 2, :, :] = jnp.zeros((1, W + 2, Cmid), jnp.bfloat16)

    # ---- stage 2: 3x3 conv as 3 fat-K (K = 3*Cmid) matmuls ----
    # ky taps stacked on the contraction dim via cheap leading-axis REF slices
    # of the bf16 scratch (no full-value materialisation, no extra casts).
    patch = jnp.concatenate(
        [xp_ref[0:TH, :, :], xp_ref[1:TH + 1, :, :], xp_ref[2:TH + 2, :, :]],
        axis=-1)                                        # (TH, W+2, 3*Cmid) bf16
    patch = patch.reshape(TH * (W + 2), 3 * Cmid)

    # Accumulate the three kx taps into a single f32 VMEM scratch.
    # (A pltpu.roll-based combine on the flattened result would move the
    #  shift onto the XLU; kept as offset slices here for lowering safety.)
    for kx in range(3):
        y = jnp.dot(patch, w2_ref[kx], preferred_element_type=jnp.float32)
        y = y.reshape(TH, W + 2, Cmid)[:, kx:kx + W, :]
        if kx == 0:
            h2_ref[...] = y
        else:
            h2_ref[...] += y
    h2 = jnp.maximum(h2_ref[...] + b2_ref[...], 0.0)        # (TH, W, Cmid) f32

    # ---- stage 3: 1x1 conv + bias + residual add (f32) + ReLU ----
    out = jnp.dot(h2.reshape(TH * W, Cmid).astype(jnp.bfloat16), w3_ref[...],
                  preferred_element_type=jnp.float32)
    residual = xb_ref[0].reshape(TH * W, Cin).astype(jnp.float32)
    out = jnp.maximum(out + b3_ref[...] + residual, 0.0)
    o_ref[...] = out.reshape(1, TH, W, Cout).astype(o_ref.dtype)


# ------------------------------ JAX wrapper --------------------------------

_ROW_BLOCK_TARGET = 8   # per-generation tuning knob (bounds per-step VMEM use)


def _pick_row_block(H, target=_ROW_BLOCK_TARGET):
    th = min(target, H)
    while H % th != 0:
        th -= 1
    return th


def bottleneck_forward(x_nhwc, p):
    """NHWC-native fused Bottleneck forward.  Output dtype follows x dtype."""
    N, H, W, Cin = x_nhwc.shape
    Cmid = p["w1"].shape[1]
    Cout = p["w3"].shape[1]
    assert Cin == Cout, "downsample=None requires inplanes == planes*expansion"

    TH = _pick_row_block(H)
    nH = H // TH
    out_dtype = x_nhwc.dtype

    # TODO(synk): at real Bottleneck shapes (Cmid=64, Cout=256) pad channel
    # dims to 128/256 multiples for MXU column fill; re-derive TH and
    # vmem_limit per generation (v7x: 64 MiB physical VMEM).
    out = pl.pallas_call(
        _bottleneck_fused_kernel,
        out_shape=jax.ShapeDtypeStruct((N, H, W, Cout), out_dtype),
        grid=(N, nH),
        in_specs=[
            # body rows of x
            pl.BlockSpec((1, TH, W, Cin), lambda n, h: (n, h, 0, 0)),
            # 1-row top halo (clamped at the image border, zeroed in-kernel)
            pl.BlockSpec((1, 1, W, Cin),
                         lambda n, h: (n, jnp.maximum(h * TH - 1, 0), 0, 0)),
            # 1-row bottom halo
            pl.BlockSpec((1, 1, W, Cin),
                         lambda n, h: (n, jnp.minimum(h * TH + TH, H - 1), 0, 0)),
            # weights / biases (resident, broadcast over the grid)
            pl.BlockSpec((Cin, Cmid), lambda n, h: (0, 0)),
            pl.BlockSpec((1, Cmid), lambda n, h: (0, 0)),
            pl.BlockSpec((3, 3 * Cmid, Cmid), lambda n, h: (0, 0, 0)),
            pl.BlockSpec((1, Cmid), lambda n, h: (0, 0)),
            pl.BlockSpec((Cmid, Cout), lambda n, h: (0, 0)),
            pl.BlockSpec((1, Cout), lambda n, h: (0, 0)),
        ],
        out_specs=pl.BlockSpec((1, TH, W, Cout), lambda n, h: (n, h, 0, 0)),
        scratch_shapes=[
            pltpu.VMEM((TH + 2, W + 2, Cmid), jnp.bfloat16),   # padded h1 slab
            pltpu.VMEM((TH, W, Cmid), jnp.float32),            # 3x3 accumulator
        ],
        compiler_params=pltpu.CompilerParams(
            dimension_semantics=("parallel", "parallel"),
            vmem_limit_bytes=32 * 1024 * 1024),
    )(x_nhwc, x_nhwc, x_nhwc,
      p["w1"], p["b1"], p["w2"], p["b2"], p["w3"], p["b3"])
    return out


bottleneck_forward_jit = jax.jit(bottleneck_forward)


# ----------------------- deterministic parameter init ----------------------

def init_params(key, inplanes, planes, eps=1e-5):
    expansion = 4
    ks = jax.random.split(key, 15)

    def bn_params(kg, kb, km, kv, c):
        gamma = 1.0 + 0.1 * jax.random.normal(kg, (c,), jnp.float32)
        beta = 0.1 * jax.random.normal(kb, (c,), jnp.float32)
        mean = 0.1 * jax.random.normal(km, (c,), jnp.float32)
        var = jnp.abs(jax.random.normal(kv, (c,), jnp.float32)) + 0.5
        scale = gamma / jnp.sqrt(var + eps)           # fold into conv weights
        bias = beta - mean * scale                    # stays as "+ bias"
        return (gamma, beta, mean, var), scale, bias

    w1_oihw = 0.1 * jax.random.normal(ks[0], (planes, inplanes, 1, 1), jnp.float32)
    w2_oihw = 0.1 * jax.random.normal(ks[1], (planes, planes, 3, 3), jnp.float32)
    w3_oihw = 0.1 * jax.random.normal(ks[2], (planes * expansion, planes, 1, 1),
                                      jnp.float32)

    bn1, s1, b1 = bn_params(ks[3], ks[4], ks[5], ks[6], planes)
    bn2, s2, b2 = bn_params(ks[7], ks[8], ks[9], ks[10], planes)
    bn3, s3, b3 = bn_params(ks[11], ks[12], ks[13], ks[14], planes * expansion)

    # ---- kernel-friendly packed forms: BN scale folded in, bf16 for the MXU ----
    w1 = ((w1_oihw[:, :, 0, 0] * s1[:, None]).T).astype(jnp.bfloat16)   # (Cin, Cmid)
    w3 = ((w3_oihw[:, :, 0, 0] * s3[:, None]).T).astype(jnp.bfloat16)   # (Cmid, Cout)
    w2s = w2_oihw * s2[:, None, None, None]                             # (O, I, 3, 3)
    # pack as [kx, ky*Cmid + cin, cout] for the fat-K (K = 3*Cmid) matmuls
    w2 = jnp.transpose(w2s, (3, 2, 1, 0)).reshape(3, 3 * planes, planes)
    w2 = w2.astype(jnp.bfloat16)

    return {
        "w1": w1, "w2": w2, "w3": w3,
        "b1": b1.reshape(1, -1), "b2": b2.reshape(1, -1), "b3": b3.reshape(1, -1),
        # raw PyTorch-convention forms for the f32 reference check
        "w1_oihw": w1_oihw, "w2_oihw": w2_oihw, "w3_oihw": w3_oihw,
        "bn1": bn1, "bn2": bn2, "bn3": bn3, "eps": eps,
    }


# --------------------------- pure-JAX reference -----------------------------

def bottleneck_reference_nhwc(x_nhwc, p):
    eps = p["eps"]

    def conv(x, w_oihw, pad):
        w = jnp.transpose(w_oihw, (2, 3, 1, 0))        # OIHW -> HWIO
        return lax.conv_general_dilated(
            x, w, window_strides=(1, 1), padding=pad,
            dimension_numbers=("NHWC", "HWIO", "NHWC"))

    def bn(x, stats):
        gamma, beta, mean, var = stats
        inv = 1.0 / jnp.sqrt(var + eps)
        return (x - mean) * inv * gamma + beta

    out = jax.nn.relu(bn(conv(x_nhwc, p["w1_oihw"], "VALID"), p["bn1"]))
    out = jax.nn.relu(bn(conv(out, p["w2_oihw"], [(1, 1), (1, 1)]), p["bn2"]))
    out = bn(conv(out, p["w3_oihw"], "VALID"), p["bn3"])
    return jax.nn.relu(out + x_nhwc)


# ----------------------------------- main -----------------------------------

if __name__ == "__main__":
    inplanes, planes = 16, 4          # inplanes == planes * expansion (4)
    N, H, W = 2, 16, 16

    key = jax.random.PRNGKey(0)
    k_x, k_p = jax.random.split(key)
    # NHWC-native activations (no NCHW<->NHWC transposes around the kernel).
    x = jax.random.normal(k_x, (N, H, W, inplanes), jnp.float32)
    params = init_params(k_p, inplanes, planes)

    ref = jax.block_until_ready(bottleneck_reference_nhwc(x, params))

    # ---- f32 I/O path (module-fidelity check; bf16 only on the MXU inputs) ----
    out_f32 = jax.block_until_ready(bottleneck_forward_jit(x, params))
    assert out_f32.shape == ref.shape == (N, H, W, planes * 4)
    err_f32 = jnp.max(jnp.abs(out_f32 - ref))
    assert jnp.allclose(out_f32, ref, atol=5e-2, rtol=5e-2), \
        f"f32-I/O max abs err {err_f32}"

    # ---- bf16 I/O path (halves input+output HBM traffic; residual in f32) ----
    out_bf16 = jax.block_until_ready(
        bottleneck_forward_jit(x.astype(jnp.bfloat16), params))
    assert out_bf16.dtype == jnp.bfloat16
    out_bf16_f32 = out_bf16.astype(jnp.float32)
    err_bf16 = jnp.max(jnp.abs(out_bf16_f32 - ref))
    assert jnp.allclose(out_bf16_f32, ref, atol=1e-1, rtol=1e-1), \
        f"bf16-I/O max abs err {err_bf16}"

    print("KERNEL_OK")
</pallas_src>

<mosaic_0001>
module attributes {stable_mosaic.version = 11 : i64} {
  func.func @_bottleneck_fused_kernel(%arg0: i32, %arg1: i32, %arg2: memref<1x8x16x16xf32, #tpu.memory_space<vmem>>, %arg3: memref<1x1x16x16xf32, #tpu.memory_space<vmem>>, %arg4: memref<1x1x16x16xf32, #tpu.memory_space<vmem>>, %arg5: memref<16x4xbf16, #tpu.memory_space<vmem>>, %arg6: memref<1x4xf32, #tpu.memory_space<vmem>>, %arg7: memref<3x12x4xbf16, #tpu.memory_space<vmem>>, %arg8: memref<1x4xf32, #tpu.memory_space<vmem>>, %arg9: memref<4x16xbf16, #tpu.memory_space<vmem>>, %arg10: memref<1x16xf32, #tpu.memory_space<vmem>>, %arg11: memref<1x8x16x16xf32, #tpu.memory_space<vmem>>, %arg12: memref<10x18x4xbf16, #tpu.memory_space<vmem>>, %arg13: memref<8x16x4xf32, #tpu.memory_space<vmem>>) attributes {dimension_semantics = [#tpu.dimension_semantics<parallel>, #tpu.dimension_semantics<parallel>], iteration_bounds = array<i64: 2, 2>, scalar_prefetch = 0 : i64, scratch_operands = 2 : i64, tpu.core_type = #tpu.core_type<tc>, window_params = [{transform_indices = @transform_0, window_bounds = array<i64: 1, 8, 16, 16>}, {transform_indices = @transform_1, window_bounds = array<i64: 1, 1, 16, 16>}, {transform_indices = @transform_2, window_bounds = array<i64: 1, 1, 16, 16>}, {pipeline_mode = #tpu.pipeline_mode<synchronous>, transform_indices = @transform_3, window_bounds = array<i64: 16, 4>}, {pipeline_mode = #tpu.pipeline_mode<synchronous>, transform_indices = @transform_4, window_bounds = array<i64: 1, 4>}, {pipeline_mode = #tpu.pipeline_mode<synchronous>, transform_indices = @transform_5, window_bounds = array<i64: 3, 12, 4>}, {pipeline_mode = #tpu.pipeline_mode<synchronous>, transform_indices = @transform_6, window_bounds = array<i64: 1, 4>}, {pipeline_mode = #tpu.pipeline_mode<synchronous>, transform_indices = @transform_7, window_bounds = array<i64: 4, 16>}, {pipeline_mode = #tpu.pipeline_mode<synchronous>, transform_indices = @transform_8, window_bounds = array<i64: 1, 16>}, {transform_indices = @transform_9, window_bounds = array<i64: 1, 8, 16, 16>}]} {
    %c0 = arith.constant 0 : index
    %c0_0 = arith.constant 0 : index
    %c0_1 = arith.constant 0 : index
    %c0_2 = arith.constant 0 : index
    %0 = vector.load %arg3[%c0, %c0_0, %c0_1, %c0_2] : memref<1x1x16x16xf32, #tpu.memory_space<vmem>>, vector<1x1x16x16xf32>
    %1 = vector.shape_cast %0 : vector<1x1x16x16xf32> to vector<1x16x16xf32>
    %c0_3 = arith.constant 0 : index
    %c0_4 = arith.constant 0 : index
    %c0_5 = arith.constant 0 : index
    %c0_6 = arith.constant 0 : index
    %2 = vector.load %arg2[%c0_3, %c0_4, %c0_5, %c0_6] : memref<1x8x16x16xf32, #tpu.memory_space<vmem>>, vector<1x8x16x16xf32>
    %3 = vector.shape_cast %2 : vector<1x8x16x16xf32> to vector<8x16x16xf32>
    %c0_7 = arith.constant 0 : index
    %c0_8 = arith.constant 0 : index
    %c0_9 = arith.constant 0 : index
    %c0_10 = arith.constant 0 : index
    %4 = vector.load %arg4[%c0_7, %c0_8, %c0_9, %c0_10] : memref<1x1x16x16xf32, #tpu.memory_space<vmem>>, vector<1x1x16x16xf32>
    %5 = vector.shape_cast %4 : vector<1x1x16x16xf32> to vector<1x16x16xf32>
    %6 = tpu.concatenate %1, %3, %5 in 0 : vector<1x16x16xf32>, vector<8x16x16xf32>, vector<1x16x16xf32> -> vector<10x16x16xf32>
    %7 = vector.shape_cast %6 : vector<10x16x16xf32> to vector<160x16xf32>
    %8 = arith.truncf %7 : vector<160x16xf32> to vector<160x16xbf16>
    %c0_11 = arith.constant 0 : index
    %c0_12 = arith.constant 0 : index
    %9 = vector.load %arg5[%c0_11, %c0_12] : memref<16x4xbf16, #tpu.memory_space<vmem>>, vector<16x4xbf16>
    %cst = arith.constant dense<0.000000e+00> : vector<160x4xf32>
    %10 = tpu.matmul %8, %9, %cst {dimension_numbers = #tpu.dot_dimension_numbers<[1], [0], [0], [1], [0, 0, 1, 1], [], []>} : vector<160x16xbf16>, vector<16x4xbf16>, vector<160x4xf32> -> vector<160x4xf32>
    %c0_13 = arith.constant 0 : index
    %c0_14 = arith.constant 0 : index
    %11 = vector.load %arg6[%c0_13, %c0_14] : memref<1x4xf32, #tpu.memory_space<vmem>>, vector<1x4xf32>
    %12 = vector.broadcast %11 : vector<1x4xf32> to vector<160x4xf32>
    %13 = arith.addf %10, %12 : vector<160x4xf32>
    %cst_15 = arith.constant 0.000000e+00 : f32
    %14 = vector.broadcast %cst_15 : f32 to vector<160x4xf32>
    %15 = arith.maximumf %13, %14 : vector<160x4xf32>
    %16 = arith.truncf %15 : vector<160x4xf32> to vector<160x4xbf16>
    %17 = vector.shape_cast %16 : vector<160x4xbf16> to vector<10x16x4xbf16>
    %cst_16 = arith.constant 0.000000e+00 : bf16
    %18 = vector.broadcast %cst_16 : bf16 to vector<10x1x4xbf16>
    %19 = tpu.concatenate %18, %17, %18 in 1 : vector<10x1x4xbf16>, vector<10x16x4xbf16>, vector<10x1x4xbf16> -> vector<10x18x4xbf16>
    %c0_17 = arith.constant 0 : index
    %c0_18 = arith.constant 0 : index
    %c0_19 = arith.constant 0 : index
    %20 = vector.load %arg12[%c0_17, %c0_18, %c0_19] : memref<10x18x4xbf16, #tpu.memory_space<vmem>>, vector<10x18x4xbf16>
    tpu.vector_store %arg12[%c0_17, %c0_18, %c0_19], %19 {strides = array<i32>} : memref<10x18x4xbf16, #tpu.memory_space<vmem>>, vector<10x18x4xbf16>,
    %c0_i32 = arith.constant 0 : i32
    %21 = arith.cmpi eq, %arg1, %c0_i32 : i32
    %22 = arith.extui %21 : i1 to i32
    %c0_i32_20 = arith.constant 0 : i32
    %23 = arith.cmpi ne, %22, %c0_i32_20 : i32
    scf.if %23 {
      %cst_76 = arith.constant 0.000000e+00 : bf16
      %76 = vector.broadcast %cst_76 : bf16 to vector<1x18x4xbf16>
      %c0_77 = arith.constant 0 : index
      %c0_78 = arith.constant 0 : index
      %c0_79 = arith.constant 0 : index
      %77 = vector.load %arg12[%c0_77, %c0_78, %c0_79] : memref<10x18x4xbf16, #tpu.memory_space<vmem>>, vector<1x18x4xbf16>
      tpu.vector_store %arg12[%c0_77, %c0_78, %c0_79], %76 {strides = array<i32>} : memref<10x18x4xbf16, #tpu.memory_space<vmem>>, vector<1x18x4xbf16>,
    } else {
    }
    %c1_i32 = arith.constant 1 : i32
    %24 = arith.cmpi eq, %arg1, %c1_i32 : i32
    %25 = arith.extui %24 : i1 to i32
    %c0_i32_21 = arith.constant 0 : i32
    %26 = arith.cmpi ne, %25, %c0_i32_21 : i32
    scf.if %26 {
      %cst_76 = arith.constant 0.000000e+00 : bf16
      %76 = vector.broadcast %cst_76 : bf16 to vector<1x18x4xbf16>
      %c9 = arith.constant 9 : index
      %c0_77 = arith.constant 0 : index
      %c0_78 = arith.constant 0 : index
      %77 = vector.load %arg12[%c9, %c0_77, %c0_78] : memref<10x18x4xbf16, #tpu.memory_space<vmem>>, vector<1x18x4xbf16>
      tpu.vector_store %arg12[%c9, %c0_77, %c0_78], %76 {strides = array<i32>} : memref<10x18x4xbf16, #tpu.memory_space<vmem>>, vector<1x18x4xbf16>,
    } else {
    }
    %c0_22 = arith.constant 0 : index
    %c0_23 = arith.constant 0 : index
    %c0_24 = arith.constant 0 : index
    %27 = vector.load %arg12[%c0_22, %c0_23, %c0_24] : memref<10x18x4xbf16, #tpu.memory_space<vmem>>, vector<8x18x4xbf16>
    %c1 = arith.constant 1 : index
    %c0_25 = arith.constant 0 : index
    %c0_26 = arith.constant 0 : index
    %28 = vector.load %arg12[%c1, %c0_25, %c0_26] : memref<10x18x4xbf16, #tpu.memory_space<vmem>>, vector<8x18x4xbf16>
    %c2 = arith.constant 2 : index
    %c0_27 = arith.constant 0 : index
    %c0_28 = arith.constant 0 : index
    %29 = vector.load %arg12[%c2, %c0_27, %c0_28] : memref<10x18x4xbf16, #tpu.memory_space<vmem>>, vector<8x18x4xbf16>
    %30 = tpu.concatenate %27, %28, %29 in 2 : vector<8x18x4xbf16>, vector<8x18x4xbf16>, vector<8x18x4xbf16> -> vector<8x18x12xbf16>
    %31 = vector.shape_cast %30 : vector<8x18x12xbf16> to vector<144x12xbf16>
    %c0_29 = arith.constant 0 : index
    %c0_30 = arith.constant 0 : index
    %c0_31 = arith.constant 0 : index
    %32 = vector.load %arg7[%c0_29, %c0_30, %c0_31] : memref<3x12x4xbf16, #tpu.memory_space<vmem>>, vector<1x12x4xbf16>
    %33 = vector.shape_cast %32 : vector<1x12x4xbf16> to vector<12x4xbf16>
    %cst_32 = arith.constant dense<0.000000e+00> : vector<144x4xf32>
    %34 = tpu.matmul %31, %33, %cst_32 {dimension_numbers = #tpu.dot_dimension_numbers<[1], [0], [0], [1], [0, 0, 1, 1], [], []>} : vector<144x12xbf16>, vector<12x4xbf16>, vector<144x4xf32> -> vector<144x4xf32>
    %35 = vector.shape_cast %34 : vector<144x4xf32> to vector<8x18x4xf32>
    %36 = vector.extract_strided_slice %35 {offsets = [0, 0, 0], sizes = [8, 16, 4], strides = [1, 1, 1]} : vector<8x18x4xf32> to vector<8x16x4xf32>
    %c0_33 = arith.constant 0 : index
    %c0_34 = arith.constant 0 : index
    %c0_35 = arith.constant 0 : index
    %37 = vector.load %arg13[%c0_33, %c0_34, %c0_35] : memref<8x16x4xf32, #tpu.memory_space<vmem>>, vector<8x16x4xf32>
    tpu.vector_store %arg13[%c0_33, %c0_34, %c0_35], %36 {strides = array<i32>} : memref<8x16x4xf32, #tpu.memory_space<vmem>>, vector<8x16x4xf32>,
    %c1_36 = arith.constant 1 : index
    %c0_37 = arith.constant 0 : index
    %c0_38 = arith.constant 0 : index
    %38 = vector.load %arg7[%c1_36, %c0_37, %c0_38] : memref<3x12x4xbf16, #tpu.memory_space<vmem>>, vector<1x12x4xbf16>
    %39 = vector.shape_cast %38 : vector<1x12x4xbf16> to vector<12x4xbf16>
    %cst_39 = arith.constant dense<0.000000e+00> : vector<144x4xf32>
    %40 = tpu.matmul %31, %39, %cst_39 {dimension_numbers = #tpu.dot_dimension_numbers<[1], [0], [0], [1], [0, 0, 1, 1], [], []>} : vector<144x12xbf16>, vector<12x4xbf16>, vector<144x4xf32> -> vector<144x4xf32>
    %41 = vector.shape_cast %40 : vector<144x4xf32> to vector<8x18x4xf32>
    %42 = vector.extract_strided_slice %41 {offsets = [0, 1, 0], sizes = [8, 16, 4], strides = [1, 1, 1]} : vector<8x18x4xf32> to vector<8x16x4xf32>
    %c0_40 = arith.constant 0 : index
    %c0_41 = arith.constant 0 : index
    %c0_42 = arith.constant 0 : index
    %43 = vector.load %arg13[%c0_40, %c0_41, %c0_42] : memref<8x16x4xf32, #tpu.memory_space<vmem>>, vector<8x16x4xf32>
    %44 = arith.addf %43, %42 : vector<8x16x4xf32>
    %c0_43 = arith.constant 0 : index
    %c0_44 = arith.constant 0 : index
    %c0_45 = arith.constant 0 : index
    %45 = vector.load %arg13[%c0_43, %c0_44, %c0_45] : memref<8x16x4xf32, #tpu.memory_space<vmem>>, vector<8x16x4xf32>
    tpu.vector_store %arg13[%c0_43, %c0_44, %c0_45], %44 {strides = array<i32>} : memref<8x16x4xf32, #tpu.memory_space<vmem>>, vector<8x16x4xf32>,
    %c2_46 = arith.constant 2 : index
    %c0_47 = arith.constant 0 : index
    %c0_48 = arith.constant 0 : index
    %46 = vector.load %arg7[%c2_46, %c0_47, %c0_48] : memref<3x12x4xbf16, #tpu.memory_space<vmem>>, vector<1x12x4xbf16>
    %47 = vector.shape_cast %46 : vector<1x12x4xbf16> to vector<12x4xbf16>
    %cst_49 = arith.constant dense<0.000000e+00> : vector<144x4xf32>
    %48 = tpu.matmul %31, %47, %cst_49 {dimension_numbers = #tpu.dot_dimension_numbers<[1], [0], [0], [1], [0, 0, 1, 1], [], []>} : vector<144x12xbf16>, vector<12x4xbf16>, vector<144x4xf32> -> vector<144x4xf32>
    %49 = vector.shape_cast %48 : vector<144x4xf32> to vector<8x18x4xf32>
    %50 = vector.extract_strided_slice %49 {offsets = [0, 2, 0], sizes = [8, 16, 4], strides = [1, 1, 1]} : vector<8x18x4xf32> to vector<8x16x4xf32>
    %c0_50 = arith.constant 0 : index
    %c0_51 = arith.constant 0 : index
    %c0_52 = arith.constant 0 : index
    %51 = vector.load %arg13[%c0_50, %c0_51, %c0_52] : memref<8x16x4xf32, #tpu.memory_space<vmem>>, vector<8x16x4xf32>
    %52 = arith.addf %51, %50 : vector<8x16x4xf32>
    %c0_53 = arith.constant 0 : index
    %c0_54 = arith.constant 0 : index
    %c0_55 = arith.constant 0 : index
    %53 = vector.load %arg13[%c0_53, %c0_54, %c0_55] : memref<8x16x4xf32, #tpu.memory_space<vmem>>, vector<8x16x4xf32>
    tpu.vector_store %arg13[%c0_53, %c0_54, %c0_55], %52 {strides = array<i32>} : memref<8x16x4xf32, #tpu.memory_space<vmem>>, vector<8x16x4xf32>,
    %c0_56 = arith.constant 0 : index
    %c0_57 = arith.constant 0 : index
    %c0_58 = arith.constant 0 : index
    %54 = vector.load %arg13[%c0_56, %c0_57, %c0_58] : memref<8x16x4xf32, #tpu.memory_space<vmem>>, vector<8x16x4xf32>
    %c0_59 = arith.constant 0 : index
    %c0_60 = arith.constant 0 : index
    %55 = vector.load %arg8[%c0_59, %c0_60] : memref<1x4xf32, #tpu.memory_space<vmem>>, vector<1x4xf32>
    %56 = vector.shape_cast %55 : vector<1x4xf32> to vector<1x1x4xf32>
    %57 = vector.broadcast %56 : vector<1x1x4xf32> to vector<8x16x4xf32>
    %58 = arith.addf %54, %57 : vector<8x16x4xf32>
    %cst_61 = arith.constant 0.000000e+00 : f32
    %59 = vector.broadcast %cst_61 : f32 to vector<8x16x4xf32>
    %60 = arith.maximumf %58, %59 : vector<8x16x4xf32>
    %61 = vector.shape_cast %60 : vector<8x16x4xf32> to vector<128x4xf32>
    %62 = arith.truncf %61 : vector<128x4xf32> to vector<128x4xbf16>
    %c0_62 = arith.constant 0 : index
    %c0_63 = arith.constant 0 : index
    %63 = vector.load %arg9[%c0_62, %c0_63] : memref<4x16xbf16, #tpu.memory_space<vmem>>, vector<4x16xbf16>
    %cst_64 = arith.constant dense<0.000000e+00> : vector<128x16xf32>
    %64 = tpu.matmul %62, %63, %cst_64 {dimension_numbers = #tpu.dot_dimension_numbers<[1], [0], [0], [1], [0, 0, 1, 1], [], []>} : vector<128x4xbf16>, vector<4x16xbf16>, vector<128x16xf32> -> vector<128x16xf32>
    %c0_65 = arith.constant 0 : index
    %c0_66 = arith.constant 0 : index
    %c0_67 = arith.constant 0 : index
    %c0_68 = arith.constant 0 : index
    %65 = vector.load %arg2[%c0_65, %c0_66, %c0_67, %c0_68] : memref<1x8x16x16xf32, #tpu.memory_space<vmem>>, vector<1x8x16x16xf32>
    %66 = vector.shape_cast %65 : vector<1x8x16x16xf32> to vector<8x16x16xf32>
    %67 = vector.shape_cast %66 : vector<8x16x16xf32> to vector<128x16xf32>
    %c0_69 = arith.constant 0 : index
    %c0_70 = arith.constant 0 : index
    %68 = vector.load %arg10[%c0_69, %c0_70] : memref<1x16xf32, #tpu.memory_space<vmem>>, vector<1x16xf32>
    %69 = vector.broadcast %68 : vector<1x16xf32> to vector<128x16xf32>
    %70 = arith.addf %64, %69 : vector<128x16xf32>
    %71 = arith.addf %70, %67 : vector<128x16xf32>
    %cst_71 = arith.constant 0.000000e+00 : f32
    %72 = vector.broadcast %cst_71 : f32 to vector<128x16xf32>
    %73 = arith.maximumf %71, %72 : vector<128x16xf32>
    %74 = vector.shape_cast %73 : vector<128x16xf32> to vector<1x8x16x16xf32>
    %c0_72 = arith.constant 0 : index
    %c0_73 = arith.constant 0 : index
    %c0_74 = arith.constant 0 : index
    %c0_75 = arith.constant 0 : index
    %75 = vector.load %arg11[%c0_72, %c0_73, %c0_74, %c0_75] : memref<1x8x16x16xf32, #tpu.memory_space<vmem>>, vector<1x8x16x16xf32>
    tpu.vector_store %arg11[%c0_72, %c0_73, %c0_74, %c0_75], %74 {strides = array<i32>} : memref<1x8x16x16xf32, #tpu.memory_space<vmem>>, vector<1x8x16x16xf32>,
    return
  }
  func.func @transform_0(%arg0: i32, %arg1: i32) -> (i32, i32, i32, i32) {
    %c0_i32 = arith.constant 0 : i32
    %c0_i32_0 = arith.constant 0 : i32
    %c0_i32_1 = arith.constant 0 : i32
    return %arg0, %arg1, %c0_i32, %c0_i32_0 : i32, i32, i32, i32
  }
  func.func @transform_1(%arg0: i32, %arg1: i32) -> (i32, i32, i32, i32) {
    %c8_i32 = arith.constant 8 : i32
    %0 = arith.muli %arg1, %c8_i32 : i32
    %c1_i32 = arith.constant 1 : i32
    %1 = arith.subi %0, %c1_i32 : i32
    %c0_i32 = arith.constant 0 : i32
    %2 = arith.maxsi %1, %c0_i32 : i32
    %c0_i32_0 = arith.constant 0 : i32
    %c0_i32_1 = arith.constant 0 : i32
    %c0_i32_2 = arith.constant 0 : i32
    return %arg0, %2, %c0_i32_0, %c0_i32_1 : i32, i32, i32, i32
  }
  func.func @transform_2(%arg0: i32, %arg1: i32) -> (i32, i32, i32, i32) {
    %c8_i32 = arith.constant 8 : i32
    %0 = arith.muli %arg1, %c8_i32 : i32
    %c8_i32_0 = arith.constant 8 : i32
    %1 = arith.addi %0, %c8_i32_0 : i32
    %c15_i32 = arith.constant 15 : i32
    %2 = arith.minsi %1, %c15_i32 : i32
    %c0_i32 = arith.constant 0 : i32
    %c0_i32_1 = arith.constant 0 : i32
    %c0_i32_2 = arith.constant 0 : i32
    return %arg0, %2, %c0_i32, %c0_i32_1 : i32, i32, i32, i32
  }
  func.func @transform_3(%arg0: i32, %arg1: i32) -> (i32, i32) {
    %c0_i32 = arith.constant 0 : i32
    %c0_i32_0 = arith.constant 0 : i32
    %c0_i32_1 = arith.constant 0 : i32
    return %c0_i32, %c0_i32_0 : i32, i32
  }
  func.func @transform_4(%arg0: i32, %arg1: i32) -> (i32, i32) {
    %c0_i32 = arith.constant 0 : i32
    %c0_i32_0 = arith.constant 0 : i32
    %c0_i32_1 = arith.constant 0 : i32
    return %c0_i32, %c0_i32_0 : i32, i32
  }
  func.func @transform_5(%arg0: i32, %arg1: i32) -> (i32, i32, i32) {
    %c0_i32 = arith.constant 0 : i32
    %c0_i32_0 = arith.constant 0 : i32
    %c0_i32_1 = arith.constant 0 : i32
    %c0_i32_2 = arith.constant 0 : i32
    return %c0_i32, %c0_i32_0, %c0_i32_1 : i32, i32, i32
  }
  func.func @transform_6(%arg0: i32, %arg1: i32) -> (i32, i32) {
    %c0_i32 = arith.constant 0 : i32
    %c0_i32_0 = arith.constant 0 : i32
    %c0_i32_1 = arith.constant 0 : i32
    return %c0_i32, %c0_i32_0 : i32, i32
  }
  func.func @transform_7(%arg0: i32, %arg1: i32) -> (i32, i32) {
    %c0_i32 = arith.constant 0 : i32
    %c0_i32_0 = arith.constant 0 : i32
    %c0_i32_1 = arith.constant 0 : i32
    return %c0_i32, %c0_i32_0 : i32, i32
  }
  func.func @transform_8(%arg0: i32, %arg1: i32) -> (i32, i32) {
    %c0_i32 = arith.constant 0 : i32
    %c0_i32_0 = arith.constant 0 : i32
    %c0_i32_1 = arith.constant 0 : i32
    return %c0_i32, %c0_i32_0 : i32, i32
  }
  func.func @transform_9(%arg0: i32, %arg1: i32) -> (i32, i32, i32, i32) {
    %c0_i32 = arith.constant 0 : i32
    %c0_i32_0 = arith.constant 0 : i32
    %c0_i32_1 = arith.constant 0 : i32
    return %arg0, %arg1, %c0_i32, %c0_i32_0 : i32, i32, i32, i32
  }
}

</mosaic_0001>

<llo_original>
// kernel: bottleneck_forward.1
$region0: #{bottleneck_forward.1}
  #allocation0 [shape = 'u32[]', space=smem, size = 0x4, offset = 0x4, fixed_abs, tag = 'smem constant byte address 0x4 - core index']
  #allocation1 [shape = 'u32[144,128]{1,0:T(1,128)}', space=vmem, size = 0x12000, scoped, tag = 'internal scratch']
  #allocation2 [shape = 'bf16[10,18,4]{2,1,0:T(8,128)(2,1)}', space=vmem, size = 0xf000, scoped, tag = 'scratch operand']
  #allocation3 [shape = 'f32[8,16,4]{2,1,0:T(8,128)}', space=vmem, size = 0x10000, scoped, tag = 'scratch operand']
  %s0 = inlined_call_operand.hbm [shape: f32[2,16,16,16], index: 0, kind: input, shape index: {}, may-alias: {0,1,2}]
  %s1 = inlined_call_operand.hbm [shape: f32[2,16,16,16], index: 1, kind: input, shape index: {}, may-alias: {0,1,2}]
  %s2 = inlined_call_operand.hbm [shape: f32[2,16,16,16], index: 2, kind: input, shape index: {}, may-alias: {0,1,2}]
  %s3 = inlined_call_operand.vmem [shape: bf16[16,4], index: 3, kind: input, shape index: {}]
  %s4 = inlined_call_operand.vmem [shape: f32[1,4], index: 4, kind: input, shape index: {}]
  %s5 = inlined_call_operand.vmem [shape: bf16[3,12,4], index: 5, kind: input, shape index: {}]
  %s6 = inlined_call_operand.vmem [shape: f32[1,4], index: 6, kind: input, shape index: {}]
  %s7 = inlined_call_operand.vmem [shape: bf16[4,16], index: 7, kind: input, shape index: {}]
  %s8 = inlined_call_operand.vmem [shape: f32[1,16], index: 8, kind: input, shape index: {}]
  %s9 = inlined_call_operand.hbm [shape: f32[2,16,16,16], index: 9, kind: output, shape index: {}]
  %s10 = sld [smem:[#allocation0]]
  $region89: #{bottleneck_forward.1} parent=0
    _
  %s12 = ssub.s32 1, %s10
  %s13 = scalar_select 0, %s12, %s10
  $region1: #{bottleneck_forward.1} parent=0
    #allocation4 [shape = 'u8[131072]{0}', space=vmem, size = 0x20000, scoped, tag = 'input window, operand 0']
    #allocation5 [shape = 's32[2]{0}', space=sflag, size = 0x8, scoped, tag = 'scoped memory for bottleneck_forward.1']
    #allocation6 [shape = 's32[2]{0}', space=sflag, size = 0x8, scoped, tag = 'scoped memory for bottleneck_forward.1']
    #allocation7 [shape = 'u8[16384]{0}', space=vmem, size = 0x4000, scoped, tag = 'input window, operand 1']
    #allocation8 [shape = 's32[2]{0}', space=sflag, size = 0x8, scoped, tag = 'scoped memory for bottleneck_forward.1']
    #allocation9 [shape = 'u8[16384]{0}', space=vmem, size = 0x4000, scoped, tag = 'input window, operand 2']
    #allocation10 [shape = 'u8[131072]{0}', space=vmem, size = 0x20000, scoped, tag = 'output window, operand 0']
    %14 = vsyncpa [#allocation5], 0
    %s15 = scalar_lea.sflag [#allocation5], 1
    %16 = vsyncpa %s15, 0
    %17 = vsyncpa [#allocation8], 0
    %s18 = scalar_lea.sflag [#allocation8], 1
    %19 = vsyncpa %s18, 0
    %20 = vsyncpa [#allocation6], 0
    %s21 = scalar_lea.sflag [#allocation6], 1
    %22 = vsyncpa %s21, 0
    loop: start=0, step=1, limit=6
    $region2: #{bottleneck_forward.1} parent=1 // loop_pre_header
      _
    $region3: #{bottleneck_forward.1} parent=1 // loop_header
      %s24 = sphi 0, %s28
      %p25 = scmp.ge.s32.totalorder %s24, 6
      %s31 = sphi 0, %s43
      %s32 = sphi 0, %s39
      %s33 = sphi 0, %s31
      %s34 = sphi 0, %s32
      %s35 = sphi 0, %s33
      %s36 = sphi 0, %s34
      %s48 = sphi 0, %s50
      %s51 = sphi 0, %s48
      %s52 = sphi 0, %s51
      %s68 = sphi 0, %s52
      %s84 = sphi 0, %s86
      %s87 = sphi 0, %s84
      %s88 = sphi 0, %s87
      %s104 = sphi 0, %s88
      %s120 = sphi 0, %s122
      %s123 = sphi 0, %s120
      %s124 = sphi 0, %s123
      %s140 = sphi 0, %s124
      %s144 = sphi 0, %s144
      %s146 = sphi 0, %s144
      %s147 = sphi 0, %s146
      %s161 = sphi 0, %s147
      %s165 = sphi 0, %s165
      %s167 = sphi 0, %s165
      %s168 = sphi 0, %s167
      %s182 = sphi 0, %s168
      %s186 = sphi 0, %s186
      %s188 = sphi 0, %s186
      %s189 = sphi 0, %s188
      %s203 = sphi 0, %s189
      %s207 = sphi 0, %s207
      %s209 = sphi 0, %s207
      %s210 = sphi 0, %s209
      %s224 = sphi 0, %s210
      %s228 = sphi 0, %s228
      %s230 = sphi 0, %s228
      %s231 = sphi 0, %s230
      %s245 = sphi 0, %s231
      %s249 = sphi 0, %s249
      %s251 = sphi 0, %s249
      %s252 = sphi 0, %s251
      %s266 = sphi 0, %s252
      %s274 = sphi 0, %s276
      %s277 = sphi 0, %s274
      %s278 = sphi 0, %s277
      %s294 = sphi 0, %s278
    $region4: #{bottleneck_forward.1} parent=1 // loop_header_branch
      %27 = sbr.rel (%p25) target = $region8
    $region5: #{bottleneck_forward.1} parent=1 // loop_body
      %s29 = ssub.s32 %s24, 1
      %s30 = ssub.s32 %s24, 2
      %s37 = sadd.s32 1, %s32
      %p38 = scmp.ge.s32.totalorder %s37, 2
      %s39 = scalar_select %p38, 0, %s37
      %s40 = sadd.s32 1, %s31
      %s41 = scalar_select %p38, %s40, %s31
      %p42 = scmp.ge.s32.totalorder %s41, 2
      %s43 = scalar_select %p42, 0, %s41
      %s44 = ssub.s32 %s31, %s43
      %s45 = ssub.s32 %s32, %s39
      %s46 = sor.u32 %s44, %s45
      %p47 = scmp.eq.s32.totalorder %s46, 0
      %s49 = sadd.s32 %s48, 1
      %s50 = scalar_select %p47, %s48, %s49
      %p53 = pneg %p47
      %p54 = scmp.eq.s32.totalorder %s24, 3
      %p55 = por %p53, %p54
      %p56 = scmp.ne.s32.totalorder %s48, %s51
      %p57 = scmp.eq.s32.totalorder %s24, 0
      %p58 = por %p56, %p57
      %p59 = scmp.ne.s32.totalorder %s48, %s51
      %p60 = scmp.eq.s32.totalorder %s29, 3
      %p61 = por %p59, %p60
      %p62 = scmp.ne.s32.totalorder %s51, %s52
      %p63 = scmp.eq.s32.totalorder %s29, 0
      %p64 = por %p62, %p63
      %p65 = scmp.ne.s32.totalorder %s51, %s52
      %p66 = scmp.eq.s32.totalorder %s30, 3
      %p67 = por %p65, %p66
      %p69 = scmp.ne.s32.totalorder %s52, %s68
      %p70 = scmp.eq.s32.totalorder %s30, 0
      %p71 = por %p69, %p70
      %s72 = smul.u32 %s32, 8
      %s73 = ssub.s32 %s72, 1
      %p74 = scmp.gt.s32.totalorder %s73, 0
      %s75 = scalar_select %p74, %s73, 0
      %s76 = smul.u32 %s39, 8
      %s77 = ssub.s32 %s76, 1
      %p78 = scmp.gt.s32.totalorder %s77, 0
      %s79 = scalar_select %p78, %s77, 0
      %s80 = ssub.s32 %s31, %s43
      %s81 = ssub.s32 %s75, %s79
      %s82 = sor.u32 %s80, %s81
      %p83 = scmp.eq.s32.totalorder %s82, 0
      %s85 = sadd.s32 %s84, 1
      %s86 = scalar_select %p83, %s84, %s85
      %p89 = pneg %p83
      %p90 = scmp.eq.s32.totalorder %s24, 3
      %p91 = por %p89, %p90
      %p92 = scmp.ne.s32.totalorder %s84, %s87
      %p93 = scmp.eq.s32.totalorder %s24, 0
      %p94 = por %p92, %p93
      %p95 = scmp.ne.s32.totalorder %s84, %s87
      %p96 = scmp.eq.s32.totalorder %s29, 3
      %p97 = por %p95, %p96
      %p98 = scmp.ne.s32.totalorder %s87, %s88
      %p99 = scmp.eq.s32.totalorder %s29, 0
      %p100 = por %p98, %p99
      %p101 = scmp.ne.s32.totalorder %s87, %s88
      %p102 = scmp.eq.s32.totalorder %s30, 3
      %p103 = por %p101, %p102
      %p105 = scmp.ne.s32.totalorder %s88, %s104
      %p106 = scmp.eq.s32.totalorder %s30, 0
      %p107 = por %p105, %p106
      %s108 = smul.u32 %s32, 8
      %s109 = sadd.s32 %s108, 8
      %p110 = scmp.lt.s32.totalorder %s109, 15
      %s111 = scalar_select %p110, %s109, 15
      %s112 = smul.u32 %s39, 8
      %s113 = sadd.s32 %s112, 8
      %p114 = scmp.lt.s32.totalorder %s113, 15
      %s115 = scalar_select %p114, %s113, 15
      %s116 = ssub.s32 %s31, %s43
      %s117 = ssub.s32 %s111, %s115
      %s118 = sor.u32 %s116, %s117
      %p119 = scmp.eq.s32.totalorder %s118, 0
      %s121 = sadd.s32 %s120, 1
      %s122 = scalar_select %p119, %s120, %s121
      %p125 = pneg %p119
      %p126 = scmp.eq.s32.totalorder %s24, 3
      %p127 = por %p125, %p126
      %p128 = scmp.ne.s32.totalorder %s120, %s123
      %p129 = scmp.eq.s32.totalorder %s24, 0
      %p130 = por %p128, %p129
      %p131 = scmp.ne.s32.totalorder %s120, %s123
      %p132 = scmp.eq.s32.totalorder %s29, 3
      %p133 = por %p131, %p132
      %p134 = scmp.ne.s32.totalorder %s123, %s124
      %p135 = scmp.eq.s32.totalorder %s29, 0
      %p136 = por %p134, %p135
      %p137 = scmp.ne.s32.totalorder %s123, %s124
      %p138 = scmp.eq.s32.totalorder %s30, 3
      %p139 = por %p137, %p138
      %p141 = scmp.ne.s32.totalorder %s124, %s140
      %p142 = scmp.eq.s32.totalorder %s30, 0
      %p143 = por %p141, %p142
      %s145 = sadd.s32 %s144, 1
      %p148 = scmp.eq.s32.totalorder %s24, 3
      %p149 = scmp.ne.s32.totalorder %s144, %s146
      %p150 = scmp.eq.s32.totalorder %s24, 0
      %p151 = por %p149, %p150
      %p152 = scmp.ne.s32.totalorder %s144, %s146
      %p153 = scmp.eq.s32.totalorder %s29, 3
      %p154 = por %p152, %p153
      %p155 = scmp.ne.s32.totalorder %s146, %s147
      %p156 = scmp.eq.s32.totalorder %s29, 0
      %p157 = por %p155, %p156
      %p158 = scmp.ne.s32.totalorder %s146, %s147
      %p159 = scmp.eq.s32.totalorder %s30, 3
      %p160 = por %p158, %p159
      %p162 = scmp.ne.s32.totalorder %s147, %s161
      %p163 = scmp.eq.s32.totalorder %s30, 0
      %p164 = por %p162, %p163
      %s166 = sadd.s32 %s165, 1
      %p169 = scmp.eq.s32.totalorder %s24, 3
      %p170 = scmp.ne.s32.totalorder %s165, %s167
      %p171 = scmp.eq.s32.totalorder %s24, 0
      %p172 = por %p170, %p171
      %p173 = scmp.ne.s32.totalorder %s165, %s167
      %p174 = scmp.eq.s32.totalorder %s29, 3
      %p175 = por %p173, %p174
      %p176 = scmp.ne.s32.totalorder %s167, %s168
      %p177 = scmp.eq.s32.totalorder %s29, 0
      %p178 = por %p176, %p177
      %p179 = scmp.ne.s32.totalorder %s167, %s168
      %p180 = scmp.eq.s32.totalorder %s30, 3
      %p181 = por %p179, %p180
      %p183 = scmp.ne.s32.totalorder %s168, %s182
      %p184 = scmp.eq.s32.totalorder %s30, 0
      %p185 = por %p183, %p184
      %s187 = sadd.s32 %s186, 1
      %p190 = scmp.eq.s32.totalorder %s24, 3
      %p191 = scmp.ne.s32.totalorder %s186, %s188
      %p192 = scmp.eq.s32.totalorder %s24, 0
      %p193 = por %p191, %p192
      %p194 = scmp.ne.s32.totalorder %s186, %s188
      %p195 = scmp.eq.s32.totalorder %s29, 3
      %p196 = por %p194, %p195
      %p197 = scmp.ne.s32.totalorder %s188, %s189
      %p198 = scmp.eq.s32.totalorder %s29, 0
      %p199 = por %p197, %p198
      %p200 = scmp.ne.s32.totalorder %s188, %s189
      %p201 = scmp.eq.s32.totalorder %s30, 3
      %p202 = por %p200, %p201
      %p204 = scmp.ne.s32.totalorder %s189, %s203
      %p205 = scmp.eq.s32.totalorder %s30, 0
      %p206 = por %p204, %p205
      %s208 = sadd.s32 %s207, 1
      %p211 = scmp.eq.s32.totalorder %s24, 3
      %p212 = scmp.ne.s32.totalorder %s207, %s209
      %p213 = scmp.eq.s32.totalorder %s24, 0
      %p214 = por %p212, %p213
      %p215 = scmp.ne.s32.totalorder %s207, %s209
      %p216 = scmp.eq.s32.totalorder %s29, 3
      %p217 = por %p215, %p216
      %p218 = scmp.ne.s32.totalorder %s209, %s210
      %p219 = scmp.eq.s32.totalorder %s29, 0
      %p220 = por %p218, %p219
      %p221 = scmp.ne.s32.totalorder %s209, %s210
      %p222 = scmp.eq.s32.totalorder %s30, 3
      %p223 = por %p221, %p222
      %p225 = scmp.ne.s32.totalorder %s210, %s224
      %p226 = scmp.eq.s32.totalorder %s30, 0
      %p227 = por %p225, %p226
      %s229 = sadd.s32 %s228, 1
      %p232 = scmp.eq.s32.totalorder %s24, 3
      %p233 = scmp.ne.s32.totalorder %s228, %s230
      %p234 = scmp.eq.s32.totalorder %s24, 0
      %p235 = por %p233, %p234
      %p236 = scmp.ne.s32.totalorder %s228, %s230
      %p237 = scmp.eq.s32.totalorder %s29, 3
      %p238 = por %p236, %p237
      %p239 = scmp.ne.s32.totalorder %s230, %s231
      %p240 = scmp.eq.s32.totalorder %s29, 0
      %p241 = por %p239, %p240
      %p242 = scmp.ne.s32.totalorder %s230, %s231
      %p243 = scmp.eq.s32.totalorder %s30, 3
      %p244 = por %p242, %p243
      %p246 = scmp.ne.s32.totalorder %s231, %s245
      %p247 = scmp.eq.s32.totalorder %s30, 0
      %p248 = por %p246, %p247
      %s250 = sadd.s32 %s249, 1
      %p253 = scmp.eq.s32.totalorder %s24, 3
      %p254 = scmp.ne.s32.totalorder %s249, %s251
      %p255 = scmp.eq.s32.totalorder %s24, 0
      %p256 = por %p254, %p255
      %p257 = scmp.ne.s32.totalorder %s249, %s251
      %p258 = scmp.eq.s32.totalorder %s29, 3
      %p259 = por %p257, %p258
      %p260 = scmp.ne.s32.totalorder %s251, %s252
      %p261 = scmp.eq.s32.totalorder %s29, 0
      %p262 = por %p260, %p261
      %p263 = scmp.ne.s32.totalorder %s251, %s252
      %p264 = scmp.eq.s32.totalorder %s30, 3
      %p265 = por %p263, %p264
      %p267 = scmp.ne.s32.totalorder %s252, %s266
      %p268 = scmp.eq.s32.totalorder %s30, 0
      %p269 = por %p267, %p268
      %s270 = ssub.s32 %s31, %s43
      %s271 = ssub.s32 %s32, %s39
      %s272 = sor.u32 %s270, %s271
      %p273 = scmp.eq.s32.totalorder %s272, 0
      %s275 = sadd.s32 %s274, 1
      %s276 = scalar_select %p273, %s274, %s275
      %p279 = pneg %p273
      %p280 = scmp.eq.s32.totalorder %s24, 3
      %p281 = por %p279, %p280
      %p282 = scmp.ne.s32.totalorder %s274, %s277
      %p283 = scmp.eq.s32.totalorder %s24, 0
      %p284 = por %p282, %p283
      %p285 = scmp.ne.s32.totalorder %s274, %s277
      %p286 = scmp.eq.s32.totalorder %s29, 3
      %p287 = por %p285, %p286
      %p288 = scmp.ne.s32.totalorder %s277, %s278
      %p289 = scmp.eq.s32.totalorder %s29, 0
      %p290 = por %p288, %p289
      %p291 = scmp.ne.s32.totalorder %s277, %s278
      %p292 = scmp.eq.s32.totalorder %s30, 3
      %p293 = por %p291, %p292
      %p295 = scmp.ne.s32.totalorder %s278, %s294
      %p296 = scmp.eq.s32.totalorder %s30, 0
      %p297 = por %p295, %p296
      %p298 = scmp.le.s32.totalorder 1, %s24
      %p299 = scmp.lt.s32.totalorder %s24, 5
      %p300 = pnand %p298, %p299
      %p301 = pneg %p300
      // Predicated region
      $region9: #{bottleneck_forward.1} parent=5 // pred_check
        _
      $region10: #{bottleneck_forward.1} parent=5 // pred_check_branch
        %303 = sbr.rel (%p300) target = $region12
      $region11: #{bottleneck_forward.1} parent=5 // pred_region
        %s304 = ssub.s32 %s24, 1
        // Predicated region
        $region13: #{bottleneck_forward.1} parent=11 // pred_check
          %p305 = pneg %p157
        $region14: #{bottleneck_forward.1} parent=11 // pred_check_branch
          %307 = sbr.rel (%p305) target = $region16
        $region15: #{bottleneck_forward.1} parent=11 // pred_region
          _
        $region16: #{bottleneck_forward.1} parent=11 // pred_fallthru
          _
        // Predicated region
        $region17: #{bottleneck_forward.1} parent=11 // pred_check
          %p308 = pneg %p178
        $region18: #{bottleneck_forward.1} parent=11 // pred_check_branch
          %310 = sbr.rel (%p308) target = $region20
        $region19: #{bottleneck_forward.1} parent=11 // pred_region
          _
        $region20: #{bottleneck_forward.1} parent=11 // pred_fallthru
          _
        // Predicated region
        $region21: #{bottleneck_forward.1} parent=11 // pred_check
          %p311 = pneg %p199
        $region22: #{bottleneck_forward.1} parent=11 // pred_check_branch
          %313 = sbr.rel (%p311) target = $region24
        $region23: #{bottleneck_forward.1} parent=11 // pred_region
          _
        $region24: #{bottleneck_forward.1} parent=11 // pred_fallthru
          _
        // Predicated region
        $region25: #{bottleneck_forward.1} parent=11 // pred_check
          %p314 = pneg %p220
        $region26: #{bottleneck_forward.1} parent=11 // pred_check_branch
          %316 = sbr.rel (%p314) target = $region28
        $region27: #{bottleneck_forward.1} parent=11 // pred_region
          _
        $region28: #{bottleneck_forward.1} parent=11 // pred_fallthru
          _
        // Predicated region
        $region29: #{bottleneck_forward.1} parent=11 // pred_check
          %p317 = pneg %p241
        $region30: #{bottleneck_forward.1} parent=11 // pred_check_branch
          %319 = sbr.rel (%p317) target = $region32
        $region31: #{bottleneck_forward.1} parent=11 // pred_region
          _
        $region32: #{bottleneck_forward.1} parent=11 // pred_fallthru
          _
        // Predicated region
        $region33: #{bottleneck_forward.1} parent=11 // pred_check
          %p320 = pneg %p262
        $region34: #{bottleneck_forward.1} parent=11 // pred_check_branch
          %322 = sbr.rel (%p320) target = $region36
        $region35: #{bottleneck_forward.1} parent=11 // pred_region
          _
        $region36: #{bottleneck_forward.1} parent=11 // pred_fallthru
          _
      $region12: #{bottleneck_forward.1} parent=5 // pred_fallthru
        _
      %p323 = scmp.lt.s32.totalorder %s24, 4
      // Predicated region
      $region37: #{bottleneck_forward.1} parent=5 // pred_check
        %p324 = pneg %p323
      $region38: #{bottleneck_forward.1} parent=5 // pred_check_branch
        %326 = sbr.rel (%p324) target = $region40
      $region39: #{bottleneck_forward.1} parent=5 // pred_region
        // Predicated region
        $region41: #{bottleneck_forward.1} parent=39 // pred_check
          %p327 = pneg %p58
        $region42: #{bottleneck_forward.1} parent=39 // pred_check_branch
          %329 = sbr.rel (%p327) target = $region44
        $region43: #{bottleneck_forward.1} parent=39 // pred_region
          %s330 = sand.u32 %s48, 1
          %s331 = scalar_lea.sflag [#allocation5], %s330
          %s332 = sand.u32 %s48, 1
          %s333 = smul.addr %s332, 128
          %s334 = scalar_lea.vmem [#allocation4], %s333
          %s335 = smul.u32 8, %s32
          %s337 = ssub.s32 2048, 2048
          %338 = vsyncadd %s331, %s337
          %s339 = smul.addr %s335, 2
          %s340 = smul.addr %s31, 32
          %s341 = sadd.s32 %s339, %s340
          %s342 = smul.addr %s341, 128
          %s343 = scalar_lea.hbm %s0, %s342
          %s344 = sshll.u32 %s334, 4
          %s345 = int_to_ptr.vmem [resolvable:$true] %s344
          %350 = dma.hbm_to_vmem [thread:$0]  %s343, 2048, %s345, %s331, 128, 128, 8
        $region44: #{bottleneck_forward.1} parent=39 // pred_fallthru
          _
        // Predicated region
        $region45: #{bottleneck_forward.1} parent=39 // pred_check
          %p351 = pneg %p94
        $region46: #{bottleneck_forward.1} parent=39 // pred_check_branch
          %353 = sbr.rel (%p351) target = $region48
        $region47: #{bottleneck_forward.1} parent=39 // pred_region
          %s354 = sand.u32 %s24, 1
          %s355 = scalar_lea.sflag [#allocation8], %s354
          %s356 = sand.u32 %s84, 1
          %s357 = smul.addr %s356, 16
          %s358 = scalar_lea.vmem [#allocation7], %s357
          %s359 = smul.u32 %s32, 8
          %s360 = ssub.s32 %s359, 1
          %p361 = scmp.gt.s32.totalorder %s360, 0
          %s362 = scalar_select %p361, %s360, 0
          %s364 = ssub.s32 256, 256
          %365 = vsyncadd %s355, %s364
          %s366 = smul.addr %s362, 2
          %s367 = smul.addr %s31, 32
          %s368 = sadd.s32 %s366, %s367
          %s369 = smul.addr %s368, 128
          %s370 = scalar_lea.hbm %s1, %s369
          %s371 = sshll.u32 %s358, 4
          %s372 = int_to_ptr.vmem [resolvable:$true] %s371
          %377 = dma.hbm_to_vmem [thread:$0]  %s370, 256, %s372, %s355, 128, 128, 8
        $region48: #{bottleneck_forward.1} parent=39 // pred_fallthru
          _
        // Predicated region
        $region49: #{bottleneck_forward.1} parent=39 // pred_check
          %p378 = pneg %p130
        $region50: #{bottleneck_forward.1} parent=39 // pred_check_branch
          %380 = sbr.rel (%p378) target = $region52
        $region51: #{bottleneck_forward.1} parent=39 // pred_region
          %s381 = sand.u32 %s24, 1
          %s382 = scalar_lea.sflag [#allocation8], %s381
          %s383 = sand.u32 %s120, 1
          %s384 = smul.addr %s383, 16
          %s385 = scalar_lea.vmem [#allocation9], %s384
          %s386 = smul.u32 %s32, 8
          %s387 = sadd.s32 %s386, 8
          %p388 = scmp.lt.s32.totalorder %s387, 15
          %s389 = scalar_select %p388, %s387, 15
          %s391 = ssub.s32 256, 256
          %392 = vsyncadd %s382, %s391
          %s393 = smul.addr %s389, 2
          %s394 = smul.addr %s31, 32
          %s395 = sadd.s32 %s393, %s394
          %s396 = smul.addr %s395, 128
          %s397 = scalar_lea.hbm %s2, %s396
          %s398 = sshll.u32 %s385, 4
          %s399 = int_to_ptr.vmem [resolvable:$true] %s398
          %404 = dma.hbm_to_vmem [thread:$0]  %s397, 256, %s399, %s382, 128, 128, 8
        $region52: #{bottleneck_forward.1} parent=39 // pred_fallthru
          _
      $region40: #{bottleneck_forward.1} parent=5 // pred_fallthru
        _
      %p405 = scmp.le.s32.totalorder 1, %s24
      %p406 = scmp.lt.s32.totalorder %s24, 5
      %p407 = pnand %p405, %p406
      %p408 = pneg %p407
      // Predicated region
      $region53: #{bottleneck_forward.1} parent=5 // pred_check
        _
      $region54: #{bottleneck_forward.1} parent=5 // pred_check_branch
        %410 = sbr.rel (%p407) target = $region56
      $region55: #{bottleneck_forward.1} parent=5 // pred_region
        %s411 = ssub.s32 %s24, 1
        %s412 = sand.u32 %s51, 1
        %s413 = scalar_lea.sflag [#allocation5], %s412
        %s414 = sand.u32 %s51, 1
        %s415 = smul.addr %s414, 128
        %s416 = scalar_lea.vmem [#allocation4], %s415
        // Predicated region
        $region57: #{bottleneck_forward.1} parent=55 // pred_check
          %p417 = pneg %p64
        $region58: #{bottleneck_forward.1} parent=55 // pred_check_branch
          %419 = sbr.rel (%p417) target = $region60
        $region59: #{bottleneck_forward.1} parent=55 // pred_region
          %420 = dma.done %s413, 2048
        $region60: #{bottleneck_forward.1} parent=55 // pred_fallthru
          _
        %s421 = sand.u32 %s29, 1
        %s422 = scalar_lea.sflag [#allocation8], %s421
        %s423 = sand.u32 %s87, 1
        %s424 = smul.addr %s423, 16
        %s425 = scalar_lea.vmem [#allocation7], %s424
        // Predicated region
        $region61: #{bottleneck_forward.1} parent=55 // pred_check
          %p426 = pneg %p100
        $region62: #{bottleneck_forward.1} parent=55 // pred_check_branch
          %428 = sbr.rel (%p426) target = $region64
        $region63: #{bottleneck_forward.1} parent=55 // pred_region
          %429 = dma.done %s422, 256
        $region64: #{bottleneck_forward.1} parent=55 // pred_fallthru
          _
        %s430 = sand.u32 %s29, 1
        %s431 = scalar_lea.sflag [#allocation8], %s430
        %s432 = sand.u32 %s123, 1
        %s433 = smul.addr %s432, 16
        %s434 = scalar_lea.vmem [#allocation9], %s433
        // Predicated region
        $region65: #{bottleneck_forward.1} parent=55 // pred_check
          %p435 = pneg %p136
        $region66: #{bottleneck_forward.1} parent=55 // pred_check_branch
          %437 = sbr.rel (%p435) target = $region68
        $region67: #{bottleneck_forward.1} parent=55 // pred_region
          %438 = dma.done %s431, 256
        $region68: #{bottleneck_forward.1} parent=55 // pred_fallthru
          _
        %s439 = sand.u32 %s51, 1
        %s440 = scalar_lea.sflag [#allocation5], %s439
        %s441 = sand.u32 %s51, 1
        %s442 = smul.addr %s441, 128
        %s443 = scalar_lea.vmem [#allocation4], %s442
        %p444 = pneg %p64
        %p445 = pneg %p61
        %s446 = sand.u32 %s29, 1
        %s447 = scalar_lea.sflag [#allocation8], %s446
        %s448 = sand.u32 %s87, 1
        %s449 = smul.addr %s448, 16
        %s450 = scalar_lea.vmem [#allocation7], %s449
        %p451 = pneg %p100
        %p452 = pneg %p97
        %s453 = sand.u32 %s29, 1
        %s454 = scalar_lea.sflag [#allocation8], %s453
        %s455 = sand.u32 %s123, 1
        %s456 = smul.addr %s455, 16
        %s457 = scalar_lea.vmem [#allocation9], %s456
        %p458 = pneg %p136
        %p459 = pneg %p133
        %p460 = pneg %p157
        %p461 = pneg %p154
        %p462 = pneg %p178
        %p463 = pneg %p175
        %p464 = pneg %p199
        %p465 = pneg %p196
        %p466 = pneg %p220
        %p467 = pneg %p217
        %p468 = pneg %p241
        %p469 = pneg %p238
        %p470 = pneg %p262
        %p471 = pneg %p259
        %p472 = pneg %p290
        %p473 = pneg %p287
        %s474 = sand.u32 %s277, 1
        %s475 = scalar_lea.sflag [#allocation6], %s474
        %s476 = sand.u32 %s277, 1
        %s477 = smul.addr %s476, 128
        %s478 = scalar_lea.vmem [#allocation10], %s477
        %s479 = smul.u32 8, %s34
        %s480 = smul.u32 %s34, 8
        %s481 = ssub.s32 %s480, 1
        %p482 = scmp.gt.s32.totalorder %s481, 0
        %s483 = scalar_select %p482, %s481, 0
        %s484 = smul.u32 %s34, 8
        %s485 = sadd.s32 %s484, 8
        %p486 = scmp.lt.s32.totalorder %s485, 15
        %s487 = scalar_select %p486, %s485, 15
        %s488 = smul.u32 8, %s34
        %v490 = vld [vmem:[%s425] sm:$0xff]
        %v491 = vld [vmem:[%s425 + $0x8] sm:$0xff]
        %v492 = vld [vmem:[%s416] sm:$0xff]
        %v493 = vld [vmem:[%s416 + $0x8] sm:$0xff]
        %v494 = vld [vmem:[%s416 + $0x10] sm:$0xff]
        %v495 = vld [vmem:[%s416 + $0x18] sm:$0xff]
        %v496 = vld [vmem:[%s416 + $0x20] sm:$0xff]
        %v497 = vld [vmem:[%s416 + $0x28] sm:$0xff]
        %v498 = vld [vmem:[%s416 + $0x30] sm:$0xff]
        %v499 = vld [vmem:[%s416 + $0x38] sm:$0xff]
        %v500 = vld [vmem:[%s416 + $0x40] sm:$0xff]
        %v501 = vld [vmem:[%s416 + $0x48] sm:$0xff]
        %v502 = vld [vmem:[%s416 + $0x50] sm:$0xff]
        %v503 = vld [vmem:[%s416 + $0x58] sm:$0xff]
        %v504 = vld [vmem:[%s416 + $0x60] sm:$0xff]
        %v505 = vld [vmem:[%s416 + $0x68] sm:$0xff]
        %v506 = vld [vmem:[%s416 + $0x70] sm:$0xff]
        %v507 = vld [vmem:[%s416 + $0x78] sm:$0xff]
        %v508 = vld [vmem:[%s434] sm:$0xff]
        %v509 = vld [vmem:[%s434 + $0x8] sm:$0xff]
        %v510 = vpack.c.bf16 %v491, %v490
        %v511 = vpack.c.bf16 %v493, %v492
        %v512 = vpack.c.bf16 %v495, %v494
        %v513 = vpack.c.bf16 %v497, %v496
        %v514 = vpack.c.bf16 %v499, %v498
        %v515 = vpack.c.bf16 %v501, %v500
        %v516 = vpack.c.bf16 %v503, %v502
        %v517 = vpack.c.bf16 %v505, %v504
        %v518 = vpack.c.bf16 %v507, %v506
        %v519 = vpack.c.bf16 %v509, %v508
        %v520 = vld [vmem:[%s3] sm:$0xf]
        %v521 = vld [vmem:[%s3 + $0x4] sm:$0xf]
        %v522 = vld [vmem:[%s4] sm:$0x1]
        %v524 = vlaneseq
        %v525 = vshrl.u32 %v524, 7
        %v526 = vsub.s32 0, %v525
        %v527 = vrot.slane %v522, %v526
        %v531 = vunpack.c.l.b16 %v520
        %v532 = vunpack.c.l.b16 %v521
        %v533 = vpack.c.b16 %v532, %v531
        %vm535 = vcmask 130048
        %v537 = vsel %vm535, %v510, 0
        %v540 = vsel %vm535, %v511, 0
        %v543 = vsel %vm535, %v512, 0
        %v546 = vsel %vm535, %v513, 0
        %v549 = vsel %vm535, %v514, 0
        %v552 = vsel %vm535, %v515, 0
        %v555 = vsel %vm535, %v516, 0
        %v558 = vsel %vm535, %v517, 0
        %v561 = vsel %vm535, %v518, 0
        %v564 = vsel %vm535, %v519, 0
        %566 = vmatprep.subr.bf16.mxu0 0
        %567 = vmatpush1.bf16.msra.mxu0 0
        %568 = vmatprep.subr.bf16.mxu0 0
        %569 = vmatpush1.bf16.msra.mxu0 0
        %570 = vmatprep.subr.bf16.mxu0 0
        %571 = vmatpush1.bf16.msra.mxu0 0
        %572 = vmatprep.subr.bf16.mxu0 0
        %573 = vmatpush1.bf16.msra.mxu0 0
        %574 = vmatprep.subr.bf16.mxu0 0
        %575 = vmatpush1.bf16.msra.mxu0 0
        %576 = vmatprep.subr.bf16.mxu0 0
        %577 = vmatpush1.bf16.msra.mxu0 0
        %578 = vmatprep.subr.bf16.mxu0 0
        %579 = vmatpush1.bf16.msra.mxu0 0
        %580 = vmatprep.subr.bf16.mxu0 0
        %581 = vmatpush1.bf16.msra.mxu0 %v533
        %582 = vmatprep.subr.bf16.mxu0 0
        %583 = vmatpush2.bf16.msra.mxu0 0
        %584 = vmatprep.subr.bf16.mxu0 0
        %585 = vmatpush2.bf16.msra.mxu0 0
        %586 = vmatprep.subr.bf16.mxu0 0
        %587 = vmatpush2.bf16.msra.mxu0 0
        %588 = vmatprep.subr.bf16.mxu0 0
        %589 = vmatpush2.bf16.msra.mxu0 0
        %590 = vmatprep.subr.bf16.mxu0 0
        %591 = vmatpush2.bf16.msra.mxu0 0
        %592 = vmatprep.subr.bf16.mxu0 0
        %593 = vmatpush2.bf16.msra.mxu0 0
        %594 = vmatprep.subr.bf16.mxu0 0
        %595 = vmatpush2.bf16.msra.mxu0 0
        %596 = vmatprep.subr.bf16.mxu0 0
        %597 = vmatpush2.bf16.msra.mxu0 0
        %598 = vmatprep.mubr.bf16.mxu0 0
        %599 = vmatmul.mubr.bf16.gmra.mxu0 %v537
        %v600 = vpop.f32.mrf.mxu0
        %v601 = vadd.f32 %v527, %v600
        %v602 = vpop.f32.mrf.mxu0
        %v603 = vpop.f32.mrf.mxu0
        %v604 = vadd.f32 %v527, %v603
        %v605 = vpop.f32.mrf.mxu0
        %606 = vmatprep.mubr.bf16.mxu0 0
        %607 = vmatmul.mubr.bf16.gmra.mxu0 %v540
        %v608 = vpop.f32.mrf.mxu0
        %v609 = vadd.f32 %v527, %v608
        %v610 = vpop.f32.mrf.mxu0
        %v611 = vpop.f32.mrf.mxu0
        %v612 = vadd.f32 %v527, %v611
        %v613 = vpop.f32.mrf.mxu0
        %614 = vmatprep.mubr.bf16.mxu0 0
        %615 = vmatmul.mubr.bf16.gmra.mxu0 %v543
        %v616 = vpop.f32.mrf.mxu0
        %v617 = vadd.f32 %v527, %v616
        %v618 = vpop.f32.mrf.mxu0
        %v619 = vpop.f32.mrf.mxu0
        %v620 = vadd.f32 %v527, %v619
        %v621 = vpop.f32.mrf.mxu0
        %622 = vmatprep.mubr.bf16.mxu0 0
        %623 = vmatmul.mubr.bf16.gmra.mxu0 %v546
        %v624 = vpop.f32.mrf.mxu0
        %v625 = vadd.f32 %v527, %v624
        %v626 = vpop.f32.mrf.mxu0
        %v627 = vpop.f32.mrf.mxu0
        %v628 = vadd.f32 %v527, %v627
        %v629 = vpop.f32.mrf.mxu0
        %630 = vmatprep.mubr.bf16.mxu0 0
        %631 = vmatmul.mubr.bf16.gmra.mxu0 %v549
        %v632 = vpop.f32.mrf.mxu0
        %v633 = vadd.f32 %v527, %v632
        %v634 = vpop.f32.mrf.mxu0
        %v635 = vpop.f32.mrf.mxu0
        %v636 = vadd.f32 %v527, %v635
        %v637 = vpop.f32.mrf.mxu0
        %638 = vmatprep.mubr.bf16.mxu0 0
        %639 = vmatmul.mubr.bf16.gmra.mxu0 %v552
        %v640 = vpop.f32.mrf.mxu0
        %v641 = vadd.f32 %v527, %v640
        %v642 = vpop.f32.mrf.mxu0
        %v643 = vpop.f32.mrf.mxu0
        %v644 = vadd.f32 %v527, %v643
        %v645 = vpop.f32.mrf.mxu0
        %646 = vmatprep.mubr.bf16.mxu0 0
        %647 = vmatmul.mubr.bf16.gmra.mxu0 %v555
        %v648 = vpop.f32.mrf.mxu0
        %v649 = vadd.f32 %v527, %v648
        %v650 = vpop.f32.mrf.mxu0
        %v651 = vpop.f32.mrf.mxu0
        %v652 = vadd.f32 %v527, %v651
        %v653 = vpop.f32.mrf.mxu0
        %654 = vmatprep.mubr.bf16.mxu0 0
        %655 = vmatmul.mubr.bf16.gmra.mxu0 %v558
        %v656 = vpop.f32.mrf.mxu0
        %v657 = vadd.f32 %v527, %v656
        %v658 = vpop.f32.mrf.mxu0
        %v659 = vpop.f32.mrf.mxu0
        %v660 = vadd.f32 %v527, %v659
        %v661 = vpop.f32.mrf.mxu0
        %662 = vmatprep.mubr.bf16.mxu0 0
        %663 = vmatmul.mubr.bf16.gmra.mxu0 %v561
        %v664 = vpop.f32.mrf.mxu0
        %v665 = vadd.f32 %v527, %v664
        %v666 = vpop.f32.mrf.mxu0
        %v667 = vpop.f32.mrf.mxu0
        %v668 = vadd.f32 %v527, %v667
        %v669 = vpop.f32.mrf.mxu0
        %670 = vmatprep.mubr.bf16.mxu0 0
        %671 = vmatmul.mubr.bf16.gmra.mxu0 %v564
        %v672 = vpop.f32.mrf.mxu0
        %v673 = vadd.f32 %v527, %v672
        %v674 = vpop.f32.mrf.mxu0
        %v675 = vpop.f32.mrf.mxu0
        %v676 = vadd.f32 %v527, %v675
        %v677 = vpop.f32.mrf.mxu0
        %678 = vdwg.mxu0
        %v679 = vmax.f32 %v601, 0.0
        %v680 = vmax.f32 %v604, 0.0
        %v681 = vmax.f32 %v609, 0.0
        %v682 = vmax.f32 %v612, 0.0
        %v683 = vmax.f32 %v617, 0.0
        %v684 = vmax.f32 %v620, 0.0
        %v685 = vmax.f32 %v625, 0.0
        %v686 = vmax.f32 %v628, 0.0
        %v687 = vmax.f32 %v633, 0.0
        %v688 = vmax.f32 %v636, 0.0
        %v689 = vmax.f32 %v641, 0.0
        %v690 = vmax.f32 %v644, 0.0
        %v691 = vmax.f32 %v649, 0.0
        %v692 = vmax.f32 %v652, 0.0
        %v693 = vmax.f32 %v657, 0.0
        %v694 = vmax.f32 %v660, 0.0
        %v695 = vmax.f32 %v665, 0.0
        %v696 = vmax.f32 %v668, 0.0
        %v697 = vmax.f32 %v673, 0.0
        %v698 = vmax.f32 %v676, 0.0
        %v699 = vpack.c.bf16 %v680, %v679
        %v700 = vpack.c.bf16 %v682, %v681
        %v701 = vpack.c.bf16 %v684, %v683
        %v702 = vpack.c.bf16 %v686, %v685
        %v703 = vpack.c.bf16 %v688, %v687
        %v704 = vpack.c.bf16 %v690, %v689
        %v705 = vpack.c.bf16 %v692, %v691
        %v706 = vpack.c.bf16 %v694, %v693
        %v707 = vpack.c.bf16 %v696, %v695
        %v708 = vpack.c.bf16 %v698, %v697
        %v710 = vshrl.u32 %v699, 16
        %v712 = vrot.slane %v710, 7
        %v713 = vshll.u32 %v699, 16
        %v715 = vor.u32 %v712, %v713
        %v717 = vshrl.u32 %v700, 16
        %v719 = vrot.slane %v717, 7
        %v720 = vshll.u32 %v700, 16
        %v722 = vor.u32 %v719, %v720
        %v724 = vshrl.u32 %v701, 16
        %v726 = vrot.slane %v724, 7
        %v727 = vshll.u32 %v701, 16
        %v729 = vor.u32 %v726, %v727
        %v731 = vshrl.u32 %v702, 16
        %v733 = vrot.slane %v731, 7
        %v734 = vshll.u32 %v702, 16
        %v736 = vor.u32 %v733, %v734
        %v738 = vshrl.u32 %v703, 16
        %v740 = vrot.slane %v738, 7
        %v741 = vshll.u32 %v703, 16
        %v743 = vor.u32 %v740, %v741
        %v745 = vshrl.u32 %v704, 16
        %v747 = vrot.slane %v745, 7
        %v748 = vshll.u32 %v704, 16
        %v750 = vor.u32 %v747, %v748
        %v752 = vshrl.u32 %v705, 16
        %v754 = vrot.slane %v752, 7
        %v755 = vshll.u32 %v705, 16
        %v757 = vor.u32 %v754, %v755
        %v759 = vshrl.u32 %v706, 16
        %v761 = vrot.slane %v759, 7
        %v762 = vshll.u32 %v706, 16
        %v764 = vor.u32 %v761, %v762
        %v766 = vshrl.u32 %v707, 16
        %v768 = vrot.slane %v766, 7
        %v769 = vshll.u32 %v707, 16
        %v771 = vor.u32 %v768, %v769
        %v773 = vshrl.u32 %v708, 16
        %v775 = vrot.slane %v773, 7
        %v776 = vshll.u32 %v708, 16
        %v778 = vor.u32 %v775, %v776
        %vm799 = vcmask 1040384
        %vm800 = vsmask.f32 256
        %vm801 = vmand %vm799, %vm800
        %v802 = vsel %vm801, 0, %v715
        %v803 = vsel %vm801, 0, %v722
        %v804 = vsel %vm801, 0, %v729
        %v805 = vsel %vm801, 0, %v736
        %v806 = vsel %vm801, 0, %v743
        %v807 = vsel %vm801, 0, %v750
        %v808 = vsel %vm801, 0, %v757
        %v809 = vsel %vm801, 0, %v764
        %v810 = vsel %vm801, 0, %v771
        %v811 = vsel %vm801, 0, %v778
        %v812 = vsel %vm801, %v712, 0
        %v813 = vsel %vm801, %v719, 0
        %v814 = vsel %vm801, %v726, 0
        %v815 = vsel %vm801, %v733, 0
        %v816 = vsel %vm801, %v740, 0
        %v817 = vsel %vm801, %v747, 0
        %v818 = vsel %vm801, %v754, 0
        %v819 = vsel %vm801, %v761, 0
        %v820 = vsel %vm801, %v768, 0
        %v821 = vsel %vm801, %v775, 0
        %v842 = vunpack.c.l.b16 %v802
        %v843 = vunpack.c.h.b16 %v802
        %v844 = vunpack.c.l.b16 %v812
        %v845 = vunpack.c.l.b16 %v803
        %v846 = vunpack.c.h.b16 %v803
        %v847 = vunpack.c.l.b16 %v813
        %v848 = vunpack.c.l.b16 %v804
        %v849 = vunpack.c.h.b16 %v804
        %v850 = vunpack.c.l.b16 %v814
        %v851 = vunpack.c.l.b16 %v805
        %v852 = vunpack.c.h.b16 %v805
        %v853 = vunpack.c.l.b16 %v815
        %v854 = vunpack.c.l.b16 %v806
        %v855 = vunpack.c.h.b16 %v806
        %v856 = vunpack.c.l.b16 %v816
        %v857 = vunpack.c.l.b16 %v807
        %v858 = vunpack.c.h.b16 %v807
        %v859 = vunpack.c.l.b16 %v817
        %v860 = vunpack.c.l.b16 %v808
        %v861 = vunpack.c.h.b16 %v808
        %v862 = vunpack.c.l.b16 %v818
        %v863 = vunpack.c.l.b16 %v809
        %v864 = vunpack.c.h.b16 %v809
        %v865 = vunpack.c.l.b16 %v819
        %v866 = vunpack.c.l.b16 %v810
        %v867 = vunpack.c.h.b16 %v810
        %v868 = vunpack.c.l.b16 %v820
        %v869 = vunpack.c.l.b16 %v811
        %v870 = vunpack.c.h.b16 %v811
        %v871 = vunpack.c.l.b16 %v821
        %v872 = vpack.c.b16 %v842, %v842
        %v873 = vpack.c.b16 %v843, %v843
        %v874 = vpack.c.b16 %v844, %v844
        %v875 = vpack.c.b16 %v845, %v845
        %v876 = vpack.c.b16 %v846, %v846
        %v877 = vpack.c.b16 %v847, %v847
        %v878 = vpack.c.b16 %v848, %v848
        %v879 = vpack.c.b16 %v849, %v849
        %v880 = vpack.c.b16 %v850, %v850
        %v881 = vpack.c.b16 %v851, %v851
        %v882 = vpack.c.b16 %v852, %v852
        %v883 = vpack.c.b16 %v853, %v853
        %v884 = vpack.c.b16 %v854, %v854
        %v885 = vpack.c.b16 %v855, %v855
        %v886 = vpack.c.b16 %v856, %v856
        %v887 = vpack.c.b16 %v857, %v857
        %v888 = vpack.c.b16 %v858, %v858
        %v889 = vpack.c.b16 %v859, %v859
        %v890 = vpack.c.b16 %v860, %v860
        %v891 = vpack.c.b16 %v861, %v861
        %v892 = vpack.c.b16 %v862, %v862
        %v893 = vpack.c.b16 %v863, %v863
        %v894 = vpack.c.b16 %v864, %v864
        %v895 = vpack.c.b16 %v865, %v865
        %v896 = vpack.c.b16 %v866, %v866
        %v897 = vpack.c.b16 %v867, %v867
        %v898 = vpack.c.b16 %v868, %v868
        %v899 = vpack.c.b16 %v869, %v869
        %v900 = vpack.c.b16 %v870, %v870
        %v901 = vpack.c.b16 %v871, %v871
        %vm932 = vcmask 27648
        %933 = vst.msk [vmem:[#allocation2] sm:$0xf] %vm932, %v872
        %934 = vst.msk [vmem:[#allocation2 + $0x4] sm:$0xf] %vm932, %v873
        %vm935 = vcmask 24576
        %936 = vst.msk [vmem:[#allocation2 + $0x8] sm:$0x1] %vm935, %v874
        %937 = vst.msk [vmem:[#allocation2 + $0xc] sm:$0xf] %vm932, %v875
        %938 = vst.msk [vmem:[#allocation2 + $0x10] sm:$0xf] %vm932, %v876
        %939 = vst.msk [vmem:[#allocation2 + $0x14] sm:$0x1] %vm935, %v877
        %940 = vst.msk [vmem:[#allocation2 + $0x18] sm:$0xf] %vm932, %v878
        %941 = vst.msk [vmem:[#allocation2 + $0x1c] sm:$0xf] %vm932, %v879
        %942 = vst.msk [vmem:[#allocation2 + $0x20] sm:$0x1] %vm935, %v880
        %943 = vst.msk [vmem:[#allocation2 + $0x24] sm:$0xf] %vm932, %v881
        %944 = vst.msk [vmem:[#allocation2 + $0x28] sm:$0xf] %vm932, %v882
        %945 = vst.msk [vmem:[#allocation2 + $0x2c] sm:$0x1] %vm935, %v883
        %946 = vst.msk [vmem:[#allocation2 + $0x30] sm:$0xf] %vm932, %v884
        %947 = vst.msk [vmem:[#allocation2 + $0x34] sm:$0xf] %vm932, %v885
        %948 = vst.msk [vmem:[#allocation2 + $0x38] sm:$0x1] %vm935, %v886
        %949 = vst.msk [vmem:[#allocation2 + $0x3c] sm:$0xf] %vm932, %v887
        %950 = vst.msk [vmem:[#allocation2 + $0x40] sm:$0xf] %vm932, %v888
        %951 = vst.msk [vmem:[#allocation2 + $0x44] sm:$0x1] %vm935, %v889
        %952 = vst.msk [vmem:[#allocation2 + $0x48] sm:$0xf] %vm932, %v890
        %953 = vst.msk [vmem:[#allocation2 + $0x4c] sm:$0xf] %vm932, %v891
        %954 = vst.msk [vmem:[#allocation2 + $0x50] sm:$0x1] %vm935, %v892
        %955 = vst.msk [vmem:[#allocation2 + $0x54] sm:$0xf] %vm932, %v893
        %956 = vst.msk [vmem:[#allocation2 + $0x58] sm:$0xf] %vm932, %v894
        %957 = vst.msk [vmem:[#allocation2 + $0x5c] sm:$0x1] %vm935, %v895
        %958 = vst.msk [vmem:[#allocation2 + $0x60] sm:$0xf] %vm932, %v896
        %959 = vst.msk [vmem:[#allocation2 + $0x64] sm:$0xf] %vm932, %v897
        %960 = vst.msk [vmem:[#allocation2 + $0x68] sm:$0x1] %vm935, %v898
        %961 = vst.msk [vmem:[#allocation2 + $0x6c] sm:$0xf] %vm932, %v899
        %962 = vst.msk [vmem:[#allocation2 + $0x70] sm:$0xf] %vm932, %v900
        %963 = vst.msk [vmem:[#allocation2 + $0x74] sm:$0x1] %vm935, %v901
        %p964 = scmp.eq.s32.totalorder %s34, 0
        // Predicated region
        $region69: #{bottleneck_forward.1} parent=55 // pred_check
          %p965 = pneg %p964
        $region70: #{bottleneck_forward.1} parent=55 // pred_check_branch
          %967 = sbr.rel (%p965) target = $region72
        $region71: #{bottleneck_forward.1} parent=55 // pred_region
          %968 = vst.msk [vmem:[#allocation2] sm:$0xf] %vm932, 0
          %969 = vst.msk [vmem:[#allocation2 + $0x4] sm:$0xf] %vm932, 0
          %970 = vst.msk [vmem:[#allocation2 + $0x8] sm:$0x1] %vm935, 0
        $region72: #{bottleneck_forward.1} parent=55 // pred_fallthru
          _
        %p971 = scmp.eq.s32.totalorder %s34, 1
        // Predicated region
        $region73: #{bottleneck_forward.1} parent=55 // pred_check
          %p972 = pneg %p971
        $region74: #{bottleneck_forward.1} parent=55 // pred_check_branch
          %974 = sbr.rel (%p972) target = $region76
        $region75: #{bottleneck_forward.1} parent=55 // pred_region
          %s975 = scalar_lea.vmem [#allocation2], 108
          %976 = vst.msk [vmem:[%s975] sm:$0xf] %vm932, 0
          %977 = vst.msk [vmem:[%s975 + $0x4] sm:$0xf] %vm932, 0
          %978 = vst.msk [vmem:[%s975 + $0x8] sm:$0x1] %vm935, 0
        $region76: #{bottleneck_forward.1} parent=55 // pred_fallthru
          _
        %v979 = vld [vmem:[#allocation2] sm:$0xf]
        %v980 = vld [vmem:[#allocation2 + $0x4] sm:$0xf]
        %v981 = vld [vmem:[#allocation2 + $0x8] sm:$0x1]
        %v982 = vld [vmem:[#allocation2 + $0xc] sm:$0xf]
        %v983 = vld [vmem:[#allocation2 + $0x10] sm:$0xf]
        %v984 = vld [vmem:[#allocation2 + $0x14] sm:$0x1]
        %v985 = vld [vmem:[#allocation2 + $0x18] sm:$0xf]
        %v986 = vld [vmem:[#allocation2 + $0x1c] sm:$0xf]
        %v987 = vld [vmem:[#allocation2 + $0x20] sm:$0x1]
        %v988 = vld [vmem:[#allocation2 + $0x24] sm:$0xf]
        %v989 = vld [vmem:[#allocation2 + $0x28] sm:$0xf]
        %v990 = vld [vmem:[#allocation2 + $0x2c] sm:$0x1]
        %v991 = vld [vmem:[#allocation2 + $0x30] sm:$0xf]
        %v992 = vld [vmem:[#allocation2 + $0x34] sm:$0xf]
        %v993 = vld [vmem:[#allocation2 + $0x38] sm:$0x1]
        %v994 = vld [vmem:[#allocation2 + $0x3c] sm:$0xf]
        %v995 = vld [vmem:[#allocation2 + $0x40] sm:$0xf]
        %v996 = vld [vmem:[#allocation2 + $0x44] sm:$0x1]
        %v997 = vld [vmem:[#allocation2 + $0x48] sm:$0xf]
        %v998 = vld [vmem:[#allocation2 + $0x4c] sm:$0xf]
        %v999 = vld [vmem:[#allocation2 + $0x50] sm:$0x1]
        %v1000 = vld [vmem:[#allocation2 + $0x54] sm:$0xf]
        %v1001 = vld [vmem:[#allocation2 + $0x58] sm:$0xf]
        %v1002 = vld [vmem:[#allocation2 + $0x5c] sm:$0x1]
        %s1003 = scalar_lea.vmem [#allocation2], 12
        %v1004 = vld [vmem:[%s1003] sm:$0xf]
        %v1005 = vld [vmem:[%s1003 + $0x4] sm:$0xf]
        %v1006 = vld [vmem:[%s1003 + $0x8] sm:$0x1]
        %v1007 = vld [vmem:[%s1003 + $0xc] sm:$0xf]
        %v1008 = vld [vmem:[%s1003 + $0x10] sm:$0xf]
        %v1009 = vld [vmem:[%s1003 + $0x14] sm:$0x1]
        %v1010 = vld [vmem:[%s1003 + $0x18] sm:$0xf]
        %v1011 = vld [vmem:[%s1003 + $0x1c] sm:$0xf]
        %v1012 = vld [vmem:[%s1003 + $0x20] sm:$0x1]
        %v1013 = vld [vmem:[%s1003 + $0x24] sm:$0xf]
        %v1014 = vld [vmem:[%s1003 + $0x28] sm:$0xf]
        %v1015 = vld [vmem:[%s1003 + $0x2c] sm:$0x1]
        %v1016 = vld [vmem:[%s1003 + $0x30] sm:$0xf]
        %v1017 = vld [vmem:[%s1003 + $0x34] sm:$0xf]
        %v1018 = vld [vmem:[%s1003 + $0x38] sm:$0x1]
        %v1019 = vld [vmem:[%s1003 + $0x3c] sm:$0xf]
        %v1020 = vld [vmem:[%s1003 + $0x40] sm:$0xf]
        %v1021 = vld [vmem:[%s1003 + $0x44] sm:$0x1]
        %v1022 = vld [vmem:[%s1003 + $0x48] sm:$0xf]
        %v1023 = vld [vmem:[%s1003 + $0x4c] sm:$0xf]
        %v1024 = vld [vmem:[%s1003 + $0x50] sm:$0x1]
        %v1025 = vld [vmem:[%s1003 + $0x54] sm:$0xf]
        %v1026 = vld [vmem:[%s1003 + $0x58] sm:$0xf]
        %v1027 = vld [vmem:[%s1003 + $0x5c] sm:$0x1]
        %s1028 = scalar_lea.vmem [#allocation2], 24
        %v1029 = vld [vmem:[%s1028] sm:$0xf]
        %v1030 = vld [vmem:[%s1028 + $0x4] sm:$0xf]
        %v1031 = vld [vmem:[%s1028 + $0x8] sm:$0x1]
        %v1032 = vld [vmem:[%s1028 + $0xc] sm:$0xf]
        %v1033 = vld [vmem:[%s1028 + $0x10] sm:$0xf]
        %v1034 = vld [vmem:[%s1028 + $0x14] sm:$0x1]
        %v1035 = vld [vmem:[%s1028 + $0x18] sm:$0xf]
        %v1036 = vld [vmem:[%s1028 + $0x1c] sm:$0xf]
        %v1037 = vld [vmem:[%s1028 + $0x20] sm:$0x1]
        %v1038 = vld [vmem:[%s1028 + $0x24] sm:$0xf]
        %v1039 = vld [vmem:[%s1028 + $0x28] sm:$0xf]
        %v1040 = vld [vmem:[%s1028 + $0x2c] sm:$0x1]
        %v1041 = vld [vmem:[%s1028 + $0x30] sm:$0xf]
        %v1042 = vld [vmem:[%s1028 + $0x34] sm:$0xf]
        %v1043 = vld [vmem:[%s1028 + $0x38] sm:$0x1]
        %v1044 = vld [vmem:[%s1028 + $0x3c] sm:$0xf]
        %v1045 = vld [vmem:[%s1028 + $0x40] sm:$0xf]
        %v1046 = vld [vmem:[%s1028 + $0x44] sm:$0x1]
        %v1047 = vld [vmem:[%s1028 + $0x48] sm:$0xf]
        %v1048 = vld [vmem:[%s1028 + $0x4c] sm:$0xf]
        %v1049 = vld [vmem:[%s1028 + $0x50] sm:$0x1]
        %v1050 = vld [vmem:[%s1028 + $0x54] sm:$0xf]
        %v1051 = vld [vmem:[%s1028 + $0x58] sm:$0xf]
        %v1052 = vld [vmem:[%s1028 + $0x5c] sm:$0x1]
        %v1077 = vunpack.c.l.b16 %v979
        %v1078 = vunpack.c.l.b16 %v980
        %v1079 = vunpack.c.l.b16 %v981
        %v1080 = vunpack.c.l.b16 %v982
        %v1081 = vunpack.c.l.b16 %v983
        %v1082 = vunpack.c.l.b16 %v984
        %v1083 = vunpack.c.l.b16 %v985
        %v1084 = vunpack.c.l.b16 %v986
        %v1085 = vunpack.c.l.b16 %v987
        %v1086 = vunpack.c.l.b16 %v988
        %v1087 = vunpack.c.l.b16 %v989
        %v1088 = vunpack.c.l.b16 %v990
        %v1089 = vunpack.c.l.b16 %v991
        %v1090 = vunpack.c.l.b16 %v992
        %v1091 = vunpack.c.l.b16 %v993
        %v1092 = vunpack.c.l.b16 %v994
        %v1093 = vunpack.c.l.b16 %v995
        %v1094 = vunpack.c.l.b16 %v996
        %v1095 = vunpack.c.l.b16 %v997
        %v1096 = vunpack.c.l.b16 %v998
        %v1097 = vunpack.c.l.b16 %v999
        %v1098 = vunpack.c.l.b16 %v1000
        %v1099 = vunpack.c.l.b16 %v1001
        %v1100 = vunpack.c.l.b16 %v1002
        %v1101 = vpack.c.b16 %v1078, %v1077
        %v1102 = vpack.c.b16 %v1079, %v1079
        %v1103 = vpack.c.b16 %v1081, %v1080
        %v1104 = vpack.c.b16 %v1082, %v1082
        %v1105 = vpack.c.b16 %v1084, %v1083
        %v1106 = vpack.c.b16 %v1085, %v1085
        %v1107 = vpack.c.b16 %v1087, %v1086
        %v1108 = vpack.c.b16 %v1088, %v1088
        %v1109 = vpack.c.b16 %v1090, %v1089
        %v1110 = vpack.c.b16 %v1091, %v1091
        %v1111 = vpack.c.b16 %v1093, %v1092
        %v1112 = vpack.c.b16 %v1094, %v1094
        %v1113 = vpack.c.b16 %v1096, %v1095
        %v1114 = vpack.c.b16 %v1097, %v1097
        %v1115 = vpack.c.b16 %v1099, %v1098
        %v1116 = vpack.c.b16 %v1100, %v1100
        %v1141 = vunpack.c.l.b16 %v1004
        %v1142 = vunpack.c.l.b16 %v1005
        %v1143 = vunpack.c.l.b16 %v1006
        %v1144 = vunpack.c.l.b16 %v1007
        %v1145 = vunpack.c.l.b16 %v1008
        %v1146 = vunpack.c.l.b16 %v1009
        %v1147 = vunpack.c.l.b16 %v1010
        %v1148 = vunpack.c.l.b16 %v1011
        %v1149 = vunpack.c.l.b16 %v1012
        %v1150 = vunpack.c.l.b16 %v1013
        %v1151 = vunpack.c.l.b16 %v1014
        %v1152 = vunpack.c.l.b16 %v1015
        %v1153 = vunpack.c.l.b16 %v1016
        %v1154 = vunpack.c.l.b16 %v1017
        %v1155 = vunpack.c.l.b16 %v1018
        %v1156 = vunpack.c.l.b16 %v1019
        %v1157 = vunpack.c.l.b16 %v1020
        %v1158 = vunpack.c.l.b16 %v1021
        %v1159 = vunpack.c.l.b16 %v1022
        %v1160 = vunpack.c.l.b16 %v1023
        %v1161 = vunpack.c.l.b16 %v1024
        %v1162 = vunpack.c.l.b16 %v1025
        %v1163 = vunpack.c.l.b16 %v1026
        %v1164 = vunpack.c.l.b16 %v1027
        %v1165 = vpack.c.b16 %v1142, %v1141
        %v1166 = vpack.c.b16 %v1143, %v1143
        %v1167 = vpack.c.b16 %v1145, %v1144
        %v1168 = vpack.c.b16 %v1146, %v1146
        %v1169 = vpack.c.b16 %v1148, %v1147
        %v1170 = vpack.c.b16 %v1149, %v1149
        %v1171 = vpack.c.b16 %v1151, %v1150
        %v1172 = vpack.c.b16 %v1152, %v1152
        %v1173 = vpack.c.b16 %v1154, %v1153
        %v1174 = vpack.c.b16 %v1155, %v1155
        %v1175 = vpack.c.b16 %v1157, %v1156
        %v1176 = vpack.c.b16 %v1158, %v1158
        %v1177 = vpack.c.b16 %v1160, %v1159
        %v1178 = vpack.c.b16 %v1161, %v1161
        %v1179 = vpack.c.b16 %v1163, %v1162
        %v1180 = vpack.c.b16 %v1164, %v1164
        %1181 = vrot.lane.b32.xlu0 %v1165, 4
        %v1182 = vpop.permute.xlu0 %1181
        %1183 = vrot.lane.b32.xlu0 %v1166, 4
        %v1184 = vpop.permute.xlu0 %1183
        %1185 = vrot.lane.b32.xlu0 %v1167, 4
        %v1186 = vpop.permute.xlu0 %1185
        %1187 = vrot.lane.b32.xlu0 %v1168, 4
        %v1188 = vpop.permute.xlu0 %1187
        %1189 = vrot.lane.b32.xlu0 %v1169, 4
        %v1190 = vpop.permute.xlu0 %1189
        %1191 = vrot.lane.b32.xlu0 %v1170, 4
        %v1192 = vpop.permute.xlu0 %1191
        %1193 = vrot.lane.b32.xlu0 %v1171, 4
        %v1194 = vpop.permute.xlu0 %1193
        %1195 = vrot.lane.b32.xlu0 %v1172, 4
        %v1196 = vpop.permute.xlu0 %1195
        %1197 = vrot.lane.b32.xlu0 %v1173, 4
        %v1198 = vpop.permute.xlu0 %1197
        %1199 = vrot.lane.b32.xlu0 %v1174, 4
        %v1200 = vpop.permute.xlu0 %1199
        %1201 = vrot.lane.b32.xlu0 %v1175, 4
        %v1202 = vpop.permute.xlu0 %1201
        %1203 = vrot.lane.b32.xlu0 %v1176, 4
        %v1204 = vpop.permute.xlu0 %1203
        %1205 = vrot.lane.b32.xlu0 %v1177, 4
        %v1206 = vpop.permute.xlu0 %1205
        %1207 = vrot.lane.b32.xlu0 %v1178, 4
        %v1208 = vpop.permute.xlu0 %1207
        %1209 = vrot.lane.b32.xlu0 %v1179, 4
        %v1210 = vpop.permute.xlu0 %1209
        %1211 = vrot.lane.b32.xlu0 %v1180, 4
        %v1212 = vpop.permute.xlu0 %1211
        %v1237 = vunpack.c.l.b16 %v1029
        %v1238 = vunpack.c.l.b16 %v1030
        %v1239 = vunpack.c.l.b16 %v1031
        %v1240 = vunpack.c.l.b16 %v1032
        %v1241 = vunpack.c.l.b16 %v1033
        %v1242 = vunpack.c.l.b16 %v1034
        %v1243 = vunpack.c.l.b16 %v1035
        %v1244 = vunpack.c.l.b16 %v1036
        %v1245 = vunpack.c.l.b16 %v1037
        %v1246 = vunpack.c.l.b16 %v1038
        %v1247 = vunpack.c.l.b16 %v1039
        %v1248 = vunpack.c.l.b16 %v1040
        %v1249 = vunpack.c.l.b16 %v1041
        %v1250 = vunpack.c.l.b16 %v1042
        %v1251 = vunpack.c.l.b16 %v1043
        %v1252 = vunpack.c.l.b16 %v1044
        %v1253 = vunpack.c.l.b16 %v1045
        %v1254 = vunpack.c.l.b16 %v1046
        %v1255 = vunpack.c.l.b16 %v1047
        %v1256 = vunpack.c.l.b16 %v1048
        %v1257 = vunpack.c.l.b16 %v1049
        %v1258 = vunpack.c.l.b16 %v1050
        %v1259 = vunpack.c.l.b16 %v1051
        %v1260 = vunpack.c.l.b16 %v1052
        %v1261 = vpack.c.b16 %v1238, %v1237
        %v1262 = vpack.c.b16 %v1239, %v1239
        %v1263 = vpack.c.b16 %v1241, %v1240
        %v1264 = vpack.c.b16 %v1242, %v1242
        %v1265 = vpack.c.b16 %v1244, %v1243
        %v1266 = vpack.c.b16 %v1245, %v1245
        %v1267 = vpack.c.b16 %v1247, %v1246
        %v1268 = vpack.c.b16 %v1248, %v1248
        %v1269 = vpack.c.b16 %v1250, %v1249
        %v1270 = vpack.c.b16 %v1251, %v1251
        %v1271 = vpack.c.b16 %v1253, %v1252
        %v1272 = vpack.c.b16 %v1254, %v1254
        %v1273 = vpack.c.b16 %v1256, %v1255
        %v1274 = vpack.c.b16 %v1257, %v1257
        %v1275 = vpack.c.b16 %v1259, %v1258
        %v1276 = vpack.c.b16 %v1260, %v1260
        %1277 = vrot.lane.b32.xlu0 %v1261, 8
        %v1278 = vpop.permute.xlu0 %1277
        %1279 = vrot.lane.b32.xlu0 %v1262, 8
        %v1280 = vpop.permute.xlu0 %1279
        %1281 = vrot.lane.b32.xlu0 %v1263, 8
        %v1282 = vpop.permute.xlu0 %1281
        %1283 = vrot.lane.b32.xlu0 %v1264, 8
        %v1284 = vpop.permute.xlu0 %1283
        %1285 = vrot.lane.b32.xlu0 %v1265, 8
        %v1286 = vpop.permute.xlu0 %1285
        %1287 = vrot.lane.b32.xlu0 %v1266, 8
        %v1288 = vpop.permute.xlu0 %1287
        %1289 = vrot.lane.b32.xlu0 %v1267, 8
        %v1290 = vpop.permute.xlu0 %1289
        %1291 = vrot.lane.b32.xlu0 %v1268, 8
        %v1292 = vpop.permute.xlu0 %1291
        %1293 = vrot.lane.b32.xlu0 %v1269, 8
        %v1294 = vpop.permute.xlu0 %1293
        %1295 = vrot.lane.b32.xlu0 %v1270, 8
        %v1296 = vpop.permute.xlu0 %1295
        %1297 = vrot.lane.b32.xlu0 %v1271, 8
        %v1298 = vpop.permute.xlu0 %1297
        %1299 = vrot.lane.b32.xlu0 %v1272, 8
        %v1300 = vpop.permute.xlu0 %1299
        %1301 = vrot.lane.b32.xlu0 %v1273, 8
        %v1302 = vpop.permute.xlu0 %1301
        %1303 = vrot.lane.b32.xlu0 %v1274, 8
        %v1304 = vpop.permute.xlu0 %1303
        %1305 = vrot.lane.b32.xlu0 %v1275, 8
        %v1306 = vpop.permute.xlu0 %1305
        %1307 = vrot.lane.b32.xlu0 %v1276, 8
        %v1308 = vpop.permute.xlu0 %1307
        %vm1309 = vcmask 31744
        %v1312 = vsel %vm1309, %v1101, %v1182
        %v1315 = vsel %vm1309, %v1102, %v1184
        %v1318 = vsel %vm1309, %v1103, %v1186
        %v1321 = vsel %vm1309, %v1104, %v1188
        %v1324 = vsel %vm1309, %v1105, %v1190
        %v1327 = vsel %vm1309, %v1106, %v1192
        %v1330 = vsel %vm1309, %v1107, %v1194
        %v1333 = vsel %vm1309, %v1108, %v1196
        %v1336 = vsel %vm1309, %v1109, %v1198
        %v1339 = vsel %vm1309, %v1110, %v1200
        %v1342 = vsel %vm1309, %v1111, %v1202
        %v1345 = vsel %vm1309, %v1112, %v1204
        %v1348 = vsel %vm1309, %v1113, %v1206
        %v1351 = vsel %vm1309, %v1114, %v1208
        %v1354 = vsel %vm1309, %v1115, %v1210
        %v1357 = vsel %vm1309, %v1116, %v1212
        %vm1358 = vcmask 64512
        %v1360 = vsel %vm1358, %v1312, %v1278
        %v1362 = vsel %vm1358, %v1315, %v1280
        %v1364 = vsel %vm1358, %v1318, %v1282
        %v1366 = vsel %vm1358, %v1321, %v1284
        %v1368 = vsel %vm1358, %v1324, %v1286
        %v1370 = vsel %vm1358, %v1327, %v1288
        %v1372 = vsel %vm1358, %v1330, %v1290
        %v1374 = vsel %vm1358, %v1333, %v1292
        %v1376 = vsel %vm1358, %v1336, %v1294
        %v1378 = vsel %vm1358, %v1339, %v1296
        %v1380 = vsel %vm1358, %v1342, %v1298
        %v1382 = vsel %vm1358, %v1345, %v1300
        %v1384 = vsel %vm1358, %v1348, %v1302
        %v1386 = vsel %vm1358, %v1351, %v1304
        %v1388 = vsel %vm1358, %v1354, %v1306
        %v1390 = vsel %vm1358, %v1357, %v1308
        %v1407 = vcombine.high %v1360, %v1360
        %v1409 = vunpack.c.l.s4 1966171168
        %v1410 = vunpack.c.0.s8 %v1409
        %v1411 = vlaneseq
        %v1412 = vshrl.u32 %v1411, 7
        %v1413 = vsub.s32 %v1410, %v1412
        %v1414 = vrot.slane %v1360, %v1413
        %v1416 = vunpack.c.l.s4 1966171168
        %v1417 = vunpack.c.0.s8 %v1416
        %v1418 = vlaneseq
        %v1419 = vshrl.u32 %v1418, 7
        %v1420 = vsub.s32 %v1417, %v1419
        %v1421 = vrot.slane %v1407, %v1420
        %v1422 = vcombine.high %v1414, %v1414
        %v1423 = vcombine.high %v1421, %v1421
        %v1425 = vunpack.c.l.s4 1966171168
        %v1426 = vunpack.c.0.s8 %v1425
        %v1427 = vlaneseq
        %v1428 = vshrl.u32 %v1427, 7
        %v1429 = vsub.s32 %v1426, %v1428
        %v1430 = vrot.slane %v1414, %v1429
        %v1432 = vunpack.c.l.s4 1966171168
        %v1433 = vunpack.c.0.s8 %v1432
        %v1434 = vlaneseq
        %v1435 = vshrl.u32 %v1434, 7
        %v1436 = vsub.s32 %v1433, %v1435
        %v1437 = vrot.slane %v1421, %v1436
        %v1439 = vunpack.c.l.s4 1966171168
        %v1440 = vunpack.c.0.s8 %v1439
        %v1441 = vlaneseq
        %v1442 = vshrl.u32 %v1441, 7
        %v1443 = vsub.s32 %v1440, %v1442
        %v1444 = vrot.slane %v1422, %v1443
        %v1446 = vunpack.c.l.s4 1966171168
        %v1447 = vunpack.c.0.s8 %v1446
        %v1448 = vlaneseq
        %v1449 = vshrl.u32 %v1448, 7
        %v1450 = vsub.s32 %v1447, %v1449
        %v1451 = vrot.slane %v1423, %v1450
        %v1452 = vcombine.high %v1430, %v1430
        %v1453 = vcombine.high %v1437, %v1437
        %v1454 = vcombine.high %v1444, %v1444
        %v1455 = vcombine.high %v1451, %v1451
        %v1457 = vunpack.c.l.s4 1966171168
        %v1458 = vunpack.c.0.s8 %v1457
        %v1459 = vlaneseq
        %v1460 = vshrl.u32 %v1459, 7
        %v1461 = vsub.s32 %v1458, %v1460
        %v1462 = vrot.slane %v1362, %v1461
        %v1464 = vunpack.c.l.s4 1966171168
        %v1465 = vunpack.c.0.s8 %v1464
        %v1466 = vlaneseq
        %v1467 = vshrl.u32 %v1466, 7
        %v1468 = vsub.s32 %v1465, %v1467
        %v1469 = vrot.slane %v1462, %v1468
        %v1470 = vcombine.high %v1364, %v1364
        %v1472 = vunpack.c.l.s4 1966171168
        %v1473 = vunpack.c.0.s8 %v1472
        %v1474 = vlaneseq
        %v1475 = vshrl.u32 %v1474, 7
        %v1476 = vsub.s32 %v1473, %v1475
        %v1477 = vrot.slane %v1364, %v1476
        %v1479 = vunpack.c.l.s4 1966171168
        %v1480 = vunpack.c.0.s8 %v1479
        %v1481 = vlaneseq
        %v1482 = vshrl.u32 %v1481, 7
        %v1483 = vsub.s32 %v1480, %v1482
        %v1484 = vrot.slane %v1470, %v1483
        %v1485 = vcombine.high %v1477, %v1477
        %v1486 = vcombine.high %v1484, %v1484
        %v1488 = vunpack.c.l.s4 1966171168
        %v1489 = vunpack.c.0.s8 %v1488
        %v1490 = vlaneseq
        %v1491 = vshrl.u32 %v1490, 7
        %v1492 = vsub.s32 %v1489, %v1491
        %v1493 = vrot.slane %v1477, %v1492
        %v1495 = vunpack.c.l.s4 1966171168
        %v1496 = vunpack.c.0.s8 %v1495
        %v1497 = vlaneseq
        %v1498 = vshrl.u32 %v1497, 7
        %v1499 = vsub.s32 %v1496, %v1498
        %v1500 = vrot.slane %v1484, %v1499
        %v1502 = vunpack.c.l.s4 1966171168
        %v1503 = vunpack.c.0.s8 %v1502
        %v1504 = vlaneseq
        %v1505 = vshrl.u32 %v1504, 7
        %v1506 = vsub.s32 %v1503, %v1505
        %v1507 = vrot.slane %v1485, %v1506
        %v1509 = vunpack.c.l.s4 1966171168
        %v1510 = vunpack.c.0.s8 %v1509
        %v1511 = vlaneseq
        %v1512 = vshrl.u32 %v1511, 7
        %v1513 = vsub.s32 %v1510, %v1512
        %v1514 = vrot.slane %v1486, %v1513
        %v1515 = vcombine.high %v1493, %v1493
        %v1516 = vcombine.high %v1500, %v1500
        %v1517 = vcombine.high %v1507, %v1507
        %v1518 = vcombine.high %v1514, %v1514
        %v1520 = vunpack.c.l.s4 1966171168
        %v1521 = vunpack.c.0.s8 %v1520
        %v1522 = vlaneseq
        %v1523 = vshrl.u32 %v1522, 7
        %v1524 = vsub.s32 %v1521, %v1523
        %v1525 = vrot.slane %v1366, %v1524
        %v1527 = vunpack.c.l.s4 1966171168
        %v1528 = vunpack.c.0.s8 %v1527
        %v1529 = vlaneseq
        %v1530 = vshrl.u32 %v1529, 7
        %v1531 = vsub.s32 %v1528, %v1530
        %v1532 = vrot.slane %v1525, %v1531
        %v1533 = vcombine.high %v1368, %v1368
        %v1535 = vunpack.c.l.s4 1966171168
        %v1536 = vunpack.c.0.s8 %v1535
        %v1537 = vlaneseq
        %v1538 = vshrl.u32 %v1537, 7
        %v1539 = vsub.s32 %v1536, %v1538
        %v1540 = vrot.slane %v1368, %v1539
        %v1542 = vunpack.c.l.s4 1966171168
        %v1543 = vunpack.c.0.s8 %v1542
        %v1544 = vlaneseq
        %v1545 = vshrl.u32 %v1544, 7
        %v1546 = vsub.s32 %v1543, %v1545
        %v1547 = vrot.slane %v1533, %v1546
        %v1548 = vcombine.high %v1540, %v1540
        %v1549 = vcombine.high %v1547, %v1547
        %v1551 = vunpack.c.l.s4 1966171168
        %v1552 = vunpack.c.0.s8 %v1551
        %v1553 = vlaneseq
        %v1554 = vshrl.u32 %v1553, 7
        %v1555 = vsub.s32 %v1552, %v1554
        %v1556 = vrot.slane %v1540, %v1555
        %v1558 = vunpack.c.l.s4 1966171168
        %v1559 = vunpack.c.0.s8 %v1558
        %v1560 = vlaneseq
        %v1561 = vshrl.u32 %v1560, 7
        %v1562 = vsub.s32 %v1559, %v1561
        %v1563 = vrot.slane %v1547, %v1562
        %v1565 = vunpack.c.l.s4 1966171168
        %v1566 = vunpack.c.0.s8 %v1565
        %v1567 = vlaneseq
        %v1568 = vshrl.u32 %v1567, 7
        %v1569 = vsub.s32 %v1566, %v1568
        %v1570 = vrot.slane %v1548, %v1569
        %v1572 = vunpack.c.l.s4 1966171168
        %v1573 = vunpack.c.0.s8 %v1572
        %v1574 = vlaneseq
        %v1575 = vshrl.u32 %v1574, 7
        %v1576 = vsub.s32 %v1573, %v1575
        %v1577 = vrot.slane %v1549, %v1576
        %v1578 = vcombine.high %v1556, %v1556
        %v1579 = vcombine.high %v1563, %v1563
        %v1580 = vcombine.high %v1570, %v1570
        %v1581 = vcombine.high %v1577, %v1577
        %v1583 = vunpack.c.l.s4 1966171168
        %v1584 = vunpack.c.0.s8 %v1583
        %v1585 = vlaneseq
        %v1586 = vshrl.u32 %v1585, 7
        %v1587 = vsub.s32 %v1584, %v1586
        %v1588 = vrot.slane %v1370, %v1587
        %v1590 = vunpack.c.l.s4 1966171168
        %v1591 = vunpack.c.0.s8 %v1590
        %v1592 = vlaneseq
        %v1593 = vshrl.u32 %v1592, 7
        %v1594 = vsub.s32 %v1591, %v1593
        %v1595 = vrot.slane %v1588, %v1594
        %v1596 = vcombine.high %v1372, %v1372
        %v1598 = vunpack.c.l.s4 1966171168
        %v1599 = vunpack.c.0.s8 %v1598
        %v1600 = vlaneseq
        %v1601 = vshrl.u32 %v1600, 7
        %v1602 = vsub.s32 %v1599, %v1601
        %v1603 = vrot.slane %v1372, %v1602
        %v1605 = vunpack.c.l.s4 1966171168
        %v1606 = vunpack.c.0.s8 %v1605
        %v1607 = vlaneseq
        %v1608 = vshrl.u32 %v1607, 7
        %v1609 = vsub.s32 %v1606, %v1608
        %v1610 = vrot.slane %v1596, %v1609
        %v1611 = vcombine.high %v1603, %v1603
        %v1612 = vcombine.high %v1610, %v1610
        %v1614 = vunpack.c.l.s4 1966171168
        %v1615 = vunpack.c.0.s8 %v1614
        %v1616 = vlaneseq
        %v1617 = vshrl.u32 %v1616, 7
        %v1618 = vsub.s32 %v1615, %v1617
        %v1619 = vrot.slane %v1603, %v1618
        %v1621 = vunpack.c.l.s4 1966171168
        %v1622 = vunpack.c.0.s8 %v1621
        %v1623 = vlaneseq
        %v1624 = vshrl.u32 %v1623, 7
        %v1625 = vsub.s32 %v1622, %v1624
        %v1626 = vrot.slane %v1610, %v1625
        %v1628 = vunpack.c.l.s4 1966171168
        %v1629 = vunpack.c.0.s8 %v1628
        %v1630 = vlaneseq
        %v1631 = vshrl.u32 %v1630, 7
        %v1632 = vsub.s32 %v1629, %v1631
        %v1633 = vrot.slane %v1611, %v1632
        %v1635 = vunpack.c.l.s4 1966171168
        %v1636 = vunpack.c.0.s8 %v1635
        %v1637 = vlaneseq
        %v1638 = vshrl.u32 %v1637, 7
        %v1639 = vsub.s32 %v1636, %v1638
        %v1640 = vrot.slane %v1612, %v1639
        %v1641 = vcombine.high %v1619, %v1619
        %v1642 = vcombine.high %v1626, %v1626
        %v1643 = vcombine.high %v1633, %v1633
        %v1644 = vcombine.high %v1640, %v1640
        %v1646 = vunpack.c.l.s4 1966171168
        %v1647 = vunpack.c.0.s8 %v1646
        %v1648 = vlaneseq
        %v1649 = vshrl.u32 %v1648, 7
        %v1650 = vsub.s32 %v1647, %v1649
        %v1651 = vrot.slane %v1374, %v1650
        %v1653 = vunpack.c.l.s4 1966171168
        %v1654 = vunpack.c.0.s8 %v1653
        %v1655 = vlaneseq
        %v1656 = vshrl.u32 %v1655, 7
        %v1657 = vsub.s32 %v1654, %v1656
        %v1658 = vrot.slane %v1651, %v1657
        %v1659 = vcombine.high %v1376, %v1376
        %v1661 = vunpack.c.l.s4 1966171168
        %v1662 = vunpack.c.0.s8 %v1661
        %v1663 = vlaneseq
        %v1664 = vshrl.u32 %v1663, 7
        %v1665 = vsub.s32 %v1662, %v1664
        %v1666 = vrot.slane %v1376, %v1665
        %v1668 = vunpack.c.l.s4 1966171168
        %v1669 = vunpack.c.0.s8 %v1668
        %v1670 = vlaneseq
        %v1671 = vshrl.u32 %v1670, 7
        %v1672 = vsub.s32 %v1669, %v1671
        %v1673 = vrot.slane %v1659, %v1672
        %v1674 = vcombine.high %v1666, %v1666
        %v1675 = vcombine.high %v1673, %v1673
        %v1677 = vunpack.c.l.s4 1966171168
        %v1678 = vunpack.c.0.s8 %v1677
        %v1679 = vlaneseq
        %v1680 = vshrl.u32 %v1679, 7
        %v1681 = vsub.s32 %v1678, %v1680
        %v1682 = vrot.slane %v1666, %v1681
        %v1684 = vunpack.c.l.s4 1966171168
        %v1685 = vunpack.c.0.s8 %v1684
        %v1686 = vlaneseq
        %v1687 = vshrl.u32 %v1686, 7
        %v1688 = vsub.s32 %v1685, %v1687
        %v1689 = vrot.slane %v1673, %v1688
        %v1691 = vunpack.c.l.s4 1966171168
        %v1692 = vunpack.c.0.s8 %v1691
        %v1693 = vlaneseq
        %v1694 = vshrl.u32 %v1693, 7
        %v1695 = vsub.s32 %v1692, %v1694
        %v1696 = vrot.slane %v1674, %v1695
        %v1698 = vunpack.c.l.s4 1966171168
        %v1699 = vunpack.c.0.s8 %v1698
        %v1700 = vlaneseq
        %v1701 = vshrl.u32 %v1700, 7
        %v1702 = vsub.s32 %v1699, %v1701
        %v1703 = vrot.slane %v1675, %v1702
        %v1704 = vcombine.high %v1682, %v1682
        %v1705 = vcombine.high %v1689, %v1689
        %v1706 = vcombine.high %v1696, %v1696
        %v1707 = vcombine.high %v1703, %v1703
        %v1709 = vunpack.c.l.s4 1966171168
        %v1710 = vunpack.c.0.s8 %v1709
        %v1711 = vlaneseq
        %v1712 = vshrl.u32 %v1711, 7
        %v1713 = vsub.s32 %v1710, %v1712
        %v1714 = vrot.slane %v1378, %v1713
        %v1716 = vunpack.c.l.s4 1966171168
        %v1717 = vunpack.c.0.s8 %v1716
        %v1718 = vlaneseq
        %v1719 = vshrl.u32 %v1718, 7
        %v1720 = vsub.s32 %v1717, %v1719
        %v1721 = vrot.slane %v1714, %v1720
        %v1722 = vcombine.high %v1380, %v1380
        %v1724 = vunpack.c.l.s4 1966171168
        %v1725 = vunpack.c.0.s8 %v1724
        %v1726 = vlaneseq
        %v1727 = vshrl.u32 %v1726, 7
        %v1728 = vsub.s32 %v1725, %v1727
        %v1729 = vrot.slane %v1380, %v1728
        %v1731 = vunpack.c.l.s4 1966171168
        %v1732 = vunpack.c.0.s8 %v1731
        %v1733 = vlaneseq
        %v1734 = vshrl.u32 %v1733, 7
        %v1735 = vsub.s32 %v1732, %v1734
        %v1736 = vrot.slane %v1722, %v1735
        %v1737 = vcombine.high %v1729, %v1729
        %v1738 = vcombine.high %v1736, %v1736
        %v1740 = vunpack.c.l.s4 1966171168
        %v1741 = vunpack.c.0.s8 %v1740
        %v1742 = vlaneseq
        %v1743 = vshrl.u32 %v1742, 7
        %v1744 = vsub.s32 %v1741, %v1743
        %v1745 = vrot.slane %v1729, %v1744
        %v1747 = vunpack.c.l.s4 1966171168
        %v1748 = vunpack.c.0.s8 %v1747
        %v1749 = vlaneseq
        %v1750 = vshrl.u32 %v1749, 7
        %v1751 = vsub.s32 %v1748, %v1750
        %v1752 = vrot.slane %v1736, %v1751
        %v1754 = vunpack.c.l.s4 1966171168
        %v1755 = vunpack.c.0.s8 %v1754
        %v1756 = vlaneseq
        %v1757 = vshrl.u32 %v1756, 7
        %v1758 = vsub.s32 %v1755, %v1757
        %v1759 = vrot.slane %v1737, %v1758
        %v1761 = vunpack.c.l.s4 1966171168
        %v1762 = vunpack.c.0.s8 %v1761
        %v1763 = vlaneseq
        %v1764 = vshrl.u32 %v1763, 7
        %v1765 = vsub.s32 %v1762, %v1764
        %v1766 = vrot.slane %v1738, %v1765
        %v1767 = vcombine.high %v1745, %v1745
        %v1768 = vcombine.high %v1752, %v1752
        %v1769 = vcombine.high %v1759, %v1759
        %v1770 = vcombine.high %v1766, %v1766
        %v1772 = vunpack.c.l.s4 1966171168
        %v1773 = vunpack.c.0.s8 %v1772
        %v1774 = vlaneseq
        %v1775 = vshrl.u32 %v1774, 7
        %v1776 = vsub.s32 %v1773, %v1775
        %v1777 = vrot.slane %v1382, %v1776
        %v1779 = vunpack.c.l.s4 1966171168
        %v1780 = vunpack.c.0.s8 %v1779
        %v1781 = vlaneseq
        %v1782 = vshrl.u32 %v1781, 7
        %v1783 = vsub.s32 %v1780, %v1782
        %v1784 = vrot.slane %v1777, %v1783
        %v1785 = vcombine.high %v1384, %v1384
        %v1787 = vunpack.c.l.s4 1966171168
        %v1788 = vunpack.c.0.s8 %v1787
        %v1789 = vlaneseq
        %v1790 = vshrl.u32 %v1789, 7
        %v1791 = vsub.s32 %v1788, %v1790
        %v1792 = vrot.slane %v1384, %v1791
        %v1794 = vunpack.c.l.s4 1966171168
        %v1795 = vunpack.c.0.s8 %v1794
        %v1796 = vlaneseq
        %v1797 = vshrl.u32 %v1796, 7
        %v1798 = vsub.s32 %v1795, %v1797
        %v1799 = vrot.slane %v1785, %v1798
        %v1800 = vcombine.high %v1792, %v1792
        %v1801 = vcombine.high %v1799, %v1799
        %v1803 = vunpack.c.l.s4 1966171168
        %v1804 = vunpack.c.0.s8 %v1803
        %v1805 = vlaneseq
        %v1806 = vshrl.u32 %v1805, 7
        %v1807 = vsub.s32 %v1804, %v1806
        %v1808 = vrot.slane %v1792, %v1807
        %v1810 = vunpack.c.l.s4 1966171168
        %v1811 = vunpack.c.0.s8 %v1810
        %v1812 = vlaneseq
        %v1813 = vshrl.u32 %v1812, 7
        %v1814 = vsub.s32 %v1811, %v1813
        %v1815 = vrot.slane %v1799, %v1814
        %v1817 = vunpack.c.l.s4 1966171168
        %v1818 = vunpack.c.0.s8 %v1817
        %v1819 = vlaneseq
        %v1820 = vshrl.u32 %v1819, 7
        %v1821 = vsub.s32 %v1818, %v1820
        %v1822 = vrot.slane %v1800, %v1821
        %v1824 = vunpack.c.l.s4 1966171168
        %v1825 = vunpack.c.0.s8 %v1824
        %v1826 = vlaneseq
        %v1827 = vshrl.u32 %v1826, 7
        %v1828 = vsub.s32 %v1825, %v1827
        %v1829 = vrot.slane %v1801, %v1828
        %v1830 = vcombine.high %v1808, %v1808
        %v1831 = vcombine.high %v1815, %v1815
        %v1832 = vcombine.high %v1822, %v1822
        %v1833 = vcombine.high %v1829, %v1829
        %v1835 = vunpack.c.l.s4 1966171168
        %v1836 = vunpack.c.0.s8 %v1835
        %v1837 = vlaneseq
        %v1838 = vshrl.u32 %v1837, 7
        %v1839 = vsub.s32 %v1836, %v1838
        %v1840 = vrot.slane %v1386, %v1839
        %v1842 = vunpack.c.l.s4 1966171168
        %v1843 = vunpack.c.0.s8 %v1842
        %v1844 = vlaneseq
        %v1845 = vshrl.u32 %v1844, 7
        %v1846 = vsub.s32 %v1843, %v1845
        %v1847 = vrot.slane %v1840, %v1846
        %v1848 = vcombine.high %v1388, %v1388
        %v1850 = vunpack.c.l.s4 1966171168
        %v1851 = vunpack.c.0.s8 %v1850
        %v1852 = vlaneseq
        %v1853 = vshrl.u32 %v1852, 7
        %v1854 = vsub.s32 %v1851, %v1853
        %v1855 = vrot.slane %v1388, %v1854
        %v1857 = vunpack.c.l.s4 1966171168
        %v1858 = vunpack.c.0.s8 %v1857
        %v1859 = vlaneseq
        %v1860 = vshrl.u32 %v1859, 7
        %v1861 = vsub.s32 %v1858, %v1860
        %v1862 = vrot.slane %v1848, %v1861
        %v1863 = vcombine.high %v1855, %v1855
        %v1864 = vcombine.high %v1862, %v1862
        %v1866 = vunpack.c.l.s4 1966171168
        %v1867 = vunpack.c.0.s8 %v1866
        %v1868 = vlaneseq
        %v1869 = vshrl.u32 %v1868, 7
        %v1870 = vsub.s32 %v1867, %v1869
        %v1871 = vrot.slane %v1855, %v1870
        %v1873 = vunpack.c.l.s4 1966171168
        %v1874 = vunpack.c.0.s8 %v1873
        %v1875 = vlaneseq
        %v1876 = vshrl.u32 %v1875, 7
        %v1877 = vsub.s32 %v1874, %v1876
        %v1878 = vrot.slane %v1862, %v1877
        %v1880 = vunpack.c.l.s4 1966171168
        %v1881 = vunpack.c.0.s8 %v1880
        %v1882 = vlaneseq
        %v1883 = vshrl.u32 %v1882, 7
        %v1884 = vsub.s32 %v1881, %v1883
        %v1885 = vrot.slane %v1863, %v1884
        %v1887 = vunpack.c.l.s4 1966171168
        %v1888 = vunpack.c.0.s8 %v1887
        %v1889 = vlaneseq
        %v1890 = vshrl.u32 %v1889, 7
        %v1891 = vsub.s32 %v1888, %v1890
        %v1892 = vrot.slane %v1864, %v1891
        %v1893 = vcombine.high %v1871, %v1871
        %v1894 = vcombine.high %v1878, %v1878
        %v1895 = vcombine.high %v1885, %v1885
        %v1896 = vcombine.high %v1892, %v1892
        %v1898 = vunpack.c.l.s4 1966171168
        %v1899 = vunpack.c.0.s8 %v1898
        %v1900 = vlaneseq
        %v1901 = vshrl.u32 %v1900, 7
        %v1902 = vsub.s32 %v1899, %v1901
        %v1903 = vrot.slane %v1390, %v1902
        %v1905 = vunpack.c.l.s4 1966171168
        %v1906 = vunpack.c.0.s8 %v1905
        %v1907 = vlaneseq
        %v1908 = vshrl.u32 %v1907, 7
        %v1909 = vsub.s32 %v1906, %v1908
        %v1910 = vrot.slane %v1903, %v1909
        %v1911 = vld [vmem:[%s5] sm:$0xf]
        %v1912 = vld [vmem:[%s5 + $0x4] sm:$0x3]
        %v1913 = vcombine.low %v1430, %v1444
        %v1914 = vcombine.low %v1452, %v1454
        %v1915 = vcombine.low %v1437, %v1451
        %v1916 = vcombine.low %v1453, %v1455
        %v1918 = vunpack.c.l.s4 1966171168
        %v1919 = vunpack.c.0.s8 %v1918
        %v1920 = vlaneseq
        %v1921 = vshrl.u32 %v1920, 7
        %v1922 = vsub.s32 %v1919, %v1921
        %v1923 = vrot.slane %v1913, %v1922
        %v1925 = vunpack.c.l.s4 1966171168
        %v1926 = vunpack.c.0.s8 %v1925
        %v1927 = vlaneseq
        %v1928 = vshrl.u32 %v1927, 7
        %v1929 = vsub.s32 %v1926, %v1928
        %v1930 = vrot.slane %v1914, %v1929
        %v1932 = vunpack.c.l.s4 1966171168
        %v1933 = vunpack.c.0.s8 %v1932
        %v1934 = vlaneseq
        %v1935 = vshrl.u32 %v1934, 7
        %v1936 = vsub.s32 %v1933, %v1935
        %v1937 = vrot.slane %v1915, %v1936
        %v1939 = vunpack.c.l.s4 1966171168
        %v1940 = vunpack.c.0.s8 %v1939
        %v1941 = vlaneseq
        %v1942 = vshrl.u32 %v1941, 7
        %v1943 = vsub.s32 %v1940, %v1942
        %v1944 = vrot.slane %v1916, %v1943
        %v1945 = vcombine.low %v1923, %v1930
        %v1946 = vcombine.low %v1937, %v1944
        %v1948 = vunpack.c.l.s4 1966171168
        %v1949 = vunpack.c.0.s8 %v1948
        %v1950 = vlaneseq
        %v1951 = vshrl.u32 %v1950, 7
        %v1952 = vsub.s32 %v1949, %v1951
        %v1953 = vrot.slane %v1945, %v1952
        %v1955 = vunpack.c.l.s4 1966171168
        %v1956 = vunpack.c.0.s8 %v1955
        %v1957 = vlaneseq
        %v1958 = vshrl.u32 %v1957, 7
        %v1959 = vsub.s32 %v1956, %v1958
        %v1960 = vrot.slane %v1946, %v1959
        %v1961 = vcombine.low %v1953, %v1960
        %v1962 = vcombine.low %v1469, %v1493
        %v1963 = vcombine.low %v1507, %v1515
        %v1964 = vcombine.low %v1517, %v1500
        %v1965 = vcombine.low %v1514, %v1516
        %v1967 = vunpack.c.l.s4 1966171168
        %v1968 = vunpack.c.0.s8 %v1967
        %v1969 = vlaneseq
        %v1970 = vshrl.u32 %v1969, 7
        %v1971 = vsub.s32 %v1968, %v1970
        %v1972 = vrot.slane %v1962, %v1971
        %v1974 = vunpack.c.l.s4 1966171168
        %v1975 = vunpack.c.0.s8 %v1974
        %v1976 = vlaneseq
        %v1977 = vshrl.u32 %v1976, 7
        %v1978 = vsub.s32 %v1975, %v1977
        %v1979 = vrot.slane %v1963, %v1978
        %v1981 = vunpack.c.l.s4 1966171168
        %v1982 = vunpack.c.0.s8 %v1981
        %v1983 = vlaneseq
        %v1984 = vshrl.u32 %v1983, 7
        %v1985 = vsub.s32 %v1982, %v1984
        %v1986 = vrot.slane %v1964, %v1985
        %v1988 = vunpack.c.l.s4 1966171168
        %v1989 = vunpack.c.0.s8 %v1988
        %v1990 = vlaneseq
        %v1991 = vshrl.u32 %v1990, 7
        %v1992 = vsub.s32 %v1989, %v1991
        %v1993 = vrot.slane %v1965, %v1992
        %v1994 = vcombine.low %v1972, %v1979
        %v1995 = vcombine.low %v1986, %v1993
        %v1997 = vunpack.c.l.s4 1966171168
        %v1998 = vunpack.c.0.s8 %v1997
        %v1999 = vlaneseq
        %v2000 = vshrl.u32 %v1999, 7
        %v2001 = vsub.s32 %v1998, %v2000
        %v2002 = vrot.slane %v1994, %v2001
        %v2004 = vunpack.c.l.s4 1966171168
        %v2005 = vunpack.c.0.s8 %v2004
        %v2006 = vlaneseq
        %v2007 = vshrl.u32 %v2006, 7
        %v2008 = vsub.s32 %v2005, %v2007
        %v2009 = vrot.slane %v1995, %v2008
        %v2010 = vcombine.low %v2002, %v2009
        %v2011 = vcombine.low %v1518, %v1532
        %v2012 = vcombine.low %v1556, %v1570
        %v2013 = vcombine.low %v1578, %v1580
        %v2014 = vcombine.low %v1563, %v1577
        %v2016 = vunpack.c.l.s4 1966171168
        %v2017 = vunpack.c.0.s8 %v2016
        %v2018 = vlaneseq
        %v2019 = vshrl.u32 %v2018, 7
        %v2020 = vsub.s32 %v2017, %v2019
        %v2021 = vrot.slane %v2011, %v2020
        %v2023 = vunpack.c.l.s4 1966171168
        %v2024 = vunpack.c.0.s8 %v2023
        %v2025 = vlaneseq
        %v2026 = vshrl.u32 %v2025, 7
        %v2027 = vsub.s32 %v2024, %v2026
        %v2028 = vrot.slane %v2012, %v2027
        %v2030 = vunpack.c.l.s4 1966171168
        %v2031 = vunpack.c.0.s8 %v2030
        %v2032 = vlaneseq
        %v2033 = vshrl.u32 %v2032, 7
        %v2034 = vsub.s32 %v2031, %v2033
        %v2035 = vrot.slane %v2013, %v2034
        %v2037 = vunpack.c.l.s4 1966171168
        %v2038 = vunpack.c.0.s8 %v2037
        %v2039 = vlaneseq
        %v2040 = vshrl.u32 %v2039, 7
        %v2041 = vsub.s32 %v2038, %v2040
        %v2042 = vrot.slane %v2014, %v2041
        %v2043 = vcombine.low %v2021, %v2028
        %v2044 = vcombine.low %v2035, %v2042
        %v2046 = vunpack.c.l.s4 1966171168
        %v2047 = vunpack.c.0.s8 %v2046
        %v2048 = vlaneseq
        %v2049 = vshrl.u32 %v2048, 7
        %v2050 = vsub.s32 %v2047, %v2049
        %v2051 = vrot.slane %v2043, %v2050
        %v2053 = vunpack.c.l.s4 1966171168
        %v2054 = vunpack.c.0.s8 %v2053
        %v2055 = vlaneseq
        %v2056 = vshrl.u32 %v2055, 7
        %v2057 = vsub.s32 %v2054, %v2056
        %v2058 = vrot.slane %v2044, %v2057
        %v2059 = vcombine.low %v2051, %v2058
        %v2060 = vcombine.low %v1579, %v1581
        %v2061 = vcombine.low %v1595, %v1619
        %v2062 = vcombine.low %v1633, %v1641
        %v2063 = vcombine.low %v1643, %v1626
        %v2065 = vunpack.c.l.s4 1966171168
        %v2066 = vunpack.c.0.s8 %v2065
        %v2067 = vlaneseq
        %v2068 = vshrl.u32 %v2067, 7
        %v2069 = vsub.s32 %v2066, %v2068
        %v2070 = vrot.slane %v2060, %v2069
        %v2072 = vunpack.c.l.s4 1966171168
        %v2073 = vunpack.c.0.s8 %v2072
        %v2074 = vlaneseq
        %v2075 = vshrl.u32 %v2074, 7
        %v2076 = vsub.s32 %v2073, %v2075
        %v2077 = vrot.slane %v2061, %v2076
        %v2079 = vunpack.c.l.s4 1966171168
        %v2080 = vunpack.c.0.s8 %v2079
        %v2081 = vlaneseq
        %v2082 = vshrl.u32 %v2081, 7
        %v2083 = vsub.s32 %v2080, %v2082
        %v2084 = vrot.slane %v2062, %v2083
        %v2086 = vunpack.c.l.s4 1966171168
        %v2087 = vunpack.c.0.s8 %v2086
        %v2088 = vlaneseq
        %v2089 = vshrl.u32 %v2088, 7
        %v2090 = vsub.s32 %v2087, %v2089
        %v2091 = vrot.slane %v2063, %v2090
        %v2092 = vcombine.low %v2070, %v2077
        %v2093 = vcombine.low %v2084, %v2091
        %v2095 = vunpack.c.l.s4 1966171168
        %v2096 = vunpack.c.0.s8 %v2095
        %v2097 = vlaneseq
        %v2098 = vshrl.u32 %v2097, 7
        %v2099 = vsub.s32 %v2096, %v2098
        %v2100 = vrot.slane %v2092, %v2099
        %v2102 = vunpack.c.l.s4 1966171168
        %v2103 = vunpack.c.0.s8 %v2102
        %v2104 = vlaneseq
        %v2105 = vshrl.u32 %v2104, 7
        %v2106 = vsub.s32 %v2103, %v2105
        %v2107 = vrot.slane %v2093, %v2106
        %v2108 = vcombine.low %v2100, %v2107
        %v2109 = vcombine.low %v1640, %v1642
        %v2110 = vcombine.low %v1644, %v1658
        %v2111 = vcombine.low %v1682, %v1696
        %v2112 = vcombine.low %v1704, %v1706
        %v2114 = vunpack.c.l.s4 1966171168
        %v2115 = vunpack.c.0.s8 %v2114
        %v2116 = vlaneseq
        %v2117 = vshrl.u32 %v2116, 7
        %v2118 = vsub.s32 %v2115, %v2117
        %v2119 = vrot.slane %v2109, %v2118
        %v2121 = vunpack.c.l.s4 1966171168
        %v2122 = vunpack.c.0.s8 %v2121
        %v2123 = vlaneseq
        %v2124 = vshrl.u32 %v2123, 7
        %v2125 = vsub.s32 %v2122, %v2124
        %v2126 = vrot.slane %v2110, %v2125
        %v2128 = vunpack.c.l.s4 1966171168
        %v2129 = vunpack.c.0.s8 %v2128
        %v2130 = vlaneseq
        %v2131 = vshrl.u32 %v2130, 7
        %v2132 = vsub.s32 %v2129, %v2131
        %v2133 = vrot.slane %v2111, %v2132
        %v2135 = vunpack.c.l.s4 1966171168
        %v2136 = vunpack.c.0.s8 %v2135
        %v2137 = vlaneseq
        %v2138 = vshrl.u32 %v2137, 7
        %v2139 = vsub.s32 %v2136, %v2138
        %v2140 = vrot.slane %v2112, %v2139
        %v2141 = vcombine.low %v2119, %v2126
        %v2142 = vcombine.low %v2133, %v2140
        %v2144 = vunpack.c.l.s4 1966171168
        %v2145 = vunpack.c.0.s8 %v2144
        %v2146 = vlaneseq
        %v2147 = vshrl.u32 %v2146, 7
        %v2148 = vsub.s32 %v2145, %v2147
        %v2149 = vrot.slane %v2141, %v2148
        %v2151 = vunpack.c.l.s4 1966171168
        %v2152 = vunpack.c.0.s8 %v2151
        %v2153 = vlaneseq
        %v2154 = vshrl.u32 %v2153, 7
        %v2155 = vsub.s32 %v2152, %v2154
        %v2156 = vrot.slane %v2142, %v2155
        %v2157 = vcombine.low %v2149, %v2156
        %v2158 = vcombine.low %v1689, %v1703
        %v2159 = vcombine.low %v1705, %v1707
        %v2160 = vcombine.low %v1721, %v1745
        %v2161 = vcombine.low %v1759, %v1767
        %v2163 = vunpack.c.l.s4 1966171168
        %v2164 = vunpack.c.0.s8 %v2163
        %v2165 = vlaneseq
        %v2166 = vshrl.u32 %v2165, 7
        %v2167 = vsub.s32 %v2164, %v2166
        %v2168 = vrot.slane %v2158, %v2167
        %v2170 = vunpack.c.l.s4 1966171168
        %v2171 = vunpack.c.0.s8 %v2170
        %v2172 = vlaneseq
        %v2173 = vshrl.u32 %v2172, 7
        %v2174 = vsub.s32 %v2171, %v2173
        %v2175 = vrot.slane %v2159, %v2174
        %v2177 = vunpack.c.l.s4 1966171168
        %v2178 = vunpack.c.0.s8 %v2177
        %v2179 = vlaneseq
        %v2180 = vshrl.u32 %v2179, 7
        %v2181 = vsub.s32 %v2178, %v2180
        %v2182 = vrot.slane %v2160, %v2181
        %v2184 = vunpack.c.l.s4 1966171168
        %v2185 = vunpack.c.0.s8 %v2184
        %v2186 = vlaneseq
        %v2187 = vshrl.u32 %v2186, 7
        %v2188 = vsub.s32 %v2185, %v2187
        %v2189 = vrot.slane %v2161, %v2188
        %v2190 = vcombine.low %v2168, %v2175
        %v2191 = vcombine.low %v2182, %v2189
        %v2193 = vunpack.c.l.s4 1966171168
        %v2194 = vunpack.c.0.s8 %v2193
        %v2195 = vlaneseq
        %v2196 = vshrl.u32 %v2195, 7
        %v2197 = vsub.s32 %v2194, %v2196
        %v2198 = vrot.slane %v2190, %v2197
        %v2200 = vunpack.c.l.s4 1966171168
        %v2201 = vunpack.c.0.s8 %v2200
        %v2202 = vlaneseq
        %v2203 = vshrl.u32 %v2202, 7
        %v2204 = vsub.s32 %v2201, %v2203
        %v2205 = vrot.slane %v2191, %v2204
        %v2206 = vcombine.low %v2198, %v2205
        %v2207 = vcombine.low %v1769, %v1752
        %v2208 = vcombine.low %v1766, %v1768
        %v2209 = vcombine.low %v1770, %v1784
        %v2210 = vcombine.low %v1808, %v1822
        %v2212 = vunpack.c.l.s4 1966171168
        %v2213 = vunpack.c.0.s8 %v2212
        %v2214 = vlaneseq
        %v2215 = vshrl.u32 %v2214, 7
        %v2216 = vsub.s32 %v2213, %v2215
        %v2217 = vrot.slane %v2207, %v2216
        %v2219 = vunpack.c.l.s4 1966171168
        %v2220 = vunpack.c.0.s8 %v2219
        %v2221 = vlaneseq
        %v2222 = vshrl.u32 %v2221, 7
        %v2223 = vsub.s32 %v2220, %v2222
        %v2224 = vrot.slane %v2208, %v2223
        %v2226 = vunpack.c.l.s4 1966171168
        %v2227 = vunpack.c.0.s8 %v2226
        %v2228 = vlaneseq
        %v2229 = vshrl.u32 %v2228, 7
        %v2230 = vsub.s32 %v2227, %v2229
        %v2231 = vrot.slane %v2209, %v2230
        %v2233 = vunpack.c.l.s4 1966171168
        %v2234 = vunpack.c.0.s8 %v2233
        %v2235 = vlaneseq
        %v2236 = vshrl.u32 %v2235, 7
        %v2237 = vsub.s32 %v2234, %v2236
        %v2238 = vrot.slane %v2210, %v2237
        %v2239 = vcombine.low %v2217, %v2224
        %v2240 = vcombine.low %v2231, %v2238
        %v2242 = vunpack.c.l.s4 1966171168
        %v2243 = vunpack.c.0.s8 %v2242
        %v2244 = vlaneseq
        %v2245 = vshrl.u32 %v2244, 7
        %v2246 = vsub.s32 %v2243, %v2245
        %v2247 = vrot.slane %v2239, %v2246
        %v2249 = vunpack.c.l.s4 1966171168
        %v2250 = vunpack.c.0.s8 %v2249
        %v2251 = vlaneseq
        %v2252 = vshrl.u32 %v2251, 7
        %v2253 = vsub.s32 %v2250, %v2252
        %v2254 = vrot.slane %v2240, %v2253
        %v2255 = vcombine.low %v2247, %v2254
        %v2256 = vcombine.low %v1830, %v1832
        %v2257 = vcombine.low %v1815, %v1829
        %v2258 = vcombine.low %v1831, %v1833
        %v2259 = vcombine.low %v1847, %v1871
        %v2261 = vunpack.c.l.s4 1966171168
        %v2262 = vunpack.c.0.s8 %v2261
        %v2263 = vlaneseq
        %v2264 = vshrl.u32 %v2263, 7
        %v2265 = vsub.s32 %v2262, %v2264
        %v2266 = vrot.slane %v2256, %v2265
        %v2268 = vunpack.c.l.s4 1966171168
        %v2269 = vunpack.c.0.s8 %v2268
        %v2270 = vlaneseq
        %v2271 = vshrl.u32 %v2270, 7
        %v2272 = vsub.s32 %v2269, %v2271
        %v2273 = vrot.slane %v2257, %v2272
        %v2275 = vunpack.c.l.s4 1966171168
        %v2276 = vunpack.c.0.s8 %v2275
        %v2277 = vlaneseq
        %v2278 = vshrl.u32 %v2277, 7
        %v2279 = vsub.s32 %v2276, %v2278
        %v2280 = vrot.slane %v2258, %v2279
        %v2282 = vunpack.c.l.s4 1966171168
        %v2283 = vunpack.c.0.s8 %v2282
        %v2284 = vlaneseq
        %v2285 = vshrl.u32 %v2284, 7
        %v2286 = vsub.s32 %v2283, %v2285
        %v2287 = vrot.slane %v2259, %v2286
        %v2288 = vcombine.low %v2266, %v2273
        %v2289 = vcombine.low %v2280, %v2287
        %v2291 = vunpack.c.l.s4 1966171168
        %v2292 = vunpack.c.0.s8 %v2291
        %v2293 = vlaneseq
        %v2294 = vshrl.u32 %v2293, 7
        %v2295 = vsub.s32 %v2292, %v2294
        %v2296 = vrot.slane %v2288, %v2295
        %v2298 = vunpack.c.l.s4 1966171168
        %v2299 = vunpack.c.0.s8 %v2298
        %v2300 = vlaneseq
        %v2301 = vshrl.u32 %v2300, 7
        %v2302 = vsub.s32 %v2299, %v2301
        %v2303 = vrot.slane %v2289, %v2302
        %v2304 = vcombine.low %v2296, %v2303
        %v2305 = vcombine.low %v1885, %v1893
        %v2306 = vcombine.low %v1895, %v1878
        %v2307 = vcombine.low %v1892, %v1894
        %v2308 = vcombine.low %v1896, %v1910
        %v2310 = vunpack.c.l.s4 1966171168
        %v2311 = vunpack.c.0.s8 %v2310
        %v2312 = vlaneseq
        %v2313 = vshrl.u32 %v2312, 7
        %v2314 = vsub.s32 %v2311, %v2313
        %v2315 = vrot.slane %v2305, %v2314
        %v2317 = vunpack.c.l.s4 1966171168
        %v2318 = vunpack.c.0.s8 %v2317
        %v2319 = vlaneseq
        %v2320 = vshrl.u32 %v2319, 7
        %v2321 = vsub.s32 %v2318, %v2320
        %v2322 = vrot.slane %v2306, %v2321
        %v2324 = vunpack.c.l.s4 1966171168
        %v2325 = vunpack.c.0.s8 %v2324
        %v2326 = vlaneseq
        %v2327 = vshrl.u32 %v2326, 7
        %v2328 = vsub.s32 %v2325, %v2327
        %v2329 = vrot.slane %v2307, %v2328
        %v2331 = vunpack.c.l.s4 1966171168
        %v2332 = vunpack.c.0.s8 %v2331
        %v2333 = vlaneseq
        %v2334 = vshrl.u32 %v2333, 7
        %v2335 = vsub.s32 %v2332, %v2334
        %v2336 = vrot.slane %v2308, %v2335
        %v2337 = vcombine.low %v2315, %v2322
        %v2338 = vcombine.low %v2329, %v2336
        %v2340 = vunpack.c.l.s4 1966171168
        %v2341 = vunpack.c.0.s8 %v2340
        %v2342 = vlaneseq
        %v2343 = vshrl.u32 %v2342, 7
        %v2344 = vsub.s32 %v2341, %v2343
        %v2345 = vrot.slane %v2337, %v2344
        %v2347 = vunpack.c.l.s4 1966171168
        %v2348 = vunpack.c.0.s8 %v2347
        %v2349 = vlaneseq
        %v2350 = vshrl.u32 %v2349, 7
        %v2351 = vsub.s32 %v2348, %v2350
        %v2352 = vrot.slane %v2338, %v2351
        %v2353 = vcombine.low %v2345, %v2352
        %v2356 = vunpack.c.l.b16 %v1911
        %v2357 = vunpack.c.l.b16 %v1912
        %v2358 = vpack.c.b16 %v2357, %v2356
        %vm2359 = vcmask 97280
        %v2361 = vsel %vm2359, %v1961, 0
        %v2364 = vsel %vm2359, %v2010, 0
        %v2367 = vsel %vm2359, %v2059, 0
        %v2370 = vsel %vm2359, %v2108, 0
        %v2373 = vsel %vm2359, %v2157, 0
        %v2376 = vsel %vm2359, %v2206, 0
        %v2379 = vsel %vm2359, %v2255, 0
        %v2382 = vsel %vm2359, %v2304, 0
        %v2385 = vsel %vm2359, %v2353, 0
        %vm2387 = vcmask 1045504
        %v2389 = vsel %vm2387, %v2358, 0
        %2391 = vmatprep.subr.bf16.mxu0 0
        %2392 = vmatpush1.bf16.msra.mxu0 0
        %2393 = vmatprep.subr.bf16.mxu0 0
        %2394 = vmatpush1.bf16.msra.mxu0 0
        %2395 = vmatprep.subr.bf16.mxu0 0
        %2396 = vmatpush1.bf16.msra.mxu0 0
        %2397 = vmatprep.subr.bf16.mxu0 0
        %2398 = vmatpush1.bf16.msra.mxu0 0
        %2399 = vmatprep.subr.bf16.mxu0 0
        %2400 = vmatpush1.bf16.msra.mxu0 0
        %2401 = vmatprep.subr.bf16.mxu0 0
        %2402 = vmatpush1.bf16.msra.mxu0 0
        %2403 = vmatprep.subr.bf16.mxu0 0
        %2404 = vmatpush1.bf16.msra.mxu0 0
        %2405 = vmatprep.subr.bf16.mxu0 0
        %2406 = vmatpush1.bf16.msra.mxu0 %v2389
        %2407 = vmatprep.subr.bf16.mxu0 0
        %2408 = vmatpush2.bf16.msra.mxu0 0
        %2409 = vmatprep.subr.bf16.mxu0 0
        %2410 = vmatpush2.bf16.msra.mxu0 0
        %2411 = vmatprep.subr.bf16.mxu0 0
        %2412 = vmatpush2.bf16.msra.mxu0 0
        %2413 = vmatprep.subr.bf16.mxu0 0
        %2414 = vmatpush2.bf16.msra.mxu0 0
        %2415 = vmatprep.subr.bf16.mxu0 0
        %2416 = vmatpush2.bf16.msra.mxu0 0
        %2417 = vmatprep.subr.bf16.mxu0 0
        %2418 = vmatpush2.bf16.msra.mxu0 0
        %2419 = vmatprep.subr.bf16.mxu0 0
        %2420 = vmatpush2.bf16.msra.mxu0 0
        %2421 = vmatprep.subr.bf16.mxu0 0
        %2422 = vmatpush2.bf16.msra.mxu0 0
        %2423 = vmatprep.mubr.bf16.mxu0 0
        %2424 = vmatmul.mubr.bf16.gmra.mxu0 %v2361
        %v2425 = vpop.f32.mrf.mxu0
        %v2426 = vadd.f32 0.0, %v2425
        %v2427 = vpop.f32.mrf.mxu0
        %v2428 = vpop.f32.mrf.mxu0
        %v2429 = vadd.f32 0.0, %v2428
        %v2430 = vpop.f32.mrf.mxu0
        %2431 = vmatprep.mubr.bf16.mxu0 0
        %2432 = vmatmul.mubr.bf16.gmra.mxu0 %v2364
        %v2433 = vpop.f32.mrf.mxu0
        %v2434 = vadd.f32 0.0, %v2433
        %v2435 = vpop.f32.mrf.mxu0
        %v2436 = vpop.f32.mrf.mxu0
        %v2437 = vadd.f32 0.0, %v2436
        %v2438 = vpop.f32.mrf.mxu0
        %2439 = vmatprep.mubr.bf16.mxu0 0
        %2440 = vmatmul.mubr.bf16.gmra.mxu0 %v2367
        %v2441 = vpop.f32.mrf.mxu0
        %v2442 = vadd.f32 0.0, %v2441
        %v2443 = vpop.f32.mrf.mxu0
        %v2444 = vpop.f32.mrf.mxu0
        %v2445 = vadd.f32 0.0, %v2444
        %v2446 = vpop.f32.mrf.mxu0
        %2447 = vmatprep.mubr.bf16.mxu0 0
        %2448 = vmatmul.mubr.bf16.gmra.mxu0 %v2370
        %v2449 = vpop.f32.mrf.mxu0
        %v2450 = vadd.f32 0.0, %v2449
        %v2451 = vpop.f32.mrf.mxu0
        %v2452 = vpop.f32.mrf.mxu0
        %v2453 = vadd.f32 0.0, %v2452
        %v2454 = vpop.f32.mrf.mxu0
        %2455 = vmatprep.mubr.bf16.mxu0 0
        %2456 = vmatmul.mubr.bf16.gmra.mxu0 %v2373
        %v2457 = vpop.f32.mrf.mxu0
        %v2458 = vadd.f32 0.0, %v2457
        %v2459 = vpop.f32.mrf.mxu0
        %v2460 = vpop.f32.mrf.mxu0
        %v2461 = vadd.f32 0.0, %v2460
        %v2462 = vpop.f32.mrf.mxu0
        %2463 = vmatprep.mubr.bf16.mxu0 0
        %2464 = vmatmul.mubr.bf16.gmra.mxu0 %v2376
        %v2465 = vpop.f32.mrf.mxu0
        %v2466 = vadd.f32 0.0, %v2465
        %v2467 = vpop.f32.mrf.mxu0
        %v2468 = vpop.f32.mrf.mxu0
        %v2469 = vadd.f32 0.0, %v2468
        %v2470 = vpop.f32.mrf.mxu0
        %2471 = vmatprep.mubr.bf16.mxu0 0
        %2472 = vmatmul.mubr.bf16.gmra.mxu0 %v2379
        %v2473 = vpop.f32.mrf.mxu0
        %v2474 = vadd.f32 0.0, %v2473
        %v2475 = vpop.f32.mrf.mxu0
        %v2476 = vpop.f32.mrf.mxu0
        %v2477 = vadd.f32 0.0, %v2476
        %v2478 = vpop.f32.mrf.mxu0
        %2479 = vmatprep.mubr.bf16.mxu0 0
        %2480 = vmatmul.mubr.bf16.gmra.mxu0 %v2382
        %v2481 = vpop.f32.mrf.mxu0
        %v2482 = vadd.f32 0.0, %v2481
        %v2483 = vpop.f32.mrf.mxu0
        %v2484 = vpop.f32.mrf.mxu0
        %v2485 = vadd.f32 0.0, %v2484
        %v2486 = vpop.f32.mrf.mxu0
        %2487 = vmatprep.mubr.bf16.mxu0 0
        %2488 = vmatmul.mubr.bf16.gmra.mxu0 %v2385
        %v2489 = vpop.f32.mrf.mxu0
        %v2490 = vadd.f32 0.0, %v2489
        %v2491 = vpop.f32.mrf.mxu0
        %v2492 = vpop.f32.mrf.mxu0
        %v2493 = vadd.f32 0.0, %v2492
        %v2494 = vpop.f32.mrf.mxu0
        %2495 = vdwg.mxu0
        %v2514 = vcombine.high %v2426, %v2426
        %v2516 = vunpack.c.l.s4 1983009808
        %v2517 = vunpack.c.0.s8 %v2516
        %v2518 = vlaneseq
        %v2519 = vshrl.u32 %v2518, 7
        %v2520 = vsub.s32 %v2517, %v2519
        %v2521 = vrot.slane %v2426, %v2520
        %v2523 = vunpack.c.l.s4 1983009808
        %v2524 = vunpack.c.0.s8 %v2523
        %v2525 = vlaneseq
        %v2526 = vshrl.u32 %v2525, 7
        %v2527 = vsub.s32 %v2524, %v2526
        %v2528 = vrot.slane %v2514, %v2527
        %v2529 = vcombine.high %v2521, %v2521
        %v2530 = vcombine.high %v2528, %v2528
        %v2531 = vcombine.high %v2429, %v2429
        %v2533 = vunpack.c.l.s4 1983009808
        %v2534 = vunpack.c.0.s8 %v2533
        %v2535 = vlaneseq
        %v2536 = vshrl.u32 %v2535, 7
        %v2537 = vsub.s32 %v2534, %v2536
        %v2538 = vrot.slane %v2429, %v2537
        %v2540 = vunpack.c.l.s4 1983009808
        %v2541 = vunpack.c.0.s8 %v2540
        %v2542 = vlaneseq
        %v2543 = vshrl.u32 %v2542, 7
        %v2544 = vsub.s32 %v2541, %v2543
        %v2545 = vrot.slane %v2531, %v2544
        %v2546 = vcombine.high %v2538, %v2538
        %v2547 = vcombine.high %v2545, %v2545
        %v2548 = vcombine.high %v2434, %v2434
        %v2550 = vunpack.c.l.s4 1983009808
        %v2551 = vunpack.c.0.s8 %v2550
        %v2552 = vlaneseq
        %v2553 = vshrl.u32 %v2552, 7
        %v2554 = vsub.s32 %v2551, %v2553
        %v2555 = vrot.slane %v2434, %v2554
        %v2557 = vunpack.c.l.s4 1983009808
        %v2558 = vunpack.c.0.s8 %v2557
        %v2559 = vlaneseq
        %v2560 = vshrl.u32 %v2559, 7
        %v2561 = vsub.s32 %v2558, %v2560
        %v2562 = vrot.slane %v2548, %v2561
        %v2563 = vcombine.high %v2555, %v2555
        %v2564 = vcombine.high %v2562, %v2562
        %v2565 = vcombine.high %v2437, %v2437
        %v2567 = vunpack.c.l.s4 1983009808
        %v2568 = vunpack.c.0.s8 %v2567
        %v2569 = vlaneseq
        %v2570 = vshrl.u32 %v2569, 7
        %v2571 = vsub.s32 %v2568, %v2570
        %v2572 = vrot.slane %v2437, %v2571
        %v2574 = vunpack.c.l.s4 1983009808
        %v2575 = vunpack.c.0.s8 %v2574
        %v2576 = vlaneseq
        %v2577 = vshrl.u32 %v2576, 7
        %v2578 = vsub.s32 %v2575, %v2577
        %v2579 = vrot.slane %v2565, %v2578
        %v2580 = vcombine.high %v2572, %v2572
        %v2581 = vcombine.high %v2579, %v2579
        %v2582 = vcombine.high %v2442, %v2442
        %v2584 = vunpack.c.l.s4 1983009808
        %v2585 = vunpack.c.0.s8 %v2584
        %v2586 = vlaneseq
        %v2587 = vshrl.u32 %v2586, 7
        %v2588 = vsub.s32 %v2585, %v2587
        %v2589 = vrot.slane %v2442, %v2588
        %v2591 = vunpack.c.l.s4 1983009808
        %v2592 = vunpack.c.0.s8 %v2591
        %v2593 = vlaneseq
        %v2594 = vshrl.u32 %v2593, 7
        %v2595 = vsub.s32 %v2592, %v2594
        %v2596 = vrot.slane %v2582, %v2595
        %v2597 = vcombine.high %v2596, %v2596
        %v2598 = vcombine.high %v2445, %v2445
        %v2600 = vunpack.c.l.s4 1983009808
        %v2601 = vunpack.c.0.s8 %v2600
        %v2602 = vlaneseq
        %v2603 = vshrl.u32 %v2602, 7
        %v2604 = vsub.s32 %v2601, %v2603
        %v2605 = vrot.slane %v2445, %v2604
        %v2607 = vunpack.c.l.s4 1983009808
        %v2608 = vunpack.c.0.s8 %v2607
        %v2609 = vlaneseq
        %v2610 = vshrl.u32 %v2609, 7
        %v2611 = vsub.s32 %v2608, %v2610
        %v2612 = vrot.slane %v2598, %v2611
        %v2613 = vcombine.high %v2605, %v2605
        %v2614 = vcombine.high %v2612, %v2612
        %v2615 = vcombine.high %v2450, %v2450
        %v2617 = vunpack.c.l.s4 1983009808
        %v2618 = vunpack.c.0.s8 %v2617
        %v2619 = vlaneseq
        %v2620 = vshrl.u32 %v2619, 7
        %v2621 = vsub.s32 %v2618, %v2620
        %v2622 = vrot.slane %v2450, %v2621
        %v2624 = vunpack.c.l.s4 1983009808
        %v2625 = vunpack.c.0.s8 %v2624
        %v2626 = vlaneseq
        %v2627 = vshrl.u32 %v2626, 7
        %v2628 = vsub.s32 %v2625, %v2627
        %v2629 = vrot.slane %v2615, %v2628
        %v2630 = vcombine.high %v2622, %v2622
        %v2631 = vcombine.high %v2629, %v2629
        %v2632 = vcombine.high %v2453, %v2453
        %v2634 = vunpack.c.l.s4 1983009808
        %v2635 = vunpack.c.0.s8 %v2634
        %v2636 = vlaneseq
        %v2637 = vshrl.u32 %v2636, 7
        %v2638 = vsub.s32 %v2635, %v2637
        %v2639 = vrot.slane %v2453, %v2638
        %v2641 = vunpack.c.l.s4 1983009808
        %v2642 = vunpack.c.0.s8 %v2641
        %v2643 = vlaneseq
        %v2644 = vshrl.u32 %v2643, 7
        %v2645 = vsub.s32 %v2642, %v2644
        %v2646 = vrot.slane %v2632, %v2645
        %v2647 = vcombine.high %v2639, %v2639
        %v2648 = vcombine.high %v2646, %v2646
        %v2649 = vcombine.high %v2458, %v2458
        %v2651 = vunpack.c.l.s4 1983009808
        %v2652 = vunpack.c.0.s8 %v2651
        %v2653 = vlaneseq
        %v2654 = vshrl.u32 %v2653, 7
        %v2655 = vsub.s32 %v2652, %v2654
        %v2656 = vrot.slane %v2458, %v2655
        %v2658 = vunpack.c.l.s4 1983009808
        %v2659 = vunpack.c.0.s8 %v2658
        %v2660 = vlaneseq
        %v2661 = vshrl.u32 %v2660, 7
        %v2662 = vsub.s32 %v2659, %v2661
        %v2663 = vrot.slane %v2649, %v2662
        %v2664 = vcombine.high %v2656, %v2656
        %v2665 = vcombine.high %v2461, %v2461
        %v2667 = vunpack.c.l.s4 1983009808
        %v2668 = vunpack.c.0.s8 %v2667
        %v2669 = vlaneseq
        %v2670 = vshrl.u32 %v2669, 7
        %v2671 = vsub.s32 %v2668, %v2670
        %v2672 = vrot.slane %v2461, %v2671
        %v2674 = vunpack.c.l.s4 1983009808
        %v2675 = vunpack.c.0.s8 %v2674
        %v2676 = vlaneseq
        %v2677 = vshrl.u32 %v2676, 7
        %v2678 = vsub.s32 %v2675, %v2677
        %v2679 = vrot.slane %v2665, %v2678
        %v2680 = vcombine.high %v2672, %v2672
        %v2681 = vcombine.high %v2679, %v2679
        %v2682 = vcombine.high %v2466, %v2466
        %v2684 = vunpack.c.l.s4 1983009808
        %v2685 = vunpack.c.0.s8 %v2684
        %v2686 = vlaneseq
        %v2687 = vshrl.u32 %v2686, 7
        %v2688 = vsub.s32 %v2685, %v2687
        %v2689 = vrot.slane %v2466, %v2688
        %v2691 = vunpack.c.l.s4 1983009808
        %v2692 = vunpack.c.0.s8 %v2691
        %v2693 = vlaneseq
        %v2694 = vshrl.u32 %v2693, 7
        %v2695 = vsub.s32 %v2692, %v2694
        %v2696 = vrot.slane %v2682, %v2695
        %v2697 = vcombine.high %v2689, %v2689
        %v2698 = vcombine.high %v2696, %v2696
        %v2699 = vcombine.high %v2469, %v2469
        %v2701 = vunpack.c.l.s4 1983009808
        %v2702 = vunpack.c.0.s8 %v2701
        %v2703 = vlaneseq
        %v2704 = vshrl.u32 %v2703, 7
        %v2705 = vsub.s32 %v2702, %v2704
        %v2706 = vrot.slane %v2469, %v2705
        %v2708 = vunpack.c.l.s4 1983009808
        %v2709 = vunpack.c.0.s8 %v2708
        %v2710 = vlaneseq
        %v2711 = vshrl.u32 %v2710, 7
        %v2712 = vsub.s32 %v2709, %v2711
        %v2713 = vrot.slane %v2699, %v2712
        %v2714 = vcombine.high %v2706, %v2706
        %v2715 = vcombine.high %v2713, %v2713
        %v2716 = vcombine.high %v2474, %v2474
        %v2718 = vunpack.c.l.s4 1983009808
        %v2719 = vunpack.c.0.s8 %v2718
        %v2720 = vlaneseq
        %v2721 = vshrl.u32 %v2720, 7
        %v2722 = vsub.s32 %v2719, %v2721
        %v2723 = vrot.slane %v2474, %v2722
        %v2725 = vunpack.c.l.s4 1983009808
        %v2726 = vunpack.c.0.s8 %v2725
        %v2727 = vlaneseq
        %v2728 = vshrl.u32 %v2727, 7
        %v2729 = vsub.s32 %v2726, %v2728
        %v2730 = vrot.slane %v2716, %v2729
        %v2731 = vcombine.high %v2723, %v2723
        %v2732 = vcombine.high %v2730, %v2730
        %v2733 = vcombine.high %v2477, %v2477
        %v2735 = vunpack.c.l.s4 1983009808
        %v2736 = vunpack.c.0.s8 %v2735
        %v2737 = vlaneseq
        %v2738 = vshrl.u32 %v2737, 7
        %v2739 = vsub.s32 %v2736, %v2738
        %v2740 = vrot.slane %v2477, %v2739
        %v2742 = vunpack.c.l.s4 1983009808
        %v2743 = vunpack.c.0.s8 %v2742
        %v2744 = vlaneseq
        %v2745 = vshrl.u32 %v2744, 7
        %v2746 = vsub.s32 %v2743, %v2745
        %v2747 = vrot.slane %v2733, %v2746
        %v2748 = vcombine.high %v2747, %v2747
        %v2749 = vcombine.high %v2482, %v2482
        %v2751 = vunpack.c.l.s4 1983009808
        %v2752 = vunpack.c.0.s8 %v2751
        %v2753 = vlaneseq
        %v2754 = vshrl.u32 %v2753, 7
        %v2755 = vsub.s32 %v2752, %v2754
        %v2756 = vrot.slane %v2482, %v2755
        %v2758 = vunpack.c.l.s4 1983009808
        %v2759 = vunpack.c.0.s8 %v2758
        %v2760 = vlaneseq
        %v2761 = vshrl.u32 %v2760, 7
        %v2762 = vsub.s32 %v2759, %v2761
        %v2763 = vrot.slane %v2749, %v2762
        %v2764 = vcombine.high %v2756, %v2756
        %v2765 = vcombine.high %v2763, %v2763
        %v2766 = vcombine.high %v2485, %v2485
        %v2768 = vunpack.c.l.s4 1983009808
        %v2769 = vunpack.c.0.s8 %v2768
        %v2770 = vlaneseq
        %v2771 = vshrl.u32 %v2770, 7
        %v2772 = vsub.s32 %v2769, %v2771
        %v2773 = vrot.slane %v2485, %v2772
        %v2775 = vunpack.c.l.s4 1983009808
        %v2776 = vunpack.c.0.s8 %v2775
        %v2777 = vlaneseq
        %v2778 = vshrl.u32 %v2777, 7
        %v2779 = vsub.s32 %v2776, %v2778
        %v2780 = vrot.slane %v2766, %v2779
        %v2781 = vcombine.high %v2773, %v2773
        %v2782 = vcombine.high %v2780, %v2780
        %v2783 = vcombine.high %v2490, %v2490
        %v2785 = vunpack.c.l.s4 1983009808
        %v2786 = vunpack.c.0.s8 %v2785
        %v2787 = vlaneseq
        %v2788 = vshrl.u32 %v2787, 7
        %v2789 = vsub.s32 %v2786, %v2788
        %v2790 = vrot.slane %v2490, %v2789
        %v2792 = vunpack.c.l.s4 1983009808
        %v2793 = vunpack.c.0.s8 %v2792
        %v2794 = vlaneseq
        %v2795 = vshrl.u32 %v2794, 7
        %v2796 = vsub.s32 %v2793, %v2795
        %v2797 = vrot.slane %v2783, %v2796
        %v2798 = vcombine.high %v2790, %v2790
        %v2799 = vcombine.high %v2797, %v2797
        %v2800 = vcombine.high %v2493, %v2493
        %v2802 = vunpack.c.l.s4 1983009808
        %v2803 = vunpack.c.0.s8 %v2802
        %v2804 = vlaneseq
        %v2805 = vshrl.u32 %v2804, 7
        %v2806 = vsub.s32 %v2803, %v2805
        %v2807 = vrot.slane %v2493, %v2806
        %v2809 = vunpack.c.l.s4 1983009808
        %v2810 = vunpack.c.0.s8 %v2809
        %v2811 = vlaneseq
        %v2812 = vshrl.u32 %v2811, 7
        %v2813 = vsub.s32 %v2810, %v2812
        %v2814 = vrot.slane %v2800, %v2813
        %v2815 = vcombine.high %v2807, %v2807
        %v2816 = vcombine.low %v2521, %v2529
        %v2817 = vcombine.low %v2528, %v2530
        %v2819 = vunpack.c.l.s4 1983009808
        %v2820 = vunpack.c.0.s8 %v2819
        %v2821 = vlaneseq
        %v2822 = vshrl.u32 %v2821, 7
        %v2823 = vsub.s32 %v2820, %v2822
        %v2824 = vrot.slane %v2816, %v2823
        %v2826 = vunpack.c.l.s4 1983009808
        %v2827 = vunpack.c.0.s8 %v2826
        %v2828 = vlaneseq
        %v2829 = vshrl.u32 %v2828, 7
        %v2830 = vsub.s32 %v2827, %v2829
        %v2831 = vrot.slane %v2817, %v2830
        %v2832 = vcombine.low %v2824, %v2831
        %v2833 = vcombine.low %v2538, %v2546
        %v2834 = vcombine.low %v2545, %v2547
        %v2836 = vunpack.c.l.s4 1983009808
        %v2837 = vunpack.c.0.s8 %v2836
        %v2838 = vlaneseq
        %v2839 = vshrl.u32 %v2838, 7
        %v2840 = vsub.s32 %v2837, %v2839
        %v2841 = vrot.slane %v2833, %v2840
        %v2843 = vunpack.c.l.s4 1983009808
        %v2844 = vunpack.c.0.s8 %v2843
        %v2845 = vlaneseq
        %v2846 = vshrl.u32 %v2845, 7
        %v2847 = vsub.s32 %v2844, %v2846
        %v2848 = vrot.slane %v2834, %v2847
        %v2849 = vcombine.low %v2841, %v2848
        %v2850 = vcombine.low %v2563, %v2562
        %v2851 = vcombine.low %v2564, %v2572
        %v2853 = vunpack.c.l.s4 1983009808
        %v2854 = vunpack.c.0.s8 %v2853
        %v2855 = vlaneseq
        %v2856 = vshrl.u32 %v2855, 7
        %v2857 = vsub.s32 %v2854, %v2856
        %v2858 = vrot.slane %v2850, %v2857
        %v2860 = vunpack.c.l.s4 1983009808
        %v2861 = vunpack.c.0.s8 %v2860
        %v2862 = vlaneseq
        %v2863 = vshrl.u32 %v2862, 7
        %v2864 = vsub.s32 %v2861, %v2863
        %v2865 = vrot.slane %v2851, %v2864
        %v2866 = vcombine.low %v2858, %v2865
        %v2867 = vcombine.low %v2580, %v2579
        %v2868 = vcombine.low %v2581, %v2589
        %v2870 = vunpack.c.l.s4 1983009808
        %v2871 = vunpack.c.0.s8 %v2870
        %v2872 = vlaneseq
        %v2873 = vshrl.u32 %v2872, 7
        %v2874 = vsub.s32 %v2871, %v2873
        %v2875 = vrot.slane %v2867, %v2874
        %v2877 = vunpack.c.l.s4 1983009808
        %v2878 = vunpack.c.0.s8 %v2877
        %v2879 = vlaneseq
        %v2880 = vshrl.u32 %v2879, 7
        %v2881 = vsub.s32 %v2878, %v2880
        %v2882 = vrot.slane %v2868, %v2881
        %v2883 = vcombine.low %v2875, %v2882
        %v2884 = vcombine.low %v2596, %v2597
        %v2885 = vcombine.low %v2605, %v2613
        %v2887 = vunpack.c.l.s4 1983009808
        %v2888 = vunpack.c.0.s8 %v2887
        %v2889 = vlaneseq
        %v2890 = vshrl.u32 %v2889, 7
        %v2891 = vsub.s32 %v2888, %v2890
        %v2892 = vrot.slane %v2884, %v2891
        %v2894 = vunpack.c.l.s4 1983009808
        %v2895 = vunpack.c.0.s8 %v2894
        %v2896 = vlaneseq
        %v2897 = vshrl.u32 %v2896, 7
        %v2898 = vsub.s32 %v2895, %v2897
        %v2899 = vrot.slane %v2885, %v2898
        %v2900 = vcombine.low %v2892, %v2899
        %v2901 = vcombine.low %v2612, %v2614
        %v2902 = vcombine.low %v2622, %v2630
        %v2904 = vunpack.c.l.s4 1983009808
        %v2905 = vunpack.c.0.s8 %v2904
        %v2906 = vlaneseq
        %v2907 = vshrl.u32 %v2906, 7
        %v2908 = vsub.s32 %v2905, %v2907
        %v2909 = vrot.slane %v2901, %v2908
        %v2911 = vunpack.c.l.s4 1983009808
        %v2912 = vunpack.c.0.s8 %v2911
        %v2913 = vlaneseq
        %v2914 = vshrl.u32 %v2913, 7
        %v2915 = vsub.s32 %v2912, %v2914
        %v2916 = vrot.slane %v2902, %v2915
        %v2917 = vcombine.low %v2909, %v2916
        %v2918 = vcombine.low %v2631, %v2639
        %v2919 = vcombine.low %v2647, %v2646
        %v2921 = vunpack.c.l.s4 1983009808
        %v2922 = vunpack.c.0.s8 %v2921
        %v2923 = vlaneseq
        %v2924 = vshrl.u32 %v2923, 7
        %v2925 = vsub.s32 %v2922, %v2924
        %v2926 = vrot.slane %v2918, %v2925
        %v2928 = vunpack.c.l.s4 1983009808
        %v2929 = vunpack.c.0.s8 %v2928
        %v2930 = vlaneseq
        %v2931 = vshrl.u32 %v2930, 7
        %v2932 = vsub.s32 %v2929, %v2931
        %v2933 = vrot.slane %v2919, %v2932
        %v2934 = vcombine.low %v2926, %v2933
        %v2935 = vcombine.low %v2648, %v2656
        %v2936 = vcombine.low %v2664, %v2663
        %v2938 = vunpack.c.l.s4 1983009808
        %v2939 = vunpack.c.0.s8 %v2938
        %v2940 = vlaneseq
        %v2941 = vshrl.u32 %v2940, 7
        %v2942 = vsub.s32 %v2939, %v2941
        %v2943 = vrot.slane %v2935, %v2942
        %v2945 = vunpack.c.l.s4 1983009808
        %v2946 = vunpack.c.0.s8 %v2945
        %v2947 = vlaneseq
        %v2948 = vshrl.u32 %v2947, 7
        %v2949 = vsub.s32 %v2946, %v2948
        %v2950 = vrot.slane %v2936, %v2949
        %v2951 = vcombine.low %v2943, %v2950
        %v2952 = vcombine.low %v2672, %v2680
        %v2953 = vcombine.low %v2679, %v2681
        %v2955 = vunpack.c.l.s4 1983009808
        %v2956 = vunpack.c.0.s8 %v2955
        %v2957 = vlaneseq
        %v2958 = vshrl.u32 %v2957, 7
        %v2959 = vsub.s32 %v2956, %v2958
        %v2960 = vrot.slane %v2952, %v2959
        %v2962 = vunpack.c.l.s4 1983009808
        %v2963 = vunpack.c.0.s8 %v2962
        %v2964 = vlaneseq
        %v2965 = vshrl.u32 %v2964, 7
        %v2966 = vsub.s32 %v2963, %v2965
        %v2967 = vrot.slane %v2953, %v2966
        %v2968 = vcombine.low %v2960, %v2967
        %v2969 = vcombine.low %v2689, %v2697
        %v2970 = vcombine.low %v2696, %v2698
        %v2972 = vunpack.c.l.s4 1983009808
        %v2973 = vunpack.c.0.s8 %v2972
        %v2974 = vlaneseq
        %v2975 = vshrl.u32 %v2974, 7
        %v2976 = vsub.s32 %v2973, %v2975
        %v2977 = vrot.slane %v2969, %v2976
        %v2979 = vunpack.c.l.s4 1983009808
        %v2980 = vunpack.c.0.s8 %v2979
        %v2981 = vlaneseq
        %v2982 = vshrl.u32 %v2981, 7
        %v2983 = vsub.s32 %v2980, %v2982
        %v2984 = vrot.slane %v2970, %v2983
        %v2985 = vcombine.low %v2977, %v2984
        %v2986 = vcombine.low %v2714, %v2713
        %v2987 = vcombine.low %v2715, %v2723
        %v2989 = vunpack.c.l.s4 1983009808
        %v2990 = vunpack.c.0.s8 %v2989
        %v2991 = vlaneseq
        %v2992 = vshrl.u32 %v2991, 7
        %v2993 = vsub.s32 %v2990, %v2992
        %v2994 = vrot.slane %v2986, %v2993
        %v2996 = vunpack.c.l.s4 1983009808
        %v2997 = vunpack.c.0.s8 %v2996
        %v2998 = vlaneseq
        %v2999 = vshrl.u32 %v2998, 7
        %v3000 = vsub.s32 %v2997, %v2999
        %v3001 = vrot.slane %v2987, %v3000
        %v3002 = vcombine.low %v2994, %v3001
        %v3003 = vcombine.low %v2731, %v2730
        %v3004 = vcombine.low %v2732, %v2740
        %v3006 = vunpack.c.l.s4 1983009808
        %v3007 = vunpack.c.0.s8 %v3006
        %v3008 = vlaneseq
        %v3009 = vshrl.u32 %v3008, 7
        %v3010 = vsub.s32 %v3007, %v3009
        %v3011 = vrot.slane %v3003, %v3010
        %v3013 = vunpack.c.l.s4 1983009808
        %v3014 = vunpack.c.0.s8 %v3013
        %v3015 = vlaneseq
        %v3016 = vshrl.u32 %v3015, 7
        %v3017 = vsub.s32 %v3014, %v3016
        %v3018 = vrot.slane %v3004, %v3017
        %v3019 = vcombine.low %v3011, %v3018
        %v3020 = vcombine.low %v2747, %v2748
        %v3021 = vcombine.low %v2756, %v2764
        %v3023 = vunpack.c.l.s4 1983009808
        %v3024 = vunpack.c.0.s8 %v3023
        %v3025 = vlaneseq
        %v3026 = vshrl.u32 %v3025, 7
        %v3027 = vsub.s32 %v3024, %v3026
        %v3028 = vrot.slane %v3020, %v3027
        %v3030 = vunpack.c.l.s4 1983009808
        %v3031 = vunpack.c.0.s8 %v3030
        %v3032 = vlaneseq
        %v3033 = vshrl.u32 %v3032, 7
        %v3034 = vsub.s32 %v3031, %v3033
        %v3035 = vrot.slane %v3021, %v3034
        %v3036 = vcombine.low %v3028, %v3035
        %v3037 = vcombine.low %v2763, %v2765
        %v3038 = vcombine.low %v2773, %v2781
        %v3040 = vunpack.c.l.s4 1983009808
        %v3041 = vunpack.c.0.s8 %v3040
        %v3042 = vlaneseq
        %v3043 = vshrl.u32 %v3042, 7
        %v3044 = vsub.s32 %v3041, %v3043
        %v3045 = vrot.slane %v3037, %v3044
        %v3047 = vunpack.c.l.s4 1983009808
        %v3048 = vunpack.c.0.s8 %v3047
        %v3049 = vlaneseq
        %v3050 = vshrl.u32 %v3049, 7
        %v3051 = vsub.s32 %v3048, %v3050
        %v3052 = vrot.slane %v3038, %v3051
        %v3053 = vcombine.low %v3045, %v3052
        %v3054 = vcombine.low %v2782, %v2790
        %v3055 = vcombine.low %v2798, %v2797
        %v3057 = vunpack.c.l.s4 1983009808
        %v3058 = vunpack.c.0.s8 %v3057
        %v3059 = vlaneseq
        %v3060 = vshrl.u32 %v3059, 7
        %v3061 = vsub.s32 %v3058, %v3060
        %v3062 = vrot.slane %v3054, %v3061
        %v3064 = vunpack.c.l.s4 1983009808
        %v3065 = vunpack.c.0.s8 %v3064
        %v3066 = vlaneseq
        %v3067 = vshrl.u32 %v3066, 7
        %v3068 = vsub.s32 %v3065, %v3067
        %v3069 = vrot.slane %v3055, %v3068
        %v3070 = vcombine.low %v3062, %v3069
        %v3071 = vcombine.low %v2799, %v2807
        %v3072 = vcombine.low %v2815, %v2814
        %v3074 = vunpack.c.l.s4 1983009808
        %v3075 = vunpack.c.0.s8 %v3074
        %v3076 = vlaneseq
        %v3077 = vshrl.u32 %v3076, 7
        %v3078 = vsub.s32 %v3075, %v3077
        %v3079 = vrot.slane %v3071, %v3078
        %v3081 = vunpack.c.l.s4 1983009808
        %v3082 = vunpack.c.0.s8 %v3081
        %v3083 = vlaneseq
        %v3084 = vshrl.u32 %v3083, 7
        %v3085 = vsub.s32 %v3082, %v3084
        %v3086 = vrot.slane %v3072, %v3085
        %v3087 = vcombine.low %v3079, %v3086
        %3104 = vst.msk [vmem:[#allocation3] sm:$0xff] %vm1309, %v2832
        %3105 = vst.msk [vmem:[#allocation3 + $0x8] sm:$0xff] %vm1309, %v2849
        %3106 = vst.msk [vmem:[#allocation3 + $0x10] sm:$0xff] %vm1309, %v2866
        %3107 = vst.msk [vmem:[#allocation3 + $0x18] sm:$0xff] %vm1309, %v2883
        %3108 = vst.msk [vmem:[#allocation3 + $0x20] sm:$0xff] %vm1309, %v2900
        %3109 = vst.msk [vmem:[#allocation3 + $0x28] sm:$0xff] %vm1309, %v2917
        %3110 = vst.msk [vmem:[#allocation3 + $0x30] sm:$0xff] %vm1309, %v2934
        %3111 = vst.msk [vmem:[#allocation3 + $0x38] sm:$0xff] %vm1309, %v2951
        %3112 = vst.msk [vmem:[#allocation3 + $0x40] sm:$0xff] %vm1309, %v2968
        %3113 = vst.msk [vmem:[#allocation3 + $0x48] sm:$0xff] %vm1309, %v2985
        %3114 = vst.msk [vmem:[#allocation3 + $0x50] sm:$0xff] %vm1309, %v3002
        %3115 = vst.msk [vmem:[#allocation3 + $0x58] sm:$0xff] %vm1309, %v3019
        %3116 = vst.msk [vmem:[#allocation3 + $0x60] sm:$0xff] %vm1309, %v3036
        %3117 = vst.msk [vmem:[#allocation3 + $0x68] sm:$0xff] %vm1309, %v3053
        %3118 = vst.msk [vmem:[#allocation3 + $0x70] sm:$0xff] %vm1309, %v3070
        %3119 = vst.msk [vmem:[#allocation3 + $0x78] sm:$0xff] %vm1309, %v3087
        %s3120 = scalar_lea.vmem %s5, 8
        %v3121 = vld [vmem:[%s3120] sm:$0xf]
        %v3122 = vld [vmem:[%s3120 + $0x4] sm:$0x3]
        %v3125 = vunpack.c.l.b16 %v3121
        %v3126 = vunpack.c.l.b16 %v3122
        %v3127 = vpack.c.b16 %v3126, %v3125
        %v3129 = vsel %vm2387, %v3127, 0
        %3131 = vmatprep.subr.bf16.mxu0 0
        %3132 = vmatpush1.bf16.msra.mxu0 0
        %3133 = vmatprep.subr.bf16.mxu0 0
        %3134 = vmatpush1.bf16.msra.mxu0 0
        %3135 = vmatprep.subr.bf16.mxu0 0
        %3136 = vmatpush1.bf16.msra.mxu0 0
        %3137 = vmatprep.subr.bf16.mxu0 0
        %3138 = vmatpush1.bf16.msra.mxu0 0
        %3139 = vmatprep.subr.bf16.mxu0 0
        %3140 = vmatpush1.bf16.msra.mxu0 0
        %3141 = vmatprep.subr.bf16.mxu0 0
        %3142 = vmatpush1.bf16.msra.mxu0 0
        %3143 = vmatprep.subr.bf16.mxu0 0
        %3144 = vmatpush1.bf16.msra.mxu0 0
        %3145 = vmatprep.subr.bf16.mxu0 0
        %3146 = vmatpush1.bf16.msra.mxu0 %v3129
        %3147 = vmatprep.subr.bf16.mxu0 0
        %3148 = vmatpush2.bf16.msra.mxu0 0
        %3149 = vmatprep.subr.bf16.mxu0 0
        %3150 = vmatpush2.bf16.msra.mxu0 0
        %3151 = vmatprep.subr.bf16.mxu0 0
        %3152 = vmatpush2.bf16.msra.mxu0 0
        %3153 = vmatprep.subr.bf16.mxu0 0
        %3154 = vmatpush2.bf16.msra.mxu0 0
        %3155 = vmatprep.subr.bf16.mxu0 0
        %3156 = vmatpush2.bf16.msra.mxu0 0
        %3157 = vmatprep.subr.bf16.mxu0 0
        %3158 = vmatpush2.bf16.msra.mxu0 0
        %3159 = vmatprep.subr.bf16.mxu0 0
        %3160 = vmatpush2.bf16.msra.mxu0 0
        %3161 = vmatprep.subr.bf16.mxu0 0
        %3162 = vmatpush2.bf16.msra.mxu0 0
        %3163 = vmatprep.mubr.bf16.mxu0 0
        %3164 = vmatmul.mubr.bf16.gmra.mxu0 %v2361
        %v3165 = vpop.f32.mrf.mxu0
        %v3166 = vadd.f32 0.0, %v3165
        %v3167 = vpop.f32.mrf.mxu0
        %v3168 = vpop.f32.mrf.mxu0
        %v3169 = vadd.f32 0.0, %v3168
        %v3170 = vpop.f32.mrf.mxu0
        %3171 = vmatprep.mubr.bf16.mxu0 0
        %3172 = vmatmul.mubr.bf16.gmra.mxu0 %v2364
        %v3173 = vpop.f32.mrf.mxu0
        %v3174 = vadd.f32 0.0, %v3173
        %v3175 = vpop.f32.mrf.mxu0
        %v3176 = vpop.f32.mrf.mxu0
        %v3177 = vadd.f32 0.0, %v3176
        %v3178 = vpop.f32.mrf.mxu0
        %3179 = vmatprep.mubr.bf16.mxu0 0
        %3180 = vmatmul.mubr.bf16.gmra.mxu0 %v2367
        %v3181 = vpop.f32.mrf.mxu0
        %v3182 = vadd.f32 0.0, %v3181
        %v3183 = vpop.f32.mrf.mxu0
        %v3184 = vpop.f32.mrf.mxu0
        %v3185 = vadd.f32 0.0, %v3184
        %v3186 = vpop.f32.mrf.mxu0
        %3187 = vmatprep.mubr.bf16.mxu0 0
        %3188 = vmatmul.mubr.bf16.gmra.mxu0 %v2370
        %v3189 = vpop.f32.mrf.mxu0
        %v3190 = vadd.f32 0.0, %v3189
        %v3191 = vpop.f32.mrf.mxu0
        %v3192 = vpop.f32.mrf.mxu0
        %v3193 = vadd.f32 0.0, %v3192
        %v3194 = vpop.f32.mrf.mxu0
        %3195 = vmatprep.mubr.bf16.mxu0 0
        %3196 = vmatmul.mubr.bf16.gmra.mxu0 %v2373
        %v3197 = vpop.f32.mrf.mxu0
        %v3198 = vadd.f32 0.0, %v3197
        %v3199 = vpop.f32.mrf.mxu0
        %v3200 = vpop.f32.mrf.mxu0
        %v3201 = vadd.f32 0.0, %v3200
        %v3202 = vpop.f32.mrf.mxu0
        %3203 = vmatprep.mubr.bf16.mxu0 0
        %3204 = vmatmul.mubr.bf16.gmra.mxu0 %v2376
        %v3205 = vpop.f32.mrf.mxu0
        %v3206 = vadd.f32 0.0, %v3205
        %v3207 = vpop.f32.mrf.mxu0
        %v3208 = vpop.f32.mrf.mxu0
        %v3209 = vadd.f32 0.0, %v3208
        %v3210 = vpop.f32.mrf.mxu0
        %3211 = vmatprep.mubr.bf16.mxu0 0
        %3212 = vmatmul.mubr.bf16.gmra.mxu0 %v2379
        %v3213 = vpop.f32.mrf.mxu0
        %v3214 = vadd.f32 0.0, %v3213
        %v3215 = vpop.f32.mrf.mxu0
        %v3216 = vpop.f32.mrf.mxu0
        %v3217 = vadd.f32 0.0, %v3216
        %v3218 = vpop.f32.mrf.mxu0
        %3219 = vmatprep.mubr.bf16.mxu0 0
        %3220 = vmatmul.mubr.bf16.gmra.mxu0 %v2382
        %v3221 = vpop.f32.mrf.mxu0
        %v3222 = vadd.f32 0.0, %v3221
        %v3223 = vpop.f32.mrf.mxu0
        %v3224 = vpop.f32.mrf.mxu0
        %v3225 = vadd.f32 0.0, %v3224
        %v3226 = vpop.f32.mrf.mxu0
        %3227 = vmatprep.mubr.bf16.mxu0 0
        %3228 = vmatmul.mubr.bf16.gmra.mxu0 %v2385
        %v3229 = vpop.f32.mrf.mxu0
        %v3230 = vadd.f32 0.0, %v3229
        %v3231 = vpop.f32.mrf.mxu0
        %v3232 = vpop.f32.mrf.mxu0
        %v3233 = vadd.f32 0.0, %v3232
        %v3234 = vpop.f32.mrf.mxu0
        %3235 = vdwg.mxu0
        %v3254 = vcombine.high %v3166, %v3166
        %v3256 = vunpack.c.l.s4 1983009808
        %v3257 = vunpack.c.0.s8 %v3256
        %v3258 = vlaneseq
        %v3259 = vshrl.u32 %v3258, 7
        %v3260 = vsub.s32 %v3257, %v3259
        %v3261 = vrot.slane %v3166, %v3260
        %v3263 = vunpack.c.l.s4 1983009808
        %v3264 = vunpack.c.0.s8 %v3263
        %v3265 = vlaneseq
        %v3266 = vshrl.u32 %v3265, 7
        %v3267 = vsub.s32 %v3264, %v3266
        %v3268 = vrot.slane %v3254, %v3267
        %v3269 = vcombine.high %v3261, %v3261
        %v3270 = vcombine.high %v3268, %v3268
        %v3271 = vcombine.high %v3169, %v3169
        %v3273 = vunpack.c.l.s4 1983009808
        %v3274 = vunpack.c.0.s8 %v3273
        %v3275 = vlaneseq
        %v3276 = vshrl.u32 %v3275, 7
        %v3277 = vsub.s32 %v3274, %v3276
        %v3278 = vrot.slane %v3169, %v3277
        %v3280 = vunpack.c.l.s4 1983009808
        %v3281 = vunpack.c.0.s8 %v3280
        %v3282 = vlaneseq
        %v3283 = vshrl.u32 %v3282, 7
        %v3284 = vsub.s32 %v3281, %v3283
        %v3285 = vrot.slane %v3271, %v3284
        %v3286 = vcombine.high %v3278, %v3278
        %v3287 = vcombine.high %v3285, %v3285
        %v3288 = vcombine.high %v3174, %v3174
        %v3290 = vunpack.c.l.s4 1983009808
        %v3291 = vunpack.c.0.s8 %v3290
        %v3292 = vlaneseq
        %v3293 = vshrl.u32 %v3292, 7
        %v3294 = vsub.s32 %v3291, %v3293
        %v3295 = vrot.slane %v3174, %v3294
        %v3297 = vunpack.c.l.s4 1983009808
        %v3298 = vunpack.c.0.s8 %v3297
        %v3299 = vlaneseq
        %v3300 = vshrl.u32 %v3299, 7
        %v3301 = vsub.s32 %v3298, %v3300
        %v3302 = vrot.slane %v3288, %v3301
        %v3303 = vcombine.high %v3295, %v3295
        %v3304 = vcombine.high %v3302, %v3302
        %v3305 = vcombine.high %v3177, %v3177
        %v3307 = vunpack.c.l.s4 1983009808
        %v3308 = vunpack.c.0.s8 %v3307
        %v3309 = vlaneseq
        %v3310 = vshrl.u32 %v3309, 7
        %v3311 = vsub.s32 %v3308, %v3310
        %v3312 = vrot.slane %v3177, %v3311
        %v3314 = vunpack.c.l.s4 1983009808
        %v3315 = vunpack.c.0.s8 %v3314
        %v3316 = vlaneseq
        %v3317 = vshrl.u32 %v3316, 7
        %v3318 = vsub.s32 %v3315, %v3317
        %v3319 = vrot.slane %v3305, %v3318
        %v3320 = vcombine.high %v3312, %v3312
        %v3321 = vcombine.high %v3319, %v3319
        %v3322 = vcombine.high %v3182, %v3182
        %v3324 = vunpack.c.l.s4 1983009808
        %v3325 = vunpack.c.0.s8 %v3324
        %v3326 = vlaneseq
        %v3327 = vshrl.u32 %v3326, 7
        %v3328 = vsub.s32 %v3325, %v3327
        %v3329 = vrot.slane %v3182, %v3328
        %v3331 = vunpack.c.l.s4 1983009808
        %v3332 = vunpack.c.0.s8 %v3331
        %v3333 = vlaneseq
        %v3334 = vshrl.u32 %v3333, 7
        %v3335 = vsub.s32 %v3332, %v3334
        %v3336 = vrot.slane %v3322, %v3335
        %v3337 = vcombine.high %v3329, %v3329
        %v3338 = vcombine.high %v3336, %v3336
        %v3339 = vcombine.high %v3185, %v3185
        %v3341 = vunpack.c.l.s4 1983009808
        %v3342 = vunpack.c.0.s8 %v3341
        %v3343 = vlaneseq
        %v3344 = vshrl.u32 %v3343, 7
        %v3345 = vsub.s32 %v3342, %v3344
        %v3346 = vrot.slane %v3185, %v3345
        %v3348 = vunpack.c.l.s4 1983009808
        %v3349 = vunpack.c.0.s8 %v3348
        %v3350 = vlaneseq
        %v3351 = vshrl.u32 %v3350, 7
        %v3352 = vsub.s32 %v3349, %v3351
        %v3353 = vrot.slane %v3339, %v3352
        %v3354 = vcombine.high %v3346, %v3346
        %v3355 = vcombine.high %v3353, %v3353
        %v3356 = vcombine.high %v3190, %v3190
        %v3358 = vunpack.c.l.s4 1983009808
        %v3359 = vunpack.c.0.s8 %v3358
        %v3360 = vlaneseq
        %v3361 = vshrl.u32 %v3360, 7
        %v3362 = vsub.s32 %v3359, %v3361
        %v3363 = vrot.slane %v3190, %v3362
        %v3365 = vunpack.c.l.s4 1983009808
        %v3366 = vunpack.c.0.s8 %v3365
        %v3367 = vlaneseq
        %v3368 = vshrl.u32 %v3367, 7
        %v3369 = vsub.s32 %v3366, %v3368
        %v3370 = vrot.slane %v3356, %v3369
        %v3371 = vcombine.high %v3363, %v3363
        %v3372 = vcombine.high %v3370, %v3370
        %v3373 = vcombine.high %v3193, %v3193
        %v3375 = vunpack.c.l.s4 1983009808
        %v3376 = vunpack.c.0.s8 %v3375
        %v3377 = vlaneseq
        %v3378 = vshrl.u32 %v3377, 7
        %v3379 = vsub.s32 %v3376, %v3378
        %v3380 = vrot.slane %v3193, %v3379
        %v3382 = vunpack.c.l.s4 1983009808
        %v3383 = vunpack.c.0.s8 %v3382
        %v3384 = vlaneseq
        %v3385 = vshrl.u32 %v3384, 7
        %v3386 = vsub.s32 %v3383, %v3385
        %v3387 = vrot.slane %v3373, %v3386
        %v3388 = vcombine.high %v3380, %v3380
        %v3389 = vcombine.high %v3387, %v3387
        %v3390 = vcombine.high %v3198, %v3198
        %v3392 = vunpack.c.l.s4 1983009808
        %v3393 = vunpack.c.0.s8 %v3392
        %v3394 = vlaneseq
        %v3395 = vshrl.u32 %v3394, 7
        %v3396 = vsub.s32 %v3393, %v3395
        %v3397 = vrot.slane %v3198, %v3396
        %v3399 = vunpack.c.l.s4 1983009808
        %v3400 = vunpack.c.0.s8 %v3399
        %v3401 = vlaneseq
        %v3402 = vshrl.u32 %v3401, 7
        %v3403 = vsub.s32 %v3400, %v3402
        %v3404 = vrot.slane %v3390, %v3403
        %v3405 = vcombine.high %v3397, %v3397
        %v3406 = vcombine.high %v3404, %v3404
        %v3407 = vcombine.high %v3201, %v3201
        %v3409 = vunpack.c.l.s4 1983009808
        %v3410 = vunpack.c.0.s8 %v3409
        %v3411 = vlaneseq
        %v3412 = vshrl.u32 %v3411, 7
        %v3413 = vsub.s32 %v3410, %v3412
        %v3414 = vrot.slane %v3201, %v3413
        %v3416 = vunpack.c.l.s4 1983009808
        %v3417 = vunpack.c.0.s8 %v3416
        %v3418 = vlaneseq
        %v3419 = vshrl.u32 %v3418, 7
        %v3420 = vsub.s32 %v3417, %v3419
        %v3421 = vrot.slane %v3407, %v3420
        %v3422 = vcombine.high %v3414, %v3414
        %v3423 = vcombine.high %v3421, %v3421
        %v3424 = vcombine.high %v3206, %v3206
        %v3426 = vunpack.c.l.s4 1983009808
        %v3427 = vunpack.c.0.s8 %v3426
        %v3428 = vlaneseq
        %v3429 = vshrl.u32 %v3428, 7
        %v3430 = vsub.s32 %v3427, %v3429
        %v3431 = vrot.slane %v3206, %v3430
        %v3433 = vunpack.c.l.s4 1983009808
        %v3434 = vunpack.c.0.s8 %v3433
        %v3435 = vlaneseq
        %v3436 = vshrl.u32 %v3435, 7
        %v3437 = vsub.s32 %v3434, %v3436
        %v3438 = vrot.slane %v3424, %v3437
        %v3439 = vcombine.high %v3431, %v3431
        %v3440 = vcombine.high %v3438, %v3438
        %v3441 = vcombine.high %v3209, %v3209
        %v3443 = vunpack.c.l.s4 1983009808
        %v3444 = vunpack.c.0.s8 %v3443
        %v3445 = vlaneseq
        %v3446 = vshrl.u32 %v3445, 7
        %v3447 = vsub.s32 %v3444, %v3446
        %v3448 = vrot.slane %v3209, %v3447
        %v3450 = vunpack.c.l.s4 1983009808
        %v3451 = vunpack.c.0.s8 %v3450
        %v3452 = vlaneseq
        %v3453 = vshrl.u32 %v3452, 7
        %v3454 = vsub.s32 %v3451, %v3453
        %v3455 = vrot.slane %v3441, %v3454
        %v3456 = vcombine.high %v3448, %v3448
        %v3457 = vcombine.high %v3455, %v3455
        %v3458 = vcombine.high %v3214, %v3214
        %v3460 = vunpack.c.l.s4 1983009808
        %v3461 = vunpack.c.0.s8 %v3460
        %v3462 = vlaneseq
        %v3463 = vshrl.u32 %v3462, 7
        %v3464 = vsub.s32 %v3461, %v3463
        %v3465 = vrot.slane %v3214, %v3464
        %v3467 = vunpack.c.l.s4 1983009808
        %v3468 = vunpack.c.0.s8 %v3467
        %v3469 = vlaneseq
        %v3470 = vshrl.u32 %v3469, 7
        %v3471 = vsub.s32 %v3468, %v3470
        %v3472 = vrot.slane %v3458, %v3471
        %v3473 = vcombine.high %v3465, %v3465
        %v3474 = vcombine.high %v3472, %v3472
        %v3475 = vcombine.high %v3217, %v3217
        %v3477 = vunpack.c.l.s4 1983009808
        %v3478 = vunpack.c.0.s8 %v3477
        %v3479 = vlaneseq
        %v3480 = vshrl.u32 %v3479, 7
        %v3481 = vsub.s32 %v3478, %v3480
        %v3482 = vrot.slane %v3217, %v3481
        %v3484 = vunpack.c.l.s4 1983009808
        %v3485 = vunpack.c.0.s8 %v3484
        %v3486 = vlaneseq
        %v3487 = vshrl.u32 %v3486, 7
        %v3488 = vsub.s32 %v3485, %v3487
        %v3489 = vrot.slane %v3475, %v3488
        %v3490 = vcombine.high %v3482, %v3482
        %v3491 = vcombine.high %v3489, %v3489
        %v3492 = vcombine.high %v3222, %v3222
        %v3494 = vunpack.c.l.s4 1983009808
        %v3495 = vunpack.c.0.s8 %v3494
        %v3496 = vlaneseq
        %v3497 = vshrl.u32 %v3496, 7
        %v3498 = vsub.s32 %v3495, %v3497
        %v3499 = vrot.slane %v3222, %v3498
        %v3501 = vunpack.c.l.s4 1983009808
        %v3502 = vunpack.c.0.s8 %v3501
        %v3503 = vlaneseq
        %v3504 = vshrl.u32 %v3503, 7
        %v3505 = vsub.s32 %v3502, %v3504
        %v3506 = vrot.slane %v3492, %v3505
        %v3507 = vcombine.high %v3499, %v3499
        %v3508 = vcombine.high %v3506, %v3506
        %v3509 = vcombine.high %v3225, %v3225
        %v3511 = vunpack.c.l.s4 1983009808
        %v3512 = vunpack.c.0.s8 %v3511
        %v3513 = vlaneseq
        %v3514 = vshrl.u32 %v3513, 7
        %v3515 = vsub.s32 %v3512, %v3514
        %v3516 = vrot.slane %v3225, %v3515
        %v3518 = vunpack.c.l.s4 1983009808
        %v3519 = vunpack.c.0.s8 %v3518
        %v3520 = vlaneseq
        %v3521 = vshrl.u32 %v3520, 7
        %v3522 = vsub.s32 %v3519, %v3521
        %v3523 = vrot.slane %v3509, %v3522
        %v3524 = vcombine.high %v3516, %v3516
        %v3525 = vcombine.high %v3523, %v3523
        %v3526 = vcombine.high %v3230, %v3230
        %v3528 = vunpack.c.l.s4 1983009808
        %v3529 = vunpack.c.0.s8 %v3528
        %v3530 = vlaneseq
        %v3531 = vshrl.u32 %v3530, 7
        %v3532 = vsub.s32 %v3529, %v3531
        %v3533 = vrot.slane %v3230, %v3532
        %v3535 = vunpack.c.l.s4 1983009808
        %v3536 = vunpack.c.0.s8 %v3535
        %v3537 = vlaneseq
        %v3538 = vshrl.u32 %v3537, 7
        %v3539 = vsub.s32 %v3536, %v3538
        %v3540 = vrot.slane %v3526, %v3539
        %v3541 = vcombine.high %v3533, %v3533
        %v3542 = vcombine.high %v3540, %v3540
        %v3543 = vcombine.high %v3233, %v3233
        %v3545 = vunpack.c.l.s4 1983009808
        %v3546 = vunpack.c.0.s8 %v3545
        %v3547 = vlaneseq
        %v3548 = vshrl.u32 %v3547, 7
        %v3549 = vsub.s32 %v3546, %v3548
        %v3550 = vrot.slane %v3233, %v3549
        %v3552 = vunpack.c.l.s4 1983009808
        %v3553 = vunpack.c.0.s8 %v3552
        %v3554 = vlaneseq
        %v3555 = vshrl.u32 %v3554, 7
        %v3556 = vsub.s32 %v3553, %v3555
        %v3557 = vrot.slane %v3543, %v3556
        %v3558 = vcombine.high %v3550, %v3550
        %v3559 = vcombine.high %v3557, %v3557
        %v3560 = vld [vmem:[#allocation3] sm:$0xff]
        %v3561 = vld [vmem:[#allocation3 + $0x8] sm:$0xff]
        %v3562 = vld [vmem:[#allocation3 + $0x10] sm:$0xff]
        %v3563 = vld [vmem:[#allocation3 + $0x18] sm:$0xff]
        %v3564 = vld [vmem:[#allocation3 + $0x20] sm:$0xff]
        %v3565 = vld [vmem:[#allocation3 + $0x28] sm:$0xff]
        %v3566 = vld [vmem:[#allocation3 + $0x30] sm:$0xff]
        %v3567 = vld [vmem:[#allocation3 + $0x38] sm:$0xff]
        %v3568 = vld [vmem:[#allocation3 + $0x40] sm:$0xff]
        %v3569 = vld [vmem:[#allocation3 + $0x48] sm:$0xff]
        %v3570 = vld [vmem:[#allocation3 + $0x50] sm:$0xff]
        %v3571 = vld [vmem:[#allocation3 + $0x58] sm:$0xff]
        %v3572 = vld [vmem:[#allocation3 + $0x60] sm:$0xff]
        %v3573 = vld [vmem:[#allocation3 + $0x68] sm:$0xff]
        %v3574 = vld [vmem:[#allocation3 + $0x70] sm:$0xff]
        %v3575 = vld [vmem:[#allocation3 + $0x78] sm:$0xff]
        %v3576 = vcombine.low %v3261, %v3269
        %v3577 = vcombine.low %v3268, %v3270
        %v3579 = vunpack.c.l.s4 1983009808
        %v3580 = vunpack.c.0.s8 %v3579
        %v3581 = vlaneseq
        %v3582 = vshrl.u32 %v3581, 7
        %v3583 = vsub.s32 %v3580, %v3582
        %v3584 = vrot.slane %v3576, %v3583
        %v3586 = vunpack.c.l.s4 1983009808
        %v3587 = vunpack.c.0.s8 %v3586
        %v3588 = vlaneseq
        %v3589 = vshrl.u32 %v3588, 7
        %v3590 = vsub.s32 %v3587, %v3589
        %v3591 = vrot.slane %v3577, %v3590
        %v3592 = vcombine.low %v3584, %v3591
        %v3593 = vcombine.low %v3278, %v3286
        %v3594 = vcombine.low %v3285, %v3287
        %v3596 = vunpack.c.l.s4 1983009808
        %v3597 = vunpack.c.0.s8 %v3596
        %v3598 = vlaneseq
        %v3599 = vshrl.u32 %v3598, 7
        %v3600 = vsub.s32 %v3597, %v3599
        %v3601 = vrot.slane %v3593, %v3600
        %v3603 = vunpack.c.l.s4 1983009808
        %v3604 = vunpack.c.0.s8 %v3603
        %v3605 = vlaneseq
        %v3606 = vshrl.u32 %v3605, 7
        %v3607 = vsub.s32 %v3604, %v3606
        %v3608 = vrot.slane %v3594, %v3607
        %v3609 = vcombine.low %v3601, %v3608
        %v3611 = vunpack.c.l.s4 1983009808
        %v3612 = vunpack.c.0.s8 %v3611
        %v3613 = vlaneseq
        %v3614 = vshrl.u32 %v3613, 7
        %v3615 = vsub.s32 %v3612, %v3614
        %v3616 = vrot.slane %v3295, %v3615
        %v3617 = vcombine.low %v3303, %v3302
        %v3618 = vcombine.low %v3304, %v3312
        %v3620 = vunpack.c.l.s4 1983009808
        %v3621 = vunpack.c.0.s8 %v3620
        %v3622 = vlaneseq
        %v3623 = vshrl.u32 %v3622, 7
        %v3624 = vsub.s32 %v3621, %v3623
        %v3625 = vrot.slane %v3617, %v3624
        %v3627 = vunpack.c.l.s4 1983009808
        %v3628 = vunpack.c.0.s8 %v3627
        %v3629 = vlaneseq
        %v3630 = vshrl.u32 %v3629, 7
        %v3631 = vsub.s32 %v3628, %v3630
        %v3632 = vrot.slane %v3618, %v3631
        %v3633 = vcombine.low %v3625, %v3632
        %v3634 = vcombine.low %v3320, %v3319
        %v3635 = vcombine.low %v3321, %v3329
        %v3637 = vunpack.c.l.s4 1983009808
        %v3638 = vunpack.c.0.s8 %v3637
        %v3639 = vlaneseq
        %v3640 = vshrl.u32 %v3639, 7
        %v3641 = vsub.s32 %v3638, %v3640
        %v3642 = vrot.slane %v3634, %v3641
        %v3644 = vunpack.c.l.s4 1983009808
        %v3645 = vunpack.c.0.s8 %v3644
        %v3646 = vlaneseq
        %v3647 = vshrl.u32 %v3646, 7
        %v3648 = vsub.s32 %v3645, %v3647
        %v3649 = vrot.slane %v3635, %v3648
        %v3650 = vcombine.low %v3642, %v3649
        %v3652 = vunpack.c.l.s4 1983009808
        %v3653 = vunpack.c.0.s8 %v3652
        %v3654 = vlaneseq
        %v3655 = vshrl.u32 %v3654, 7
        %v3656 = vsub.s32 %v3653, %v3655
        %v3657 = vrot.slane %v3337, %v3656
        %v3658 = vcombine.low %v3336, %v3338
        %v3659 = vcombine.low %v3346, %v3354
        %v3661 = vunpack.c.l.s4 1983009808
        %v3662 = vunpack.c.0.s8 %v3661
        %v3663 = vlaneseq
        %v3664 = vshrl.u32 %v3663, 7
        %v3665 = vsub.s32 %v3662, %v3664
        %v3666 = vrot.slane %v3658, %v3665
        %v3668 = vunpack.c.l.s4 1983009808
        %v3669 = vunpack.c.0.s8 %v3668
        %v3670 = vlaneseq
        %v3671 = vshrl.u32 %v3670, 7
        %v3672 = vsub.s32 %v3669, %v3671
        %v3673 = vrot.slane %v3659, %v3672
        %v3674 = vcombine.low %v3666, %v3673
        %v3675 = vcombine.low %v3353, %v3355
        %v3676 = vcombine.low %v3363, %v3371
        %v3678 = vunpack.c.l.s4 1983009808
        %v3679 = vunpack.c.0.s8 %v3678
        %v3680 = vlaneseq
        %v3681 = vshrl.u32 %v3680, 7
        %v3682 = vsub.s32 %v3679, %v3681
        %v3683 = vrot.slane %v3675, %v3682
        %v3685 = vunpack.c.l.s4 1983009808
        %v3686 = vunpack.c.0.s8 %v3685
        %v3687 = vlaneseq
        %v3688 = vshrl.u32 %v3687, 7
        %v3689 = vsub.s32 %v3686, %v3688
        %v3690 = vrot.slane %v3676, %v3689
        %v3691 = vcombine.low %v3683, %v3690
        %v3693 = vunpack.c.l.s4 1983009808
        %v3694 = vunpack.c.0.s8 %v3693
        %v3695 = vlaneseq
        %v3696 = vshrl.u32 %v3695, 7
        %v3697 = vsub.s32 %v3694, %v3696
        %v3698 = vrot.slane %v3370, %v3697
        %v3699 = vcombine.low %v3372, %v3380
        %v3700 = vcombine.low %v3388, %v3387
        %v3702 = vunpack.c.l.s4 1983009808
        %v3703 = vunpack.c.0.s8 %v3702
        %v3704 = vlaneseq
        %v3705 = vshrl.u32 %v3704, 7
        %v3706 = vsub.s32 %v3703, %v3705
        %v3707 = vrot.slane %v3699, %v3706
        %v3709 = vunpack.c.l.s4 1983009808
        %v3710 = vunpack.c.0.s8 %v3709
        %v3711 = vlaneseq
        %v3712 = vshrl.u32 %v3711, 7
        %v3713 = vsub.s32 %v3710, %v3712
        %v3714 = vrot.slane %v3700, %v3713
        %v3715 = vcombine.low %v3707, %v3714
        %v3716 = vcombine.low %v3389, %v3397
        %v3717 = vcombine.low %v3405, %v3404
        %v3719 = vunpack.c.l.s4 1983009808
        %v3720 = vunpack.c.0.s8 %v3719
        %v3721 = vlaneseq
        %v3722 = vshrl.u32 %v3721, 7
        %v3723 = vsub.s32 %v3720, %v3722
        %v3724 = vrot.slane %v3716, %v3723
        %v3726 = vunpack.c.l.s4 1983009808
        %v3727 = vunpack.c.0.s8 %v3726
        %v3728 = vlaneseq
        %v3729 = vshrl.u32 %v3728, 7
        %v3730 = vsub.s32 %v3727, %v3729
        %v3731 = vrot.slane %v3717, %v3730
        %v3732 = vcombine.low %v3724, %v3731
        %v3734 = vunpack.c.l.s4 1983009808
        %v3735 = vunpack.c.0.s8 %v3734
        %v3736 = vlaneseq
        %v3737 = vshrl.u32 %v3736, 7
        %v3738 = vsub.s32 %v3735, %v3737
        %v3739 = vrot.slane %v3406, %v3738
        %v3740 = vcombine.low %v3414, %v3422
        %v3741 = vcombine.low %v3421, %v3423
        %v3743 = vunpack.c.l.s4 1983009808
        %v3744 = vunpack.c.0.s8 %v3743
        %v3745 = vlaneseq
        %v3746 = vshrl.u32 %v3745, 7
        %v3747 = vsub.s32 %v3744, %v3746
        %v3748 = vrot.slane %v3740, %v3747
        %v3750 = vunpack.c.l.s4 1983009808
        %v3751 = vunpack.c.0.s8 %v3750
        %v3752 = vlaneseq
        %v3753 = vshrl.u32 %v3752, 7
        %v3754 = vsub.s32 %v3751, %v3753
        %v3755 = vrot.slane %v3741, %v3754
        %v3756 = vcombine.low %v3748, %v3755
        %v3757 = vcombine.low %v3431, %v3439
        %v3758 = vcombine.low %v3438, %v3440
        %v3760 = vunpack.c.l.s4 1983009808
        %v3761 = vunpack.c.0.s8 %v3760
        %v3762 = vlaneseq
        %v3763 = vshrl.u32 %v3762, 7
        %v3764 = vsub.s32 %v3761, %v3763
        %v3765 = vrot.slane %v3757, %v3764
        %v3767 = vunpack.c.l.s4 1983009808
        %v3768 = vunpack.c.0.s8 %v3767
        %v3769 = vlaneseq
        %v3770 = vshrl.u32 %v3769, 7
        %v3771 = vsub.s32 %v3768, %v3770
        %v3772 = vrot.slane %v3758, %v3771
        %v3773 = vcombine.low %v3765, %v3772
        %v3775 = vunpack.c.l.s4 1983009808
        %v3776 = vunpack.c.0.s8 %v3775
        %v3777 = vlaneseq
        %v3778 = vshrl.u32 %v3777, 7
        %v3779 = vsub.s32 %v3776, %v3778
        %v3780 = vrot.slane %v3448, %v3779
        %v3781 = vcombine.low %v3456, %v3455
        %v3782 = vcombine.low %v3457, %v3465
        %v3784 = vunpack.c.l.s4 1983009808
        %v3785 = vunpack.c.0.s8 %v3784
        %v3786 = vlaneseq
        %v3787 = vshrl.u32 %v3786, 7
        %v3788 = vsub.s32 %v3785, %v3787
        %v3789 = vrot.slane %v3781, %v3788
        %v3791 = vunpack.c.l.s4 1983009808
        %v3792 = vunpack.c.0.s8 %v3791
        %v3793 = vlaneseq
        %v3794 = vshrl.u32 %v3793, 7
        %v3795 = vsub.s32 %v3792, %v3794
        %v3796 = vrot.slane %v3782, %v3795
        %v3797 = vcombine.low %v3789, %v3796
        %v3798 = vcombine.low %v3473, %v3472
        %v3799 = vcombine.low %v3474, %v3482
        %v3801 = vunpack.c.l.s4 1983009808
        %v3802 = vunpack.c.0.s8 %v3801
        %v3803 = vlaneseq
        %v3804 = vshrl.u32 %v3803, 7
        %v3805 = vsub.s32 %v3802, %v3804
        %v3806 = vrot.slane %v3798, %v3805
        %v3808 = vunpack.c.l.s4 1983009808
        %v3809 = vunpack.c.0.s8 %v3808
        %v3810 = vlaneseq
        %v3811 = vshrl.u32 %v3810, 7
        %v3812 = vsub.s32 %v3809, %v3811
        %v3813 = vrot.slane %v3799, %v3812
        %v3814 = vcombine.low %v3806, %v3813
        %v3816 = vunpack.c.l.s4 1983009808
        %v3817 = vunpack.c.0.s8 %v3816
        %v3818 = vlaneseq
        %v3819 = vshrl.u32 %v3818, 7
        %v3820 = vsub.s32 %v3817, %v3819
        %v3821 = vrot.slane %v3490, %v3820
        %v3822 = vcombine.low %v3489, %v3491
        %v3823 = vcombine.low %v3499, %v3507
        %v3825 = vunpack.c.l.s4 1983009808
        %v3826 = vunpack.c.0.s8 %v3825
        %v3827 = vlaneseq
        %v3828 = vshrl.u32 %v3827, 7
        %v3829 = vsub.s32 %v3826, %v3828
        %v3830 = vrot.slane %v3822, %v3829
        %v3832 = vunpack.c.l.s4 1983009808
        %v3833 = vunpack.c.0.s8 %v3832
        %v3834 = vlaneseq
        %v3835 = vshrl.u32 %v3834, 7
        %v3836 = vsub.s32 %v3833, %v3835
        %v3837 = vrot.slane %v3823, %v3836
        %v3838 = vcombine.low %v3830, %v3837
        %v3839 = vcombine.low %v3506, %v3508
        %v3840 = vcombine.low %v3516, %v3524
        %v3842 = vunpack.c.l.s4 1983009808
        %v3843 = vunpack.c.0.s8 %v3842
        %v3844 = vlaneseq
        %v3845 = vshrl.u32 %v3844, 7
        %v3846 = vsub.s32 %v3843, %v3845
        %v3847 = vrot.slane %v3839, %v3846
        %v3849 = vunpack.c.l.s4 1983009808
        %v3850 = vunpack.c.0.s8 %v3849
        %v3851 = vlaneseq
        %v3852 = vshrl.u32 %v3851, 7
        %v3853 = vsub.s32 %v3850, %v3852
        %v3854 = vrot.slane %v3840, %v3853
        %v3855 = vcombine.low %v3847, %v3854
        %v3857 = vunpack.c.l.s4 1983009808
        %v3858 = vunpack.c.0.s8 %v3857
        %v3859 = vlaneseq
        %v3860 = vshrl.u32 %v3859, 7
        %v3861 = vsub.s32 %v3858, %v3860
        %v3862 = vrot.slane %v3523, %v3861
        %v3863 = vcombine.low %v3525, %v3533
        %v3864 = vcombine.low %v3541, %v3540
        %v3866 = vunpack.c.l.s4 1983009808
        %v3867 = vunpack.c.0.s8 %v3866
        %v3868 = vlaneseq
        %v3869 = vshrl.u32 %v3868, 7
        %v3870 = vsub.s32 %v3867, %v3869
        %v3871 = vrot.slane %v3863, %v3870
        %v3873 = vunpack.c.l.s4 1983009808
        %v3874 = vunpack.c.0.s8 %v3873
        %v3875 = vlaneseq
        %v3876 = vshrl.u32 %v3875, 7
        %v3877 = vsub.s32 %v3874, %v3876
        %v3878 = vrot.slane %v3864, %v3877
        %v3879 = vcombine.low %v3871, %v3878
        %v3880 = vcombine.low %v3542, %v3550
        %v3881 = vcombine.low %v3558, %v3557
        %v3883 = vunpack.c.l.s4 1983009808
        %v3884 = vunpack.c.0.s8 %v3883
        %v3885 = vlaneseq
        %v3886 = vshrl.u32 %v3885, 7
        %v3887 = vsub.s32 %v3884, %v3886
        %v3888 = vrot.slane %v3880, %v3887
        %v3890 = vunpack.c.l.s4 1983009808
        %v3891 = vunpack.c.0.s8 %v3890
        %v3892 = vlaneseq
        %v3893 = vshrl.u32 %v3892, 7
        %v3894 = vsub.s32 %v3891, %v3893
        %v3895 = vrot.slane %v3881, %v3894
        %v3896 = vcombine.low %v3888, %v3895
        %v3898 = vunpack.c.l.s4 1983009808
        %v3899 = vunpack.c.0.s8 %v3898
        %v3900 = vlaneseq
        %v3901 = vshrl.u32 %v3900, 7
        %v3902 = vsub.s32 %v3899, %v3901
        %v3903 = vrot.slane %v3559, %v3902
        %vm3904 = vcmask 1046528
        %v3905 = vrot.slane %v3592, 1
        %v3906 = vrot.slane %v3609, 1
        %v3907 = vsel %vm3904, %v3905, %v3906
        %v3908 = vrot.slane %v3616, 1
        %v3909 = vsel %vm3904, %v3906, %v3908
        %v3910 = vrot.slane %v3633, 1
        %v3911 = vrot.slane %v3650, 1
        %v3912 = vsel %vm3904, %v3910, %v3911
        %v3913 = vrot.slane %v3657, 1
        %v3914 = vsel %vm3904, %v3911, %v3913
        %v3915 = vrot.slane %v3674, 1
        %v3916 = vrot.slane %v3691, 1
        %v3917 = vsel %vm3904, %v3915, %v3916
        %v3918 = vrot.slane %v3698, 1
        %v3919 = vsel %vm3904, %v3916, %v3918
        %v3920 = vrot.slane %v3715, 1
        %v3921 = vrot.slane %v3732, 1
        %v3922 = vsel %vm3904, %v3920, %v3921
        %v3923 = vrot.slane %v3739, 1
        %v3924 = vsel %vm3904, %v3921, %v3923
        %v3925 = vrot.slane %v3756, 1
        %v3926 = vrot.slane %v3773, 1
        %v3927 = vsel %vm3904, %v3925, %v3926
        %v3928 = vrot.slane %v3780, 1
        %v3929 = vsel %vm3904, %v3926, %v3928
        %v3930 = vrot.slane %v3797, 1
        %v3931 = vrot.slane %v3814, 1
        %v3932 = vsel %vm3904, %v3930, %v3931
        %v3933 = vrot.slane %v3821, 1
        %v3934 = vsel %vm3904, %v3931, %v3933
        %v3935 = vrot.slane %v3838, 1
        %v3936 = vrot.slane %v3855, 1
        %v3937 = vsel %vm3904, %v3935, %v3936
        %v3938 = vrot.slane %v3862, 1
        %v3939 = vsel %vm3904, %v3936, %v3938
        %v3940 = vrot.slane %v3879, 1
        %v3941 = vrot.slane %v3896, 1
        %v3942 = vsel %vm3904, %v3940, %v3941
        %v3943 = vrot.slane %v3903, 1
        %v3944 = vsel %vm3904, %v3941, %v3943
        %v3961 = vadd.f32 %v3560, %v3907
        %v3962 = vadd.f32 %v3561, %v3909
        %v3963 = vadd.f32 %v3562, %v3912
        %v3964 = vadd.f32 %v3563, %v3914
        %v3965 = vadd.f32 %v3564, %v3917
        %v3966 = vadd.f32 %v3565, %v3919
        %v3967 = vadd.f32 %v3566, %v3922
        %v3968 = vadd.f32 %v3567, %v3924
        %v3969 = vadd.f32 %v3568, %v3927
        %v3970 = vadd.f32 %v3569, %v3929
        %v3971 = vadd.f32 %v3570, %v3932
        %v3972 = vadd.f32 %v3571, %v3934
        %v3973 = vadd.f32 %v3572, %v3937
        %v3974 = vadd.f32 %v3573, %v3939
        %v3975 = vadd.f32 %v3574, %v3942
        %v3976 = vadd.f32 %v3575, %v3944
        %3977 = vst.msk [vmem:[#allocation3] sm:$0xff] %vm1309, %v3961
        %3978 = vst.msk [vmem:[#allocation3 + $0x8] sm:$0xff] %vm1309, %v3962
        %3979 = vst.msk [vmem:[#allocation3 + $0x10] sm:$0xff] %vm1309, %v3963
        %3980 = vst.msk [vmem:[#allocation3 + $0x18] sm:$0xff] %vm1309, %v3964
        %3981 = vst.msk [vmem:[#allocation3 + $0x20] sm:$0xff] %vm1309, %v3965
        %3982 = vst.msk [vmem:[#allocation3 + $0x28] sm:$0xff] %vm1309, %v3966
        %3983 = vst.msk [vmem:[#allocation3 + $0x30] sm:$0xff] %vm1309, %v3967
        %3984 = vst.msk [vmem:[#allocation3 + $0x38] sm:$0xff] %vm1309, %v3968
        %3985 = vst.msk [vmem:[#allocation3 + $0x40] sm:$0xff] %vm1309, %v3969
        %3986 = vst.msk [vmem:[#allocation3 + $0x48] sm:$0xff] %vm1309, %v3970
        %3987 = vst.msk [vmem:[#allocation3 + $0x50] sm:$0xff] %vm1309, %v3971
        %3988 = vst.msk [vmem:[#allocation3 + $0x58] sm:$0xff] %vm1309, %v3972
        %3989 = vst.msk [vmem:[#allocation3 + $0x60] sm:$0xff] %vm1309, %v3973
        %3990 = vst.msk [vmem:[#allocation3 + $0x68] sm:$0xff] %vm1309, %v3974
        %3991 = vst.msk [vmem:[#allocation3 + $0x70] sm:$0xff] %vm1309, %v3975
        %3992 = vst.msk [vmem:[#allocation3 + $0x78] sm:$0xff] %vm1309, %v3976
        %s3993 = scalar_lea.vmem %s5, 16
        %v3994 = vld [vmem:[%s3993] sm:$0xf]
        %v3995 = vld [vmem:[%s3993 + $0x4] sm:$0x3]
        %v3998 = vunpack.c.l.b16 %v3994
        %v3999 = vunpack.c.l.b16 %v3995
        %v4000 = vpack.c.b16 %v3999, %v3998
        %v4002 = vsel %vm2387, %v4000, 0
        %4004 = vmatprep.subr.bf16.mxu0 0
        %4005 = vmatpush1.bf16.msra.mxu0 0
        %4006 = vmatprep.subr.bf16.mxu0 0
        %4007 = vmatpush1.bf16.msra.mxu0 0
        %4008 = vmatprep.subr.bf16.mxu0 0
        %4009 = vmatpush1.bf16.msra.mxu0 0
        %4010 = vmatprep.subr.bf16.mxu0 0
        %4011 = vmatpush1.bf16.msra.mxu0 0
        %4012 = vmatprep.subr.bf16.mxu0 0
        %4013 = vmatpush1.bf16.msra.mxu0 0
        %4014 = vmatprep.subr.bf16.mxu0 0
        %4015 = vmatpush1.bf16.msra.mxu0 0
        %4016 = vmatprep.subr.bf16.mxu0 0
        %4017 = vmatpush1.bf16.msra.mxu0 0
        %4018 = vmatprep.subr.bf16.mxu0 0
        %4019 = vmatpush1.bf16.msra.mxu0 %v4002
        %4020 = vmatprep.subr.bf16.mxu0 0
        %4021 = vmatpush2.bf16.msra.mxu0 0
        %4022 = vmatprep.subr.bf16.mxu0 0
        %4023 = vmatpush2.bf16.msra.mxu0 0
        %4024 = vmatprep.subr.bf16.mxu0 0
        %4025 = vmatpush2.bf16.msra.mxu0 0
        %4026 = vmatprep.subr.bf16.mxu0 0
        %4027 = vmatpush2.bf16.msra.mxu0 0
        %4028 = vmatprep.subr.bf16.mxu0 0
        %4029 = vmatpush2.bf16.msra.mxu0 0
        %4030 = vmatprep.subr.bf16.mxu0 0
        %4031 = vmatpush2.bf16.msra.mxu0 0
        %4032 = vmatprep.subr.bf16.mxu0 0
        %4033 = vmatpush2.bf16.msra.mxu0 0
        %4034 = vmatprep.subr.bf16.mxu0 0
        %4035 = vmatpush2.bf16.msra.mxu0 0
        %4036 = vmatprep.mubr.bf16.mxu0 0
        %4037 = vmatmul.mubr.bf16.gmra.mxu0 %v2361
        %v4038 = vpop.f32.mrf.mxu0
        %v4039 = vadd.f32 0.0, %v4038
        %v4040 = vpop.f32.mrf.mxu0
        %v4041 = vpop.f32.mrf.mxu0
        %v4042 = vadd.f32 0.0, %v4041
        %v4043 = vpop.f32.mrf.mxu0
        %4044 = vmatprep.mubr.bf16.mxu0 0
        %4045 = vmatmul.mubr.bf16.gmra.mxu0 %v2364
        %v4046 = vpop.f32.mrf.mxu0
        %v4047 = vadd.f32 0.0, %v4046
        %v4048 = vpop.f32.mrf.mxu0
        %v4049 = vpop.f32.mrf.mxu0
        %v4050 = vadd.f32 0.0, %v4049
        %v4051 = vpop.f32.mrf.mxu0
        %4052 = vmatprep.mubr.bf16.mxu0 0
        %4053 = vmatmul.mubr.bf16.gmra.mxu0 %v2367
        %v4054 = vpop.f32.mrf.mxu0
        %v4055 = vadd.f32 0.0, %v4054
        %v4056 = vpop.f32.mrf.mxu0
        %v4057 = vpop.f32.mrf.mxu0
        %v4058 = vadd.f32 0.0, %v4057
        %v4059 = vpop.f32.mrf.mxu0
        %4060 = vmatprep.mubr.bf16.mxu0 0
        %4061 = vmatmul.mubr.bf16.gmra.mxu0 %v2370
        %v4062 = vpop.f32.mrf.mxu0
        %v4063 = vadd.f32 0.0, %v4062
        %v4064 = vpop.f32.mrf.mxu0
        %v4065 = vpop.f32.mrf.mxu0
        %v4066 = vadd.f32 0.0, %v4065
        %v4067 = vpop.f32.mrf.mxu0
        %4068 = vmatprep.mubr.bf16.mxu0 0
        %4069 = vmatmul.mubr.bf16.gmra.mxu0 %v2373
        %v4070 = vpop.f32.mrf.mxu0
        %v4071 = vadd.f32 0.0, %v4070
        %v4072 = vpop.f32.mrf.mxu0
        %v4073 = vpop.f32.mrf.mxu0
        %v4074 = vadd.f32 0.0, %v4073
        %v4075 = vpop.f32.mrf.mxu0
        %4076 = vmatprep.mubr.bf16.mxu0 0
        %4077 = vmatmul.mubr.bf16.gmra.mxu0 %v2376
        %v4078 = vpop.f32.mrf.mxu0
        %v4079 = vadd.f32 0.0, %v4078
        %v4080 = vpop.f32.mrf.mxu0
        %v4081 = vpop.f32.mrf.mxu0
        %v4082 = vadd.f32 0.0, %v4081
        %v4083 = vpop.f32.mrf.mxu0
        %4084 = vmatprep.mubr.bf16.mxu0 0
        %4085 = vmatmul.mubr.bf16.gmra.mxu0 %v2379
        %v4086 = vpop.f32.mrf.mxu0
        %v4087 = vadd.f32 0.0, %v4086
        %v4088 = vpop.f32.mrf.mxu0
        %v4089 = vpop.f32.mrf.mxu0
        %v4090 = vadd.f32 0.0, %v4089
        %v4091 = vpop.f32.mrf.mxu0
        %4092 = vmatprep.mubr.bf16.mxu0 0
        %4093 = vmatmul.mubr.bf16.gmra.mxu0 %v2382
        %v4094 = vpop.f32.mrf.mxu0
        %v4095 = vadd.f32 0.0, %v4094
        %v4096 = vpop.f32.mrf.mxu0
        %v4097 = vpop.f32.mrf.mxu0
        %v4098 = vadd.f32 0.0, %v4097
        %v4099 = vpop.f32.mrf.mxu0
        %4100 = vmatprep.mubr.bf16.mxu0 0
        %4101 = vmatmul.mubr.bf16.gmra.mxu0 %v2385
        %v4102 = vpop.f32.mrf.mxu0
        %v4103 = vadd.f32 0.0, %v4102
        %v4104 = vpop.f32.mrf.mxu0
        %v4105 = vpop.f32.mrf.mxu0
        %v4106 = vadd.f32 0.0, %v4105
        %v4107 = vpop.f32.mrf.mxu0
        %4108 = vdwg.mxu0
        %v4127 = vcombine.high %v4039, %v4039
        %v4129 = vunpack.c.l.s4 1983009808
        %v4130 = vunpack.c.0.s8 %v4129
        %v4131 = vlaneseq
        %v4132 = vshrl.u32 %v4131, 7
        %v4133 = vsub.s32 %v4130, %v4132
        %v4134 = vrot.slane %v4039, %v4133
        %v4136 = vunpack.c.l.s4 1983009808
        %v4137 = vunpack.c.0.s8 %v4136
        %v4138 = vlaneseq
        %v4139 = vshrl.u32 %v4138, 7
        %v4140 = vsub.s32 %v4137, %v4139
        %v4141 = vrot.slane %v4127, %v4140
        %v4142 = vcombine.high %v4134, %v4134
        %v4143 = vcombine.high %v4141, %v4141
        %v4144 = vcombine.high %v4042, %v4042
        %v4146 = vunpack.c.l.s4 1983009808
        %v4147 = vunpack.c.0.s8 %v4146
        %v4148 = vlaneseq
        %v4149 = vshrl.u32 %v4148, 7
        %v4150 = vsub.s32 %v4147, %v4149
        %v4151 = vrot.slane %v4042, %v4150
        %v4153 = vunpack.c.l.s4 1983009808
        %v4154 = vunpack.c.0.s8 %v4153
        %v4155 = vlaneseq
        %v4156 = vshrl.u32 %v4155, 7
        %v4157 = vsub.s32 %v4154, %v4156
        %v4158 = vrot.slane %v4144, %v4157
        %v4159 = vcombine.high %v4151, %v4151
        %v4160 = vcombine.high %v4158, %v4158
        %v4161 = vcombine.high %v4047, %v4047
        %v4163 = vunpack.c.l.s4 1983009808
        %v4164 = vunpack.c.0.s8 %v4163
        %v4165 = vlaneseq
        %v4166 = vshrl.u32 %v4165, 7
        %v4167 = vsub.s32 %v4164, %v4166
        %v4168 = vrot.slane %v4047, %v4167
        %v4170 = vunpack.c.l.s4 1983009808
        %v4171 = vunpack.c.0.s8 %v4170
        %v4172 = vlaneseq
        %v4173 = vshrl.u32 %v4172, 7
        %v4174 = vsub.s32 %v4171, %v4173
        %v4175 = vrot.slane %v4161, %v4174
        %v4176 = vcombine.high %v4175, %v4175
        %v4177 = vcombine.high %v4050, %v4050
        %v4179 = vunpack.c.l.s4 1983009808
        %v4180 = vunpack.c.0.s8 %v4179
        %v4181 = vlaneseq
        %v4182 = vshrl.u32 %v4181, 7
        %v4183 = vsub.s32 %v4180, %v4182
        %v4184 = vrot.slane %v4050, %v4183
        %v4186 = vunpack.c.l.s4 1983009808
        %v4187 = vunpack.c.0.s8 %v4186
        %v4188 = vlaneseq
        %v4189 = vshrl.u32 %v4188, 7
        %v4190 = vsub.s32 %v4187, %v4189
        %v4191 = vrot.slane %v4177, %v4190
        %v4192 = vcombine.high %v4184, %v4184
        %v4193 = vcombine.high %v4191, %v4191
        %v4194 = vcombine.high %v4055, %v4055
        %v4196 = vunpack.c.l.s4 1983009808
        %v4197 = vunpack.c.0.s8 %v4196
        %v4198 = vlaneseq
        %v4199 = vshrl.u32 %v4198, 7
        %v4200 = vsub.s32 %v4197, %v4199
        %v4201 = vrot.slane %v4055, %v4200
        %v4203 = vunpack.c.l.s4 1983009808
        %v4204 = vunpack.c.0.s8 %v4203
        %v4205 = vlaneseq
        %v4206 = vshrl.u32 %v4205, 7
        %v4207 = vsub.s32 %v4204, %v4206
        %v4208 = vrot.slane %v4194, %v4207
        %v4209 = vcombine.high %v4201, %v4201
        %v4210 = vcombine.high %v4208, %v4208
        %v4211 = vcombine.high %v4058, %v4058
        %v4213 = vunpack.c.l.s4 1983009808
        %v4214 = vunpack.c.0.s8 %v4213
        %v4215 = vlaneseq
        %v4216 = vshrl.u32 %v4215, 7
        %v4217 = vsub.s32 %v4214, %v4216
        %v4218 = vrot.slane %v4058, %v4217
        %v4220 = vunpack.c.l.s4 1983009808
        %v4221 = vunpack.c.0.s8 %v4220
        %v4222 = vlaneseq
        %v4223 = vshrl.u32 %v4222, 7
        %v4224 = vsub.s32 %v4221, %v4223
        %v4225 = vrot.slane %v4211, %v4224
        %v4226 = vcombine.high %v4218, %v4218
        %v4227 = vcombine.high %v4225, %v4225
        %v4228 = vcombine.high %v4063, %v4063
        %v4230 = vunpack.c.l.s4 1983009808
        %v4231 = vunpack.c.0.s8 %v4230
        %v4232 = vlaneseq
        %v4233 = vshrl.u32 %v4232, 7
        %v4234 = vsub.s32 %v4231, %v4233
        %v4235 = vrot.slane %v4063, %v4234
        %v4237 = vunpack.c.l.s4 1983009808
        %v4238 = vunpack.c.0.s8 %v4237
        %v4239 = vlaneseq
        %v4240 = vshrl.u32 %v4239, 7
        %v4241 = vsub.s32 %v4238, %v4240
        %v4242 = vrot.slane %v4228, %v4241
        %v4243 = vcombine.high %v4235, %v4235
        %v4244 = vcombine.high %v4066, %v4066
        %v4246 = vunpack.c.l.s4 1983009808
        %v4247 = vunpack.c.0.s8 %v4246
        %v4248 = vlaneseq
        %v4249 = vshrl.u32 %v4248, 7
        %v4250 = vsub.s32 %v4247, %v4249
        %v4251 = vrot.slane %v4066, %v4250
        %v4253 = vunpack.c.l.s4 1983009808
        %v4254 = vunpack.c.0.s8 %v4253
        %v4255 = vlaneseq
        %v4256 = vshrl.u32 %v4255, 7
        %v4257 = vsub.s32 %v4254, %v4256
        %v4258 = vrot.slane %v4244, %v4257
        %v4259 = vcombine.high %v4251, %v4251
        %v4260 = vcombine.high %v4258, %v4258
        %v4261 = vcombine.high %v4071, %v4071
        %v4263 = vunpack.c.l.s4 1983009808
        %v4264 = vunpack.c.0.s8 %v4263
        %v4265 = vlaneseq
        %v4266 = vshrl.u32 %v4265, 7
        %v4267 = vsub.s32 %v4264, %v4266
        %v4268 = vrot.slane %v4071, %v4267
        %v4270 = vunpack.c.l.s4 1983009808
        %v4271 = vunpack.c.0.s8 %v4270
        %v4272 = vlaneseq
        %v4273 = vshrl.u32 %v4272, 7
        %v4274 = vsub.s32 %v4271, %v4273
        %v4275 = vrot.slane %v4261, %v4274
        %v4276 = vcombine.high %v4268, %v4268
        %v4277 = vcombine.high %v4275, %v4275
        %v4278 = vcombine.high %v4074, %v4074
        %v4280 = vunpack.c.l.s4 1983009808
        %v4281 = vunpack.c.0.s8 %v4280
        %v4282 = vlaneseq
        %v4283 = vshrl.u32 %v4282, 7
        %v4284 = vsub.s32 %v4281, %v4283
        %v4285 = vrot.slane %v4074, %v4284
        %v4287 = vunpack.c.l.s4 1983009808
        %v4288 = vunpack.c.0.s8 %v4287
        %v4289 = vlaneseq
        %v4290 = vshrl.u32 %v4289, 7
        %v4291 = vsub.s32 %v4288, %v4290
        %v4292 = vrot.slane %v4278, %v4291
        %v4293 = vcombine.high %v4285, %v4285
        %v4294 = vcombine.high %v4292, %v4292
        %v4295 = vcombine.high %v4079, %v4079
        %v4297 = vunpack.c.l.s4 1983009808
        %v4298 = vunpack.c.0.s8 %v4297
        %v4299 = vlaneseq
        %v4300 = vshrl.u32 %v4299, 7
        %v4301 = vsub.s32 %v4298, %v4300
        %v4302 = vrot.slane %v4079, %v4301
        %v4304 = vunpack.c.l.s4 1983009808
        %v4305 = vunpack.c.0.s8 %v4304
        %v4306 = vlaneseq
        %v4307 = vshrl.u32 %v4306, 7
        %v4308 = vsub.s32 %v4305, %v4307
        %v4309 = vrot.slane %v4295, %v4308
        %v4310 = vcombine.high %v4302, %v4302
        %v4311 = vcombine.high %v4309, %v4309
        %v4312 = vcombine.high %v4082, %v4082
        %v4314 = vunpack.c.l.s4 1983009808
        %v4315 = vunpack.c.0.s8 %v4314
        %v4316 = vlaneseq
        %v4317 = vshrl.u32 %v4316, 7
        %v4318 = vsub.s32 %v4315, %v4317
        %v4319 = vrot.slane %v4082, %v4318
        %v4321 = vunpack.c.l.s4 1983009808
        %v4322 = vunpack.c.0.s8 %v4321
        %v4323 = vlaneseq
        %v4324 = vshrl.u32 %v4323, 7
        %v4325 = vsub.s32 %v4322, %v4324
        %v4326 = vrot.slane %v4312, %v4325
        %v4327 = vcombine.high %v4326, %v4326
        %v4328 = vcombine.high %v4087, %v4087
        %v4330 = vunpack.c.l.s4 1983009808
        %v4331 = vunpack.c.0.s8 %v4330
        %v4332 = vlaneseq
        %v4333 = vshrl.u32 %v4332, 7
        %v4334 = vsub.s32 %v4331, %v4333
        %v4335 = vrot.slane %v4087, %v4334
        %v4337 = vunpack.c.l.s4 1983009808
        %v4338 = vunpack.c.0.s8 %v4337
        %v4339 = vlaneseq
        %v4340 = vshrl.u32 %v4339, 7
        %v4341 = vsub.s32 %v4338, %v4340
        %v4342 = vrot.slane %v4328, %v4341
        %v4343 = vcombine.high %v4335, %v4335
        %v4344 = vcombine.high %v4342, %v4342
        %v4345 = vcombine.high %v4090, %v4090
        %v4347 = vunpack.c.l.s4 1983009808
        %v4348 = vunpack.c.0.s8 %v4347
        %v4349 = vlaneseq
        %v4350 = vshrl.u32 %v4349, 7
        %v4351 = vsub.s32 %v4348, %v4350
        %v4352 = vrot.slane %v4090, %v4351
        %v4354 = vunpack.c.l.s4 1983009808
        %v4355 = vunpack.c.0.s8 %v4354
        %v4356 = vlaneseq
        %v4357 = vshrl.u32 %v4356, 7
        %v4358 = vsub.s32 %v4355, %v4357
        %v4359 = vrot.slane %v4345, %v4358
        %v4360 = vcombine.high %v4352, %v4352
        %v4361 = vcombine.high %v4359, %v4359
        %v4362 = vcombine.high %v4095, %v4095
        %v4364 = vunpack.c.l.s4 1983009808
        %v4365 = vunpack.c.0.s8 %v4364
        %v4366 = vlaneseq
        %v4367 = vshrl.u32 %v4366, 7
        %v4368 = vsub.s32 %v4365, %v4367
        %v4369 = vrot.slane %v4095, %v4368
        %v4371 = vunpack.c.l.s4 1983009808
        %v4372 = vunpack.c.0.s8 %v4371
        %v4373 = vlaneseq
        %v4374 = vshrl.u32 %v4373, 7
        %v4375 = vsub.s32 %v4372, %v4374
        %v4376 = vrot.slane %v4362, %v4375
        %v4377 = vcombine.high %v4369, %v4369
        %v4378 = vcombine.high %v4376, %v4376
        %v4379 = vcombine.high %v4098, %v4098
        %v4381 = vunpack.c.l.s4 1983009808
        %v4382 = vunpack.c.0.s8 %v4381
        %v4383 = vlaneseq
        %v4384 = vshrl.u32 %v4383, 7
        %v4385 = vsub.s32 %v4382, %v4384
        %v4386 = vrot.slane %v4098, %v4385
        %v4388 = vunpack.c.l.s4 1983009808
        %v4389 = vunpack.c.0.s8 %v4388
        %v4390 = vlaneseq
        %v4391 = vshrl.u32 %v4390, 7
        %v4392 = vsub.s32 %v4389, %v4391
        %v4393 = vrot.slane %v4379, %v4392
        %v4394 = vcombine.high %v4386, %v4386
        %v4395 = vcombine.high %v4103, %v4103
        %v4397 = vunpack.c.l.s4 1983009808
        %v4398 = vunpack.c.0.s8 %v4397
        %v4399 = vlaneseq
        %v4400 = vshrl.u32 %v4399, 7
        %v4401 = vsub.s32 %v4398, %v4400
        %v4402 = vrot.slane %v4103, %v4401
        %v4404 = vunpack.c.l.s4 1983009808
        %v4405 = vunpack.c.0.s8 %v4404
        %v4406 = vlaneseq
        %v4407 = vshrl.u32 %v4406, 7
        %v4408 = vsub.s32 %v4405, %v4407
        %v4409 = vrot.slane %v4395, %v4408
        %v4410 = vcombine.high %v4402, %v4402
        %v4411 = vcombine.high %v4409, %v4409
        %v4412 = vcombine.high %v4106, %v4106
        %v4414 = vunpack.c.l.s4 1983009808
        %v4415 = vunpack.c.0.s8 %v4414
        %v4416 = vlaneseq
        %v4417 = vshrl.u32 %v4416, 7
        %v4418 = vsub.s32 %v4415, %v4417
        %v4419 = vrot.slane %v4106, %v4418
        %v4421 = vunpack.c.l.s4 1983009808
        %v4422 = vunpack.c.0.s8 %v4421
        %v4423 = vlaneseq
        %v4424 = vshrl.u32 %v4423, 7
        %v4425 = vsub.s32 %v4422, %v4424
        %v4426 = vrot.slane %v4412, %v4425
        %v4427 = vcombine.high %v4419, %v4419
        %v4428 = vcombine.high %v4426, %v4426
        %v4429 = vld [vmem:[#allocation3] sm:$0xff]
        %v4430 = vld [vmem:[#allocation3 + $0x8] sm:$0xff]
        %v4431 = vld [vmem:[#allocation3 + $0x10] sm:$0xff]
        %v4432 = vld [vmem:[#allocation3 + $0x18] sm:$0xff]
        %v4433 = vld [vmem:[#allocation3 + $0x20] sm:$0xff]
        %v4434 = vld [vmem:[#allocation3 + $0x28] sm:$0xff]
        %v4435 = vld [vmem:[#allocation3 + $0x30] sm:$0xff]
        %v4436 = vld [vmem:[#allocation3 + $0x38] sm:$0xff]
        %v4437 = vld [vmem:[#allocation3 + $0x40] sm:$0xff]
        %v4438 = vld [vmem:[#allocation3 + $0x48] sm:$0xff]
        %v4439 = vld [vmem:[#allocation3 + $0x50] sm:$0xff]
        %v4440 = vld [vmem:[#allocation3 + $0x58] sm:$0xff]
        %v4441 = vld [vmem:[#allocation3 + $0x60] sm:$0xff]
        %v4442 = vld [vmem:[#allocation3 + $0x68] sm:$0xff]
        %v4443 = vld [vmem:[#allocation3 + $0x70] sm:$0xff]
        %v4444 = vld [vmem:[#allocation3 + $0x78] sm:$0xff]
        %v4445 = vcombine.low %v4142, %v4141
        %v4446 = vcombine.low %v4143, %v4151
        %v4448 = vunpack.c.l.s4 1983009808
        %v4449 = vunpack.c.0.s8 %v4448
        %v4450 = vlaneseq
        %v4451 = vshrl.u32 %v4450, 7
        %v4452 = vsub.s32 %v4449, %v4451
        %v4453 = vrot.slane %v4445, %v4452
        %v4455 = vunpack.c.l.s4 1983009808
        %v4456 = vunpack.c.0.s8 %v4455
        %v4457 = vlaneseq
        %v4458 = vshrl.u32 %v4457, 7
        %v4459 = vsub.s32 %v4456, %v4458
        %v4460 = vrot.slane %v4446, %v4459
        %v4461 = vcombine.low %v4453, %v4460
        %v4462 = vcombine.low %v4159, %v4158
        %v4463 = vcombine.low %v4160, %v4168
        %v4465 = vunpack.c.l.s4 1983009808
        %v4466 = vunpack.c.0.s8 %v4465
        %v4467 = vlaneseq
        %v4468 = vshrl.u32 %v4467, 7
        %v4469 = vsub.s32 %v4466, %v4468
        %v4470 = vrot.slane %v4462, %v4469
        %v4472 = vunpack.c.l.s4 1983009808
        %v4473 = vunpack.c.0.s8 %v4472
        %v4474 = vlaneseq
        %v4475 = vshrl.u32 %v4474, 7
        %v4476 = vsub.s32 %v4473, %v4475
        %v4477 = vrot.slane %v4463, %v4476
        %v4478 = vcombine.low %v4470, %v4477
        %v4479 = vcombine.low %v4175, %v4176
        %v4480 = vcombine.low %v4184, %v4192
        %v4482 = vunpack.c.l.s4 1983009808
        %v4483 = vunpack.c.0.s8 %v4482
        %v4484 = vlaneseq
        %v4485 = vshrl.u32 %v4484, 7
        %v4486 = vsub.s32 %v4483, %v4485
        %v4487 = vrot.slane %v4479, %v4486
        %v4489 = vunpack.c.l.s4 1983009808
        %v4490 = vunpack.c.0.s8 %v4489
        %v4491 = vlaneseq
        %v4492 = vshrl.u32 %v4491, 7
        %v4493 = vsub.s32 %v4490, %v4492
        %v4494 = vrot.slane %v4480, %v4493
        %v4495 = vcombine.low %v4487, %v4494
        %v4496 = vcombine.low %v4191, %v4193
        %v4497 = vcombine.low %v4201, %v4209
        %v4499 = vunpack.c.l.s4 1983009808
        %v4500 = vunpack.c.0.s8 %v4499
        %v4501 = vlaneseq
        %v4502 = vshrl.u32 %v4501, 7
        %v4503 = vsub.s32 %v4500, %v4502
        %v4504 = vrot.slane %v4496, %v4503
        %v4506 = vunpack.c.l.s4 1983009808
        %v4507 = vunpack.c.0.s8 %v4506
        %v4508 = vlaneseq
        %v4509 = vshrl.u32 %v4508, 7
        %v4510 = vsub.s32 %v4507, %v4509
        %v4511 = vrot.slane %v4497, %v4510
        %v4512 = vcombine.low %v4504, %v4511
        %v4513 = vcombine.low %v4210, %v4218
        %v4514 = vcombine.low %v4226, %v4225
        %v4516 = vunpack.c.l.s4 1983009808
        %v4517 = vunpack.c.0.s8 %v4516
        %v4518 = vlaneseq
        %v4519 = vshrl.u32 %v4518, 7
        %v4520 = vsub.s32 %v4517, %v4519
        %v4521 = vrot.slane %v4513, %v4520
        %v4523 = vunpack.c.l.s4 1983009808
        %v4524 = vunpack.c.0.s8 %v4523
        %v4525 = vlaneseq
        %v4526 = vshrl.u32 %v4525, 7
        %v4527 = vsub.s32 %v4524, %v4526
        %v4528 = vrot.slane %v4514, %v4527
        %v4529 = vcombine.low %v4521, %v4528
        %v4530 = vcombine.low %v4227, %v4235
        %v4531 = vcombine.low %v4243, %v4242
        %v4533 = vunpack.c.l.s4 1983009808
        %v4534 = vunpack.c.0.s8 %v4533
        %v4535 = vlaneseq
        %v4536 = vshrl.u32 %v4535, 7
        %v4537 = vsub.s32 %v4534, %v4536
        %v4538 = vrot.slane %v4530, %v4537
        %v4540 = vunpack.c.l.s4 1983009808
        %v4541 = vunpack.c.0.s8 %v4540
        %v4542 = vlaneseq
        %v4543 = vshrl.u32 %v4542, 7
        %v4544 = vsub.s32 %v4541, %v4543
        %v4545 = vrot.slane %v4531, %v4544
        %v4546 = vcombine.low %v4538, %v4545
        %v4547 = vcombine.low %v4251, %v4259
        %v4548 = vcombine.low %v4258, %v4260
        %v4550 = vunpack.c.l.s4 1983009808
        %v4551 = vunpack.c.0.s8 %v4550
        %v4552 = vlaneseq
        %v4553 = vshrl.u32 %v4552, 7
        %v4554 = vsub.s32 %v4551, %v4553
        %v4555 = vrot.slane %v4547, %v4554
        %v4557 = vunpack.c.l.s4 1983009808
        %v4558 = vunpack.c.0.s8 %v4557
        %v4559 = vlaneseq
        %v4560 = vshrl.u32 %v4559, 7
        %v4561 = vsub.s32 %v4558, %v4560
        %v4562 = vrot.slane %v4548, %v4561
        %v4563 = vcombine.low %v4555, %v4562
        %v4564 = vcombine.low %v4268, %v4276
        %v4565 = vcombine.low %v4275, %v4277
        %v4567 = vunpack.c.l.s4 1983009808
        %v4568 = vunpack.c.0.s8 %v4567
        %v4569 = vlaneseq
        %v4570 = vshrl.u32 %v4569, 7
        %v4571 = vsub.s32 %v4568, %v4570
        %v4572 = vrot.slane %v4564, %v4571
        %v4574 = vunpack.c.l.s4 1983009808
        %v4575 = vunpack.c.0.s8 %v4574
        %v4576 = vlaneseq
        %v4577 = vshrl.u32 %v4576, 7
        %v4578 = vsub.s32 %v4575, %v4577
        %v4579 = vrot.slane %v4565, %v4578
        %v4580 = vcombine.low %v4572, %v4579
        %v4581 = vcombine.low %v4293, %v4292
        %v4582 = vcombine.low %v4294, %v4302
        %v4584 = vunpack.c.l.s4 1983009808
        %v4585 = vunpack.c.0.s8 %v4584
        %v4586 = vlaneseq
        %v4587 = vshrl.u32 %v4586, 7
        %v4588 = vsub.s32 %v4585, %v4587
        %v4589 = vrot.slane %v4581, %v4588
        %v4591 = vunpack.c.l.s4 1983009808
        %v4592 = vunpack.c.0.s8 %v4591
        %v4593 = vlaneseq
        %v4594 = vshrl.u32 %v4593, 7
        %v4595 = vsub.s32 %v4592, %v4594
        %v4596 = vrot.slane %v4582, %v4595
        %v4597 = vcombine.low %v4589, %v4596
        %v4598 = vcombine.low %v4310, %v4309
        %v4599 = vcombine.low %v4311, %v4319
        %v4601 = vunpack.c.l.s4 1983009808
        %v4602 = vunpack.c.0.s8 %v4601
        %v4603 = vlaneseq
        %v4604 = vshrl.u32 %v4603, 7
        %v4605 = vsub.s32 %v4602, %v4604
        %v4606 = vrot.slane %v4598, %v4605
        %v4608 = vunpack.c.l.s4 1983009808
        %v4609 = vunpack.c.0.s8 %v4608
        %v4610 = vlaneseq
        %v4611 = vshrl.u32 %v4610, 7
        %v4612 = vsub.s32 %v4609, %v4611
        %v4613 = vrot.slane %v4599, %v4612
        %v4614 = vcombine.low %v4606, %v4613
        %v4615 = vcombine.low %v4326, %v4327
        %v4616 = vcombine.low %v4335, %v4343
        %v4618 = vunpack.c.l.s4 1983009808
        %v4619 = vunpack.c.0.s8 %v4618
        %v4620 = vlaneseq
        %v4621 = vshrl.u32 %v4620, 7
        %v4622 = vsub.s32 %v4619, %v4621
        %v4623 = vrot.slane %v4615, %v4622
        %v4625 = vunpack.c.l.s4 1983009808
        %v4626 = vunpack.c.0.s8 %v4625
        %v4627 = vlaneseq
        %v4628 = vshrl.u32 %v4627, 7
        %v4629 = vsub.s32 %v4626, %v4628
        %v4630 = vrot.slane %v4616, %v4629
        %v4631 = vcombine.low %v4623, %v4630
        %v4632 = vcombine.low %v4342, %v4344
        %v4633 = vcombine.low %v4352, %v4360
        %v4635 = vunpack.c.l.s4 1983009808
        %v4636 = vunpack.c.0.s8 %v4635
        %v4637 = vlaneseq
        %v4638 = vshrl.u32 %v4637, 7
        %v4639 = vsub.s32 %v4636, %v4638
        %v4640 = vrot.slane %v4632, %v4639
        %v4642 = vunpack.c.l.s4 1983009808
        %v4643 = vunpack.c.0.s8 %v4642
        %v4644 = vlaneseq
        %v4645 = vshrl.u32 %v4644, 7
        %v4646 = vsub.s32 %v4643, %v4645
        %v4647 = vrot.slane %v4633, %v4646
        %v4648 = vcombine.low %v4640, %v4647
        %v4649 = vcombine.low %v4361, %v4369
        %v4650 = vcombine.low %v4377, %v4376
        %v4652 = vunpack.c.l.s4 1983009808
        %v4653 = vunpack.c.0.s8 %v4652
        %v4654 = vlaneseq
        %v4655 = vshrl.u32 %v4654, 7
        %v4656 = vsub.s32 %v4653, %v4655
        %v4657 = vrot.slane %v4649, %v4656
        %v4659 = vunpack.c.l.s4 1983009808
        %v4660 = vunpack.c.0.s8 %v4659
        %v4661 = vlaneseq
        %v4662 = vshrl.u32 %v4661, 7
        %v4663 = vsub.s32 %v4660, %v4662
        %v4664 = vrot.slane %v4650, %v4663
        %v4665 = vcombine.low %v4657, %v4664
        %v4666 = vcombine.low %v4378, %v4386
        %v4667 = vcombine.low %v4394, %v4393
        %v4669 = vunpack.c.l.s4 1983009808
        %v4670 = vunpack.c.0.s8 %v4669
        %v4671 = vlaneseq
        %v4672 = vshrl.u32 %v4671, 7
        %v4673 = vsub.s32 %v4670, %v4672
        %v4674 = vrot.slane %v4666, %v4673
        %v4676 = vunpack.c.l.s4 1983009808
        %v4677 = vunpack.c.0.s8 %v4676
        %v4678 = vlaneseq
        %v4679 = vshrl.u32 %v4678, 7
        %v4680 = vsub.s32 %v4677, %v4679
        %v4681 = vrot.slane %v4667, %v4680
        %v4682 = vcombine.low %v4674, %v4681
        %v4683 = vcombine.low %v4402, %v4410
        %v4684 = vcombine.low %v4409, %v4411
        %v4686 = vunpack.c.l.s4 1983009808
        %v4687 = vunpack.c.0.s8 %v4686
        %v4688 = vlaneseq
        %v4689 = vshrl.u32 %v4688, 7
        %v4690 = vsub.s32 %v4687, %v4689
        %v4691 = vrot.slane %v4683, %v4690
        %v4693 = vunpack.c.l.s4 1983009808
        %v4694 = vunpack.c.0.s8 %v4693
        %v4695 = vlaneseq
        %v4696 = vshrl.u32 %v4695, 7
        %v4697 = vsub.s32 %v4694, %v4696
        %v4698 = vrot.slane %v4684, %v4697
        %v4699 = vcombine.low %v4691, %v4698
        %v4700 = vcombine.low %v4419, %v4427
        %v4701 = vcombine.low %v4426, %v4428
        %v4703 = vunpack.c.l.s4 1983009808
        %v4704 = vunpack.c.0.s8 %v4703
        %v4705 = vlaneseq
        %v4706 = vshrl.u32 %v4705, 7
        %v4707 = vsub.s32 %v4704, %v4706
        %v4708 = vrot.slane %v4700, %v4707
        %v4710 = vunpack.c.l.s4 1983009808
        %v4711 = vunpack.c.0.s8 %v4710
        %v4712 = vlaneseq
        %v4713 = vshrl.u32 %v4712, 7
        %v4714 = vsub.s32 %v4711, %v4713
        %v4715 = vrot.slane %v4701, %v4714
        %v4716 = vcombine.low %v4708, %v4715
        %v4733 = vadd.f32 %v4429, %v4461
        %v4734 = vadd.f32 %v4430, %v4478
        %v4735 = vadd.f32 %v4431, %v4495
        %v4736 = vadd.f32 %v4432, %v4512
        %v4737 = vadd.f32 %v4433, %v4529
        %v4738 = vadd.f32 %v4434, %v4546
        %v4739 = vadd.f32 %v4435, %v4563
        %v4740 = vadd.f32 %v4436, %v4580
        %v4741 = vadd.f32 %v4437, %v4597
        %v4742 = vadd.f32 %v4438, %v4614
        %v4743 = vadd.f32 %v4439, %v4631
        %v4744 = vadd.f32 %v4440, %v4648
        %v4745 = vadd.f32 %v4441, %v4665
        %v4746 = vadd.f32 %v4442, %v4682
        %v4747 = vadd.f32 %v4443, %v4699
        %v4748 = vadd.f32 %v4444, %v4716
        %4749 = vst.msk [vmem:[#allocation3] sm:$0xff] %vm1309, %v4733
        %4750 = vst.msk [vmem:[#allocation3 + $0x8] sm:$0xff] %vm1309, %v4734
        %4751 = vst.msk [vmem:[#allocation3 + $0x10] sm:$0xff] %vm1309, %v4735
        %4752 = vst.msk [vmem:[#allocation3 + $0x18] sm:$0xff] %vm1309, %v4736
        %4753 = vst.msk [vmem:[#allocation3 + $0x20] sm:$0xff] %vm1309, %v4737
        %4754 = vst.msk [vmem:[#allocation3 + $0x28] sm:$0xff] %vm1309, %v4738
        %4755 = vst.msk [vmem:[#allocation3 + $0x30] sm:$0xff] %vm1309, %v4739
        %4756 = vst.msk [vmem:[#allocation3 + $0x38] sm:$0xff] %vm1309, %v4740
        %4757 = vst.msk [vmem:[#allocation3 + $0x40] sm:$0xff] %vm1309, %v4741
        %4758 = vst.msk [vmem:[#allocation3 + $0x48] sm:$0xff] %vm1309, %v4742
        %4759 = vst.msk [vmem:[#allocation3 + $0x50] sm:$0xff] %vm1309, %v4743
        %4760 = vst.msk [vmem:[#allocation3 + $0x58] sm:$0xff] %vm1309, %v4744
        %4761 = vst.msk [vmem:[#allocation3 + $0x60] sm:$0xff] %vm1309, %v4745
        %4762 = vst.msk [vmem:[#allocation3 + $0x68] sm:$0xff] %vm1309, %v4746
        %4763 = vst.msk [vmem:[#allocation3 + $0x70] sm:$0xff] %vm1309, %v4747
        %4764 = vst.msk [vmem:[#allocation3 + $0x78] sm:$0xff] %vm1309, %v4748
        %v4765 = vld [vmem:[#allocation3] sm:$0xff]
        %v4766 = vld [vmem:[#allocation3 + $0x8] sm:$0xff]
        %v4767 = vld [vmem:[#allocation3 + $0x10] sm:$0xff]
        %v4768 = vld [vmem:[#allocation3 + $0x18] sm:$0xff]
        %v4769 = vld [vmem:[#allocation3 + $0x20] sm:$0xff]
        %v4770 = vld [vmem:[#allocation3 + $0x28] sm:$0xff]
        %v4771 = vld [vmem:[#allocation3 + $0x30] sm:$0xff]
        %v4772 = vld [vmem:[#allocation3 + $0x38] sm:$0xff]
        %v4773 = vld [vmem:[#allocation3 + $0x40] sm:$0xff]
        %v4774 = vld [vmem:[#allocation3 + $0x48] sm:$0xff]
        %v4775 = vld [vmem:[#allocation3 + $0x50] sm:$0xff]
        %v4776 = vld [vmem:[#allocation3 + $0x58] sm:$0xff]
        %v4777 = vld [vmem:[#allocation3 + $0x60] sm:$0xff]
        %v4778 = vld [vmem:[#allocation3 + $0x68] sm:$0xff]
        %v4779 = vld [vmem:[#allocation3 + $0x70] sm:$0xff]
        %v4780 = vld [vmem:[#allocation3 + $0x78] sm:$0xff]
        %v4781 = vld [vmem:[%s6] sm:$0x1]
        %v4783 = vlaneseq
        %v4784 = vshrl.u32 %v4783, 7
        %v4785 = vsub.s32 0, %v4784
        %v4786 = vrot.slane %v4781, %v4785
        %v4788 = vadd.f32 %v4765, %v4786
        %v4789 = vadd.f32 %v4766, %v4786
        %v4790 = vadd.f32 %v4767, %v4786
        %v4791 = vadd.f32 %v4768, %v4786
        %v4792 = vadd.f32 %v4769, %v4786
        %v4793 = vadd.f32 %v4770, %v4786
        %v4794 = vadd.f32 %v4771, %v4786
        %v4795 = vadd.f32 %v4772, %v4786
        %v4796 = vadd.f32 %v4773, %v4786
        %v4797 = vadd.f32 %v4774, %v4786
        %v4798 = vadd.f32 %v4775, %v4786
        %v4799 = vadd.f32 %v4776, %v4786
        %v4800 = vadd.f32 %v4777, %v4786
        %v4801 = vadd.f32 %v4778, %v4786
        %v4802 = vadd.f32 %v4779, %v4786
        %v4803 = vadd.f32 %v4780, %v4786
        %v4804 = vmax.f32 %v4788, 0.0
        %v4805 = vmax.f32 %v4789, 0.0
        %v4806 = vmax.f32 %v4790, 0.0
        %v4807 = vmax.f32 %v4791, 0.0
        %v4808 = vmax.f32 %v4792, 0.0
        %v4809 = vmax.f32 %v4793, 0.0
        %v4810 = vmax.f32 %v4794, 0.0
        %v4811 = vmax.f32 %v4795, 0.0
        %v4812 = vmax.f32 %v4796, 0.0
        %v4813 = vmax.f32 %v4797, 0.0
        %v4814 = vmax.f32 %v4798, 0.0
        %v4815 = vmax.f32 %v4799, 0.0
        %v4816 = vmax.f32 %v4800, 0.0
        %v4817 = vmax.f32 %v4801, 0.0
        %v4818 = vmax.f32 %v4802, 0.0
        %v4819 = vmax.f32 %v4803, 0.0
        %v4820 = vpack.c.bf16 %v4805, %v4804
        %v4821 = vpack.c.bf16 %v4807, %v4806
        %v4822 = vpack.c.bf16 %v4809, %v4808
        %v4823 = vpack.c.bf16 %v4811, %v4810
        %v4824 = vpack.c.bf16 %v4813, %v4812
        %v4825 = vpack.c.bf16 %v4815, %v4814
        %v4826 = vpack.c.bf16 %v4817, %v4816
        %v4827 = vpack.c.bf16 %v4819, %v4818
        %v4828 = vld [vmem:[%s7] sm:$0x3]
        %v4829 = vld [vmem:[%s416] sm:$0xff]
        %v4830 = vld [vmem:[%s416 + $0x8] sm:$0xff]
        %v4831 = vld [vmem:[%s416 + $0x10] sm:$0xff]
        %v4832 = vld [vmem:[%s416 + $0x18] sm:$0xff]
        %v4833 = vld [vmem:[%s416 + $0x20] sm:$0xff]
        %v4834 = vld [vmem:[%s416 + $0x28] sm:$0xff]
        %v4835 = vld [vmem:[%s416 + $0x30] sm:$0xff]
        %v4836 = vld [vmem:[%s416 + $0x38] sm:$0xff]
        %v4837 = vld [vmem:[%s416 + $0x40] sm:$0xff]
        %v4838 = vld [vmem:[%s416 + $0x48] sm:$0xff]
        %v4839 = vld [vmem:[%s416 + $0x50] sm:$0xff]
        %v4840 = vld [vmem:[%s416 + $0x58] sm:$0xff]
        %v4841 = vld [vmem:[%s416 + $0x60] sm:$0xff]
        %v4842 = vld [vmem:[%s416 + $0x68] sm:$0xff]
        %v4843 = vld [vmem:[%s416 + $0x70] sm:$0xff]
        %v4844 = vld [vmem:[%s416 + $0x78] sm:$0xff]
        %v4845 = vld [vmem:[%s8] sm:$0x1]
        %v4847 = vlaneseq
        %v4848 = vshrl.u32 %v4847, 7
        %v4849 = vsub.s32 0, %v4848
        %v4850 = vrot.slane %v4845, %v4849
        %v4853 = vsel %vm1309, %v4820, 0
        %v4856 = vsel %vm1309, %v4821, 0
        %v4859 = vsel %vm1309, %v4822, 0
        %v4862 = vsel %vm1309, %v4823, 0
        %v4865 = vsel %vm1309, %v4824, 0
        %v4868 = vsel %vm1309, %v4825, 0
        %v4871 = vsel %vm1309, %v4826, 0
        %v4874 = vsel %vm1309, %v4827, 0
        %vm4876 = vcmask 1041408
        %v4878 = vsel %vm4876, %v4828, 0
        %4880 = vmatprep.subr.bf16.mxu0 0
        %4881 = vmatpush1.bf16.msra.mxu0 0
        %4882 = vmatprep.subr.bf16.mxu0 0
        %4883 = vmatpush1.bf16.msra.mxu0 0
        %4884 = vmatprep.subr.bf16.mxu0 0
        %4885 = vmatpush1.bf16.msra.mxu0 0
        %4886 = vmatprep.subr.bf16.mxu0 0
        %4887 = vmatpush1.bf16.msra.mxu0 0
        %4888 = vmatprep.subr.bf16.mxu0 0
        %4889 = vmatpush1.bf16.msra.mxu0 0
        %4890 = vmatprep.subr.bf16.mxu0 0
        %4891 = vmatpush1.bf16.msra.mxu0 0
        %4892 = vmatprep.subr.bf16.mxu0 0
        %4893 = vmatpush1.bf16.msra.mxu0 0
        %4894 = vmatprep.subr.bf16.mxu0 0
        %4895 = vmatpush1.bf16.msra.mxu0 %v4878
        %4896 = vmatprep.subr.bf16.mxu0 0
        %4897 = vmatpush2.bf16.msra.mxu0 0
        %4898 = vmatprep.subr.bf16.mxu0 0
        %4899 = vmatpush2.bf16.msra.mxu0 0
        %4900 = vmatprep.subr.bf16.mxu0 0
        %4901 = vmatpush2.bf16.msra.mxu0 0
        %4902 = vmatprep.subr.bf16.mxu0 0
        %4903 = vmatpush2.bf16.msra.mxu0 0
        %4904 = vmatprep.subr.bf16.mxu0 0
        %4905 = vmatpush2.bf16.msra.mxu0 0
        %4906 = vmatprep.subr.bf16.mxu0 0
        %4907 = vmatpush2.bf16.msra.mxu0 0
        %4908 = vmatprep.subr.bf16.mxu0 0
        %4909 = vmatpush2.bf16.msra.mxu0 0
        %4910 = vmatprep.subr.bf16.mxu0 0
        %4911 = vmatpush2.bf16.msra.mxu0 0
        %4912 = vmatprep.mubr.bf16.mxu0 0
        %4913 = vmatmul.mubr.bf16.gmra.mxu0 %v4853
        %v4914 = vpop.f32.mrf.mxu0
        %v4915 = vadd.f32 %v4850, %v4914
        %v4916 = vpop.f32.mrf.mxu0
        %v4917 = vpop.f32.mrf.mxu0
        %v4918 = vadd.f32 %v4850, %v4917
        %v4919 = vpop.f32.mrf.mxu0
        %4920 = vmatprep.mubr.bf16.mxu0 0
        %4921 = vmatmul.mubr.bf16.gmra.mxu0 %v4856
        %v4922 = vpop.f32.mrf.mxu0
        %v4923 = vadd.f32 %v4850, %v4922
        %v4924 = vpop.f32.mrf.mxu0
        %v4925 = vpop.f32.mrf.mxu0
        %v4926 = vadd.f32 %v4850, %v4925
        %v4927 = vpop.f32.mrf.mxu0
        %4928 = vmatprep.mubr.bf16.mxu0 0
        %4929 = vmatmul.mubr.bf16.gmra.mxu0 %v4859
        %v4930 = vpop.f32.mrf.mxu0
        %v4931 = vadd.f32 %v4850, %v4930
        %v4932 = vpop.f32.mrf.mxu0
        %v4933 = vpop.f32.mrf.mxu0
        %v4934 = vadd.f32 %v4850, %v4933
        %v4935 = vpop.f32.mrf.mxu0
        %4936 = vmatprep.mubr.bf16.mxu0 0
        %4937 = vmatmul.mubr.bf16.gmra.mxu0 %v4862
        %v4938 = vpop.f32.mrf.mxu0
        %v4939 = vadd.f32 %v4850, %v4938
        %v4940 = vpop.f32.mrf.mxu0
        %v4941 = vpop.f32.mrf.mxu0
        %v4942 = vadd.f32 %v4850, %v4941
        %v4943 = vpop.f32.mrf.mxu0
        %4944 = vmatprep.mubr.bf16.mxu0 0
        %4945 = vmatmul.mubr.bf16.gmra.mxu0 %v4865
        %v4946 = vpop.f32.mrf.mxu0
        %v4947 = vadd.f32 %v4850, %v4946
        %v4948 = vpop.f32.mrf.mxu0
        %v4949 = vpop.f32.mrf.mxu0
        %v4950 = vadd.f32 %v4850, %v4949
        %v4951 = vpop.f32.mrf.mxu0
        %4952 = vmatprep.mubr.bf16.mxu0 0
        %4953 = vmatmul.mubr.bf16.gmra.mxu0 %v4868
        %v4954 = vpop.f32.mrf.mxu0
        %v4955 = vadd.f32 %v4850, %v4954
        %v4956 = vpop.f32.mrf.mxu0
        %v4957 = vpop.f32.mrf.mxu0
        %v4958 = vadd.f32 %v4850, %v4957
        %v4959 = vpop.f32.mrf.mxu0
        %4960 = vmatprep.mubr.bf16.mxu0 0
        %4961 = vmatmul.mubr.bf16.gmra.mxu0 %v4871
        %v4962 = vpop.f32.mrf.mxu0
        %v4963 = vadd.f32 %v4850, %v4962
        %v4964 = vpop.f32.mrf.mxu0
        %v4965 = vpop.f32.mrf.mxu0
        %v4966 = vadd.f32 %v4850, %v4965
        %v4967 = vpop.f32.mrf.mxu0
        %4968 = vmatprep.mubr.bf16.mxu0 0
        %4969 = vmatmul.mubr.bf16.gmra.mxu0 %v4874
        %v4970 = vpop.f32.mrf.mxu0
        %v4971 = vadd.f32 %v4850, %v4970
        %v4972 = vpop.f32.mrf.mxu0
        %v4973 = vpop.f32.mrf.mxu0
        %v4974 = vadd.f32 %v4850, %v4973
        %v4975 = vpop.f32.mrf.mxu0
        %4976 = vdwg.mxu0
        %v4977 = vadd.f32 %v4915, %v4829
        %v4978 = vadd.f32 %v4918, %v4830
        %v4979 = vadd.f32 %v4923, %v4831
        %v4980 = vadd.f32 %v4926, %v4832
        %v4981 = vadd.f32 %v4931, %v4833
        %v4982 = vadd.f32 %v4934, %v4834
        %v4983 = vadd.f32 %v4939, %v4835
        %v4984 = vadd.f32 %v4942, %v4836
        %v4985 = vadd.f32 %v4947, %v4837
        %v4986 = vadd.f32 %v4950, %v4838
        %v4987 = vadd.f32 %v4955, %v4839
        %v4988 = vadd.f32 %v4958, %v4840
        %v4989 = vadd.f32 %v4963, %v4841
        %v4990 = vadd.f32 %v4966, %v4842
        %v4991 = vadd.f32 %v4971, %v4843
        %v4992 = vadd.f32 %v4974, %v4844
        %v4993 = vmax.f32 %v4977, 0.0
        %v4994 = vmax.f32 %v4978, 0.0
        %v4995 = vmax.f32 %v4979, 0.0
        %v4996 = vmax.f32 %v4980, 0.0
        %v4997 = vmax.f32 %v4981, 0.0
        %v4998 = vmax.f32 %v4982, 0.0
        %v4999 = vmax.f32 %v4983, 0.0
        %v5000 = vmax.f32 %v4984, 0.0
        %v5001 = vmax.f32 %v4985, 0.0
        %v5002 = vmax.f32 %v4986, 0.0
        %v5003 = vmax.f32 %v4987, 0.0
        %v5004 = vmax.f32 %v4988, 0.0
        %v5005 = vmax.f32 %v4989, 0.0
        %v5006 = vmax.f32 %v4990, 0.0
        %v5007 = vmax.f32 %v4991, 0.0
        %v5008 = vmax.f32 %v4992, 0.0
        %5009 = vst.msk [vmem:[%s478] sm:$0xff] %vm535, %v4993
        %5010 = vst.msk [vmem:[%s478 + $0x8] sm:$0xff] %vm535, %v4994
        %5011 = vst.msk [vmem:[%s478 + $0x10] sm:$0xff] %vm535, %v4995
        %5012 = vst.msk [vmem:[%s478 + $0x18] sm:$0xff] %vm535, %v4996
        %5013 = vst.msk [vmem:[%s478 + $0x20] sm:$0xff] %vm535, %v4997
        %5014 = vst.msk [vmem:[%s478 + $0x28] sm:$0xff] %vm535, %v4998
        %5015 = vst.msk [vmem:[%s478 + $0x30] sm:$0xff] %vm535, %v4999
        %5016 = vst.msk [vmem:[%s478 + $0x38] sm:$0xff] %vm535, %v5000
        %5017 = vst.msk [vmem:[%s478 + $0x40] sm:$0xff] %vm535, %v5001
        %5018 = vst.msk [vmem:[%s478 + $0x48] sm:$0xff] %vm535, %v5002
        %5019 = vst.msk [vmem:[%s478 + $0x50] sm:$0xff] %vm535, %v5003
        %5020 = vst.msk [vmem:[%s478 + $0x58] sm:$0xff] %vm535, %v5004
        %5021 = vst.msk [vmem:[%s478 + $0x60] sm:$0xff] %vm535, %v5005
        %5022 = vst.msk [vmem:[%s478 + $0x68] sm:$0xff] %vm535, %v5006
        %5023 = vst.msk [vmem:[%s478 + $0x70] sm:$0xff] %vm535, %v5007
        %5024 = vst.msk [vmem:[%s478 + $0x78] sm:$0xff] %vm535, %v5008
        %s5025 = sand.u32 %s277, 1
        %s5026 = scalar_lea.sflag [#allocation6], %s5025
        %s5027 = sand.u32 %s277, 1
        %s5028 = smul.addr %s5027, 128
        %s5029 = scalar_lea.vmem [#allocation10], %s5028
        // Predicated region
        $region77: #{bottleneck_forward.1} parent=55 // pred_check
          %p5030 = pneg %p287
        $region78: #{bottleneck_forward.1} parent=55 // pred_check_branch
          %5032 = sbr.rel (%p5030) target = $region80
        $region79: #{bottleneck_forward.1} parent=55 // pred_region
          %s5033 = smul.u32 8, %s34
          %s5035 = ssub.s32 2048, 2048
          %5036 = vsyncadd %s5026, %s5035
          %s5037 = smul.addr %s5033, 2
          %s5038 = smul.addr %s33, 32
          %s5039 = sadd.s32 %s5037, %s5038
          %s5040 = smul.addr %s5039, 128
          %s5041 = scalar_lea.hbm %s9, %s5040
          %s5042 = sshll.u32 %s5029, 4
          %s5043 = int_to_ptr.vmem [resolvable:$true] %s5042
          %5048 = dma.vmem_to_hbm [thread:$0]  %s5043, 2048, %s5041, %s5026, 128, 128, 8
        $region80: #{bottleneck_forward.1} parent=55 // pred_fallthru
          _
      $region56: #{bottleneck_forward.1} parent=5 // pred_fallthru
        _
      %p5049 = scmp.le.s32.totalorder 2, %s24
      // Predicated region
      $region81: #{bottleneck_forward.1} parent=5 // pred_check
        %p5050 = pneg %p5049
      $region82: #{bottleneck_forward.1} parent=5 // pred_check_branch
        %5052 = sbr.rel (%p5050) target = $region84
      $region83: #{bottleneck_forward.1} parent=5 // pred_region
        %s5053 = ssub.s32 %s24, 2
        // Predicated region
        $region85: #{bottleneck_forward.1} parent=83 // pred_check
          %p5054 = pneg %p293
        $region86: #{bottleneck_forward.1} parent=83 // pred_check_branch
          %5056 = sbr.rel (%p5054) target = $region88
        $region87: #{bottleneck_forward.1} parent=83 // pred_region
          %s5057 = sand.u32 %s278, 1
          %s5058 = scalar_lea.sflag [#allocation6], %s5057
          %s5059 = sand.u32 %s278, 1
          %s5060 = smul.addr %s5059, 128
          %s5061 = scalar_lea.vmem [#allocation10], %s5060
          %5062 = dma.done %s5058, 2048
        $region88: #{bottleneck_forward.1} parent=83 // pred_fallthru
          _
      $region84: #{bottleneck_forward.1} parent=5 // pred_fallthru
        _
    $region6: #{bottleneck_forward.1} parent=1 // loop_footer
      %s28 = sadd.s32 1, %s24
    $region7: #{bottleneck_forward.1} parent=1 // loop_footer_branch
      %23 = sbr.rel target = $region3
    $region8: #{bottleneck_forward.1} parent=1 // loop_exit
      _
    %5063 = vsyncpa [#allocation5], 1
    %s5064 = scalar_lea.sflag [#allocation5], 1
    %5065 = vsyncpa %s5064, 1
    %5066 = vsyncpa [#allocation8], 1
    %s5067 = scalar_lea.sflag [#allocation8], 1
    %5068 = vsyncpa %s5067, 1
    %5069 = vsyncpa [#allocation6], 1
    %s5070 = scalar_lea.sflag [#allocation6], 1
    %5071 = vsyncpa %s5070, 1

</llo_original>
